<compile_context>
chip_gen: v7x
topology: tpu7x:2x2x1
jax: 0.10.0
libtpu: 0.0.40
codegen_flags: <defaults>
</compile_context>

<pallas_src>
import jax
import jax.numpy as jnp
from jax import lax
from jax.experimental import pallas as pl
from jax.experimental.pallas import tpu as pltpu


def _round_up(x, m):
    return ((x + m - 1) // m) * m


def conv2d_bn(x, w, gamma, beta, *, stride=1, dilation=1, eps=1e-5):
    """x: [N, Cin, H, W]; w: [Cout, Cin, k, k]; gamma/beta: [Cout] -> [N, Cout, Hout, Wout]."""
    N, Cin, H, W = x.shape
    Cout, Cin_w, k, k2 = w.shape
    assert Cin_w == Cin and k == k2, "groups=1 only"  # TODO(synk): grouped conv not implemented
    # TODO(synk): only padding_mode='zeros' (the module default) is implemented.
    pad = (k - 1) // 2
    Hout = (H + 2 * pad - dilation * (k - 1) - 1) // stride + 1
    Wout = (W + 2 * pad - dilation * (k - 1) - 1) // stride + 1
    Hp, Wp = H + 2 * pad, W + 2 * pad
    # Dense (stride-1) extents: the kernel always computes the dense map; stride > 1 is
    # handled by decimation in the fused epilogue.
    Hc = Hp - dilation * (k - 1)
    Wc = Wp - dilation * (k - 1)
    Mrows = Hc * Wp                      # rows computed per image (incl. wrap-around cols)
    extra = (k - 1) * dilation           # flattened overrun of the last tap's slab

    # --- lane-dense Cout tiling: single tile (nn=1) up to 512 wide; 256-multiples above
    #     (fills the 2x256x256 MXU on v6e/v7x; 128 kept for small Cout) ---
    Coutp = 128 if Cout <= 128 else _round_up(Cout, 256)
    if Coutp <= 512:
        tn = Coutp                       # nn = 1 -> image slab streamed from HBM exactly once
    else:
        tn = 512 if Coutp % 512 == 0 else 256
    nn = Coutp // tn

    # --- single fused pass over the input: NCHW f32 -> padded, flattened NHWC bf16 ---
    x_pad = jnp.pad(jnp.transpose(x, (0, 2, 3, 1)),
                    ((0, 0), (pad, pad), (pad, pad), (0, 0)))
    x_flat = jnp.pad(x_pad.reshape(N, Hp * Wp, Cin),
                     ((0, 0), (0, extra), (0, 0))).astype(jnp.bfloat16)

    # Weights: OIHW -> HWIO, Cout zero-padded to the lane-dense width, bf16.
    w_hwio = jnp.pad(jnp.transpose(w, (2, 3, 1, 0)),
                     ((0, 0), (0, 0), (0, 0), (0, Coutp - Cout))).astype(jnp.bfloat16)

    # Row-validity mask: the last d*(k-1) columns of each Wp-wide computed row are
    # wrap-around garbage and must not contribute to the BatchNorm statistics.
    mask = jnp.broadcast_to((jnp.arange(Wp) < Wc).astype(jnp.float32)[None, :],
                            (Hc, Wp)).reshape(Mrows, 1)

    def kernel(x_ref, w_ref, m_ref, y_ref, stats_ref):
        # Implicit im2col: each tap is a contiguous slice of the flattened padded image.
        acc = jnp.zeros((Mrows, tn), jnp.float32)
        for kh in range(k):               # static unroll, k is a trace-time constant
            for kw in range(k):
                off = (kh * Wp + kw) * dilation
                a = x_ref[0, off:off + Mrows, :]                      # (Mrows, Cin) bf16
                acc = acc + jnp.dot(a, w_ref[kh, kw],
                                    preferred_element_type=jnp.float32)
        y_ref[0] = acc.astype(y_ref.dtype)                            # bf16 writeback
        # Per-image, per-channel BN partial stats from the f32 accumulator (masked).
        accv = acc * m_ref[...]
        stats_ref[0:1, :] = jnp.sum(accv, axis=0, keepdims=True)
        stats_ref[1:2, :] = jnp.sum(accv * accv, axis=0, keepdims=True)
        stats_ref[2:8, :] = jnp.zeros((6, tn), jnp.float32)

    # TODO(synk): for very large feature maps (whole-image slab + f32 accumulator beyond the
    # VMEM budget) tile Hout with a halo'd manual DMA instead of whole-image blocks.
    y3, stats = pl.pallas_call(
        kernel,
        out_shape=(
            jax.ShapeDtypeStruct((N, Mrows, Coutp), jnp.bfloat16),
            jax.ShapeDtypeStruct((N * 8, Coutp), jnp.float32),
        ),
        grid_spec=pltpu.PrefetchScalarGridSpec(
            num_scalar_prefetch=0,
            grid=(N, nn),
            in_specs=[
                pl.BlockSpec((1, Hp * Wp + extra, Cin), lambda n, j: (n, 0, 0)),
                pl.BlockSpec((k, k, Cin, tn), lambda n, j: (0, 0, 0, j)),
                pl.BlockSpec((Mrows, 1), lambda n, j: (0, 0)),
            ],
            out_specs=[
                pl.BlockSpec((1, Mrows, tn), lambda n, j: (n, 0, j)),
                pl.BlockSpec((8, tn), lambda n, j: (n, j)),
            ],
        ),
        compiler_params=pltpu.CompilerParams(
            dimension_semantics=("parallel", "parallel"),
            vmem_limit_bytes=48 * 1024 * 1024,   # headroom under v7x's 64 MiB VMEM
        ),
    )(x_flat, w_hwio, mask)

    # --- fused epilogue: slice valid columns, (optional) stride decimation, BN apply,
    #     NCHW relayout -- all plain JAX so XLA fuses the elementwise op into the transpose.
    y = y3.reshape(N, Hc, Wp, Coutp)[:, :, :Wc, :Cout]
    if stride > 1:
        # TODO(synk): dedicated strided kernel; for now decimate the dense map and recompute
        # the batch statistics from the strided output in plain JAX (correct, less optimal).
        y = y[:, ::stride, ::stride, :][:, :Hout, :Wout, :]
        yf = y.astype(jnp.float32)
        mean = jnp.mean(yf, axis=(0, 1, 2))
        var = jnp.mean((yf - mean) ** 2, axis=(0, 1, 2))
    else:
        Mtot = N * Hc * Wc
        st = stats.reshape(N, 8, Coutp)
        mean = jnp.sum(st[:, 0, :Cout], axis=0) / Mtot
        # NOTE: E[x^2] - mean^2 in f32 (adequate at these scales).
        # TODO(synk): shifted / Welford reduction if |mean| >> std channels need tighter accuracy.
        var = jnp.maximum(jnp.sum(st[:, 1, :Cout], axis=0) / Mtot - mean * mean, 0.0)

    inv = lax.rsqrt(var + eps)
    scale = gamma.astype(jnp.float32) * inv
    shift = beta.astype(jnp.float32) - mean * scale
    out = y.astype(jnp.float32) * scale + shift          # fused with the relayout by XLA
    return jnp.transpose(out, (0, 3, 1, 2))


def _reference(x, w, gamma, beta, *, stride=1, dilation=1, eps=1e-5):
    k = w.shape[-1]
    pad = (k - 1) // 2
    y = lax.conv_general_dilated(
        x, w, window_strides=(stride, stride),
        padding=[(pad, pad), (pad, pad)],
        rhs_dilation=(dilation, dilation),
        dimension_numbers=("NCHW", "OIHW", "NCHW"),
    )
    mean = jnp.mean(y, axis=(0, 2, 3), keepdims=True)
    var = jnp.mean((y - mean) ** 2, axis=(0, 2, 3), keepdims=True)
    g = gamma.reshape(1, -1, 1, 1)
    b = beta.reshape(1, -1, 1, 1)
    return (y - mean) * lax.rsqrt(var + eps) * g + b


if __name__ == "__main__":
    key = jax.random.PRNGKey(0)
    kx, kw = jax.random.split(key)

    N, Cin, H, W = 2, 4, 16, 16
    Cout, ksize = 8, 3

    x = jax.random.normal(kx, (N, Cin, H, W), dtype=jnp.float32)

    # Deterministic param init (PyTorch Conv2d kaiming-uniform-style bound; BN gamma=1, beta=0).
    fan_in = Cin * ksize * ksize
    bound = 1.0 / (fan_in ** 0.5)
    w = jax.random.uniform(kw, (Cout, Cin, ksize, ksize), jnp.float32, -bound, bound)
    gamma = jnp.ones((Cout,), jnp.float32)
    beta = jnp.zeros((Cout,), jnp.float32)

    out = jax.block_until_ready(jax.jit(conv2d_bn)(x, w, gamma, beta))
    ref = jax.block_until_ready(_reference(x, w, gamma, beta))

    assert out.shape == (N, Cout, H, W), out.shape
    # Tolerance reflects bf16 MXU operands (f32 accumulation), matching the previous version.
    assert jnp.allclose(out, ref, atol=2e-2, rtol=2e-2), float(jnp.max(jnp.abs(out - ref)))
    print("KERNEL_OK")
</pallas_src>

<mosaic_0001>
module attributes {stable_mosaic.version = 11 : i64} {
  func.func @kernel(%arg0: i32, %arg1: i32, %arg2: memref<1x326x4xbf16, #tpu.memory_space<vmem>>, %arg3: memref<3x3x4x128xbf16, #tpu.memory_space<vmem>>, %arg4: memref<288x1xf32, #tpu.memory_space<vmem>>, %arg5: memref<1x288x128xbf16, #tpu.memory_space<vmem>>, %arg6: memref<8x128xf32, #tpu.memory_space<vmem>>) attributes {dimension_semantics = [#tpu.dimension_semantics<parallel>, #tpu.dimension_semantics<parallel>], iteration_bounds = array<i64: 2, 1>, scalar_prefetch = 0 : i64, scratch_operands = 0 : i64, tpu.core_type = #tpu.core_type<tc>, window_params = [{transform_indices = @transform_0, window_bounds = array<i64: 1, 326, 4>}, {transform_indices = @transform_1, window_bounds = array<i64: 3, 3, 4, 128>}, {pipeline_mode = #tpu.pipeline_mode<synchronous>, transform_indices = @transform_2, window_bounds = array<i64: 288, 1>}, {transform_indices = @transform_3, window_bounds = array<i64: 1, 288, 128>}, {transform_indices = @transform_4, window_bounds = array<i64: 8, 128>}]} {
    %cst = arith.constant 0.000000e+00 : f32
    %0 = vector.broadcast %cst : f32 to vector<288x128xf32>
    %c0 = arith.constant 0 : index
    %c0_0 = arith.constant 0 : index
    %c0_1 = arith.constant 0 : index
    %1 = vector.load %arg2[%c0, %c0_0, %c0_1] : memref<1x326x4xbf16, #tpu.memory_space<vmem>>, vector<1x288x4xbf16>
    %2 = vector.shape_cast %1 : vector<1x288x4xbf16> to vector<288x4xbf16>
    %c0_2 = arith.constant 0 : index
    %c0_3 = arith.constant 0 : index
    %c0_4 = arith.constant 0 : index
    %c0_5 = arith.constant 0 : index
    %3 = vector.load %arg3[%c0_2, %c0_3, %c0_4, %c0_5] : memref<3x3x4x128xbf16, #tpu.memory_space<vmem>>, vector<1x1x4x128xbf16>
    %4 = vector.shape_cast %3 : vector<1x1x4x128xbf16> to vector<4x128xbf16>
    %cst_6 = arith.constant dense<0.000000e+00> : vector<288x128xf32>
    %5 = tpu.matmul %2, %4, %cst_6 {dimension_numbers = #tpu.dot_dimension_numbers<[1], [0], [0], [1], [0, 0, 1, 1], [], []>} : vector<288x4xbf16>, vector<4x128xbf16>, vector<288x128xf32> -> vector<288x128xf32>
    %6 = arith.addf %0, %5 : vector<288x128xf32>
    %c0_7 = arith.constant 0 : index
    %c1 = arith.constant 1 : index
    %c0_8 = arith.constant 0 : index
    %7 = vector.load %arg2[%c0_7, %c1, %c0_8] : memref<1x326x4xbf16, #tpu.memory_space<vmem>>, vector<1x288x4xbf16>
    %8 = vector.shape_cast %7 : vector<1x288x4xbf16> to vector<288x4xbf16>
    %c0_9 = arith.constant 0 : index
    %c1_10 = arith.constant 1 : index
    %c0_11 = arith.constant 0 : index
    %c0_12 = arith.constant 0 : index
    %9 = vector.load %arg3[%c0_9, %c1_10, %c0_11, %c0_12] : memref<3x3x4x128xbf16, #tpu.memory_space<vmem>>, vector<1x1x4x128xbf16>
    %10 = vector.shape_cast %9 : vector<1x1x4x128xbf16> to vector<4x128xbf16>
    %cst_13 = arith.constant dense<0.000000e+00> : vector<288x128xf32>
    %11 = tpu.matmul %8, %10, %cst_13 {dimension_numbers = #tpu.dot_dimension_numbers<[1], [0], [0], [1], [0, 0, 1, 1], [], []>} : vector<288x4xbf16>, vector<4x128xbf16>, vector<288x128xf32> -> vector<288x128xf32>
    %12 = arith.addf %6, %11 : vector<288x128xf32>
    %c0_14 = arith.constant 0 : index
    %c2 = arith.constant 2 : index
    %c0_15 = arith.constant 0 : index
    %13 = vector.load %arg2[%c0_14, %c2, %c0_15] : memref<1x326x4xbf16, #tpu.memory_space<vmem>>, vector<1x288x4xbf16>
    %14 = vector.shape_cast %13 : vector<1x288x4xbf16> to vector<288x4xbf16>
    %c0_16 = arith.constant 0 : index
    %c2_17 = arith.constant 2 : index
    %c0_18 = arith.constant 0 : index
    %c0_19 = arith.constant 0 : index
    %15 = vector.load %arg3[%c0_16, %c2_17, %c0_18, %c0_19] : memref<3x3x4x128xbf16, #tpu.memory_space<vmem>>, vector<1x1x4x128xbf16>
    %16 = vector.shape_cast %15 : vector<1x1x4x128xbf16> to vector<4x128xbf16>
    %cst_20 = arith.constant dense<0.000000e+00> : vector<288x128xf32>
    %17 = tpu.matmul %14, %16, %cst_20 {dimension_numbers = #tpu.dot_dimension_numbers<[1], [0], [0], [1], [0, 0, 1, 1], [], []>} : vector<288x4xbf16>, vector<4x128xbf16>, vector<288x128xf32> -> vector<288x128xf32>
    %18 = arith.addf %12, %17 : vector<288x128xf32>
    %c0_21 = arith.constant 0 : index
    %c18 = arith.constant 18 : index
    %c0_22 = arith.constant 0 : index
    %19 = vector.load %arg2[%c0_21, %c18, %c0_22] : memref<1x326x4xbf16, #tpu.memory_space<vmem>>, vector<1x288x4xbf16>
    %20 = vector.shape_cast %19 : vector<1x288x4xbf16> to vector<288x4xbf16>
    %c1_23 = arith.constant 1 : index
    %c0_24 = arith.constant 0 : index
    %c0_25 = arith.constant 0 : index
    %c0_26 = arith.constant 0 : index
    %21 = vector.load %arg3[%c1_23, %c0_24, %c0_25, %c0_26] : memref<3x3x4x128xbf16, #tpu.memory_space<vmem>>, vector<1x1x4x128xbf16>
    %22 = vector.shape_cast %21 : vector<1x1x4x128xbf16> to vector<4x128xbf16>
    %cst_27 = arith.constant dense<0.000000e+00> : vector<288x128xf32>
    %23 = tpu.matmul %20, %22, %cst_27 {dimension_numbers = #tpu.dot_dimension_numbers<[1], [0], [0], [1], [0, 0, 1, 1], [], []>} : vector<288x4xbf16>, vector<4x128xbf16>, vector<288x128xf32> -> vector<288x128xf32>
    %24 = arith.addf %18, %23 : vector<288x128xf32>
    %c0_28 = arith.constant 0 : index
    %c19 = arith.constant 19 : index
    %c0_29 = arith.constant 0 : index
    %25 = vector.load %arg2[%c0_28, %c19, %c0_29] : memref<1x326x4xbf16, #tpu.memory_space<vmem>>, vector<1x288x4xbf16>
    %26 = vector.shape_cast %25 : vector<1x288x4xbf16> to vector<288x4xbf16>
    %c1_30 = arith.constant 1 : index
    %c1_31 = arith.constant 1 : index
    %c0_32 = arith.constant 0 : index
    %c0_33 = arith.constant 0 : index
    %27 = vector.load %arg3[%c1_30, %c1_31, %c0_32, %c0_33] : memref<3x3x4x128xbf16, #tpu.memory_space<vmem>>, vector<1x1x4x128xbf16>
    %28 = vector.shape_cast %27 : vector<1x1x4x128xbf16> to vector<4x128xbf16>
    %cst_34 = arith.constant dense<0.000000e+00> : vector<288x128xf32>
    %29 = tpu.matmul %26, %28, %cst_34 {dimension_numbers = #tpu.dot_dimension_numbers<[1], [0], [0], [1], [0, 0, 1, 1], [], []>} : vector<288x4xbf16>, vector<4x128xbf16>, vector<288x128xf32> -> vector<288x128xf32>
    %30 = arith.addf %24, %29 : vector<288x128xf32>
    %c0_35 = arith.constant 0 : index
    %c20 = arith.constant 20 : index
    %c0_36 = arith.constant 0 : index
    %31 = vector.load %arg2[%c0_35, %c20, %c0_36] : memref<1x326x4xbf16, #tpu.memory_space<vmem>>, vector<1x288x4xbf16>
    %32 = vector.shape_cast %31 : vector<1x288x4xbf16> to vector<288x4xbf16>
    %c1_37 = arith.constant 1 : index
    %c2_38 = arith.constant 2 : index
    %c0_39 = arith.constant 0 : index
    %c0_40 = arith.constant 0 : index
    %33 = vector.load %arg3[%c1_37, %c2_38, %c0_39, %c0_40] : memref<3x3x4x128xbf16, #tpu.memory_space<vmem>>, vector<1x1x4x128xbf16>
    %34 = vector.shape_cast %33 : vector<1x1x4x128xbf16> to vector<4x128xbf16>
    %cst_41 = arith.constant dense<0.000000e+00> : vector<288x128xf32>
    %35 = tpu.matmul %32, %34, %cst_41 {dimension_numbers = #tpu.dot_dimension_numbers<[1], [0], [0], [1], [0, 0, 1, 1], [], []>} : vector<288x4xbf16>, vector<4x128xbf16>, vector<288x128xf32> -> vector<288x128xf32>
    %36 = arith.addf %30, %35 : vector<288x128xf32>
    %c0_42 = arith.constant 0 : index
    %c36 = arith.constant 36 : index
    %c0_43 = arith.constant 0 : index
    %37 = vector.load %arg2[%c0_42, %c36, %c0_43] : memref<1x326x4xbf16, #tpu.memory_space<vmem>>, vector<1x288x4xbf16>
    %38 = vector.shape_cast %37 : vector<1x288x4xbf16> to vector<288x4xbf16>
    %c2_44 = arith.constant 2 : index
    %c0_45 = arith.constant 0 : index
    %c0_46 = arith.constant 0 : index
    %c0_47 = arith.constant 0 : index
    %39 = vector.load %arg3[%c2_44, %c0_45, %c0_46, %c0_47] : memref<3x3x4x128xbf16, #tpu.memory_space<vmem>>, vector<1x1x4x128xbf16>
    %40 = vector.shape_cast %39 : vector<1x1x4x128xbf16> to vector<4x128xbf16>
    %cst_48 = arith.constant dense<0.000000e+00> : vector<288x128xf32>
    %41 = tpu.matmul %38, %40, %cst_48 {dimension_numbers = #tpu.dot_dimension_numbers<[1], [0], [0], [1], [0, 0, 1, 1], [], []>} : vector<288x4xbf16>, vector<4x128xbf16>, vector<288x128xf32> -> vector<288x128xf32>
    %42 = arith.addf %36, %41 : vector<288x128xf32>
    %c0_49 = arith.constant 0 : index
    %c37 = arith.constant 37 : index
    %c0_50 = arith.constant 0 : index
    %43 = vector.load %arg2[%c0_49, %c37, %c0_50] : memref<1x326x4xbf16, #tpu.memory_space<vmem>>, vector<1x288x4xbf16>
    %44 = vector.shape_cast %43 : vector<1x288x4xbf16> to vector<288x4xbf16>
    %c2_51 = arith.constant 2 : index
    %c1_52 = arith.constant 1 : index
    %c0_53 = arith.constant 0 : index
    %c0_54 = arith.constant 0 : index
    %45 = vector.load %arg3[%c2_51, %c1_52, %c0_53, %c0_54] : memref<3x3x4x128xbf16, #tpu.memory_space<vmem>>, vector<1x1x4x128xbf16>
    %46 = vector.shape_cast %45 : vector<1x1x4x128xbf16> to vector<4x128xbf16>
    %cst_55 = arith.constant dense<0.000000e+00> : vector<288x128xf32>
    %47 = tpu.matmul %44, %46, %cst_55 {dimension_numbers = #tpu.dot_dimension_numbers<[1], [0], [0], [1], [0, 0, 1, 1], [], []>} : vector<288x4xbf16>, vector<4x128xbf16>, vector<288x128xf32> -> vector<288x128xf32>
    %48 = arith.addf %42, %47 : vector<288x128xf32>
    %c0_56 = arith.constant 0 : index
    %c38 = arith.constant 38 : index
    %c0_57 = arith.constant 0 : index
    %49 = vector.load %arg2[%c0_56, %c38, %c0_57] : memref<1x326x4xbf16, #tpu.memory_space<vmem>>, vector<1x288x4xbf16>
    %50 = vector.shape_cast %49 : vector<1x288x4xbf16> to vector<288x4xbf16>
    %c2_58 = arith.constant 2 : index
    %c2_59 = arith.constant 2 : index
    %c0_60 = arith.constant 0 : index
    %c0_61 = arith.constant 0 : index
    %51 = vector.load %arg3[%c2_58, %c2_59, %c0_60, %c0_61] : memref<3x3x4x128xbf16, #tpu.memory_space<vmem>>, vector<1x1x4x128xbf16>
    %52 = vector.shape_cast %51 : vector<1x1x4x128xbf16> to vector<4x128xbf16>
    %cst_62 = arith.constant dense<0.000000e+00> : vector<288x128xf32>
    %53 = tpu.matmul %50, %52, %cst_62 {dimension_numbers = #tpu.dot_dimension_numbers<[1], [0], [0], [1], [0, 0, 1, 1], [], []>} : vector<288x4xbf16>, vector<4x128xbf16>, vector<288x128xf32> -> vector<288x128xf32>
    %54 = arith.addf %48, %53 : vector<288x128xf32>
    %55 = arith.truncf %54 : vector<288x128xf32> to vector<288x128xbf16>
    %c0_63 = arith.constant 0 : index
    %c0_64 = arith.constant 0 : index
    %c0_65 = arith.constant 0 : index
    %56 = vector.load %arg5[%c0_63, %c0_64, %c0_65] : memref<1x288x128xbf16, #tpu.memory_space<vmem>>, vector<1x288x128xbf16>
    %57 = vector.shape_cast %56 : vector<1x288x128xbf16> to vector<288x128xbf16>
    %58 = vector.shape_cast %55 : vector<288x128xbf16> to vector<1x288x128xbf16>
    tpu.vector_store %arg5[%c0_63, %c0_64, %c0_65], %58 {strides = array<i32>} : memref<1x288x128xbf16, #tpu.memory_space<vmem>>, vector<1x288x128xbf16>,
    %c0_66 = arith.constant 0 : index
    %c0_67 = arith.constant 0 : index
    %59 = vector.load %arg4[%c0_66, %c0_67] : memref<288x1xf32, #tpu.memory_space<vmem>>, vector<288x1xf32>
    %60 = vector.broadcast %59 : vector<288x1xf32> to vector<288x128xf32>
    %61 = arith.mulf %54, %60 : vector<288x128xf32>
    %cst_68 = arith.constant dense<0.000000e+00> : vector<128xf32>
    %62 = vector.multi_reduction <add>, %61, %cst_68 [0] : vector<288x128xf32> to vector<128xf32>
    %63 = vector.shape_cast %62 : vector<128xf32> to vector<1x128xf32>
    %c0_69 = arith.constant 0 : index
    %c0_70 = arith.constant 0 : index
    %64 = vector.load %arg6[%c0_69, %c0_70] : memref<8x128xf32, #tpu.memory_space<vmem>>, vector<1x128xf32>
    tpu.vector_store %arg6[%c0_69, %c0_70], %63 {strides = array<i32>} : memref<8x128xf32, #tpu.memory_space<vmem>>, vector<1x128xf32>,
    %65 = arith.mulf %61, %61 : vector<288x128xf32>
    %cst_71 = arith.constant dense<0.000000e+00> : vector<128xf32>
    %66 = vector.multi_reduction <add>, %65, %cst_71 [0] : vector<288x128xf32> to vector<128xf32>
    %67 = vector.shape_cast %66 : vector<128xf32> to vector<1x128xf32>
    %c1_72 = arith.constant 1 : index
    %c0_73 = arith.constant 0 : index
    %68 = vector.load %arg6[%c1_72, %c0_73] : memref<8x128xf32, #tpu.memory_space<vmem>>, vector<1x128xf32>
    tpu.vector_store %arg6[%c1_72, %c0_73], %67 {strides = array<i32>} : memref<8x128xf32, #tpu.memory_space<vmem>>, vector<1x128xf32>,
    %cst_74 = arith.constant 0.000000e+00 : f32
    %69 = vector.broadcast %cst_74 : f32 to vector<6x128xf32>
    %c2_75 = arith.constant 2 : index
    %c0_76 = arith.constant 0 : index
    %70 = vector.load %arg6[%c2_75, %c0_76] : memref<8x128xf32, #tpu.memory_space<vmem>>, vector<6x128xf32>
    tpu.vector_store %arg6[%c2_75, %c0_76], %69 {strides = array<i32>} : memref<8x128xf32, #tpu.memory_space<vmem>>, vector<6x128xf32>,
    return
  }
  func.func @transform_0(%arg0: i32, %arg1: i32) -> (i32, i32, i32) {
    %c0_i32 = arith.constant 0 : i32
    %c0_i32_0 = arith.constant 0 : i32
    %c0_i32_1 = arith.constant 0 : i32
    return %arg0, %c0_i32, %c0_i32_0 : i32, i32, i32
  }
  func.func @transform_1(%arg0: i32, %arg1: i32) -> (i32, i32, i32, i32) {
    %c0_i32 = arith.constant 0 : i32
    %c0_i32_0 = arith.constant 0 : i32
    %c0_i32_1 = arith.constant 0 : i32
    %c0_i32_2 = arith.constant 0 : i32
    return %c0_i32, %c0_i32_0, %c0_i32_1, %arg1 : i32, i32, i32, i32
  }
  func.func @transform_2(%arg0: i32, %arg1: i32) -> (i32, i32) {
    %c0_i32 = arith.constant 0 : i32
    %c0_i32_0 = arith.constant 0 : i32
    %c0_i32_1 = arith.constant 0 : i32
    return %c0_i32, %c0_i32_0 : i32, i32
  }
  func.func @transform_3(%arg0: i32, %arg1: i32) -> (i32, i32, i32) {
    %c0_i32 = arith.constant 0 : i32
    %c0_i32_0 = arith.constant 0 : i32
    return %arg0, %c0_i32, %arg1 : i32, i32, i32
  }
  func.func @transform_4(%arg0: i32, %arg1: i32) -> (i32, i32) {
    %c0_i32 = arith.constant 0 : i32
    return %arg0, %arg1 : i32, i32
  }
}

</mosaic_0001>

<llo_original>
// kernel: conv2d_bn.1
$region0: #{conv2d_bn.1}
  #allocation0 [shape = 'u32[]', space=smem, size = 0x4, offset = 0x4, fixed_abs, tag = 'smem constant byte address 0x4 - core index']
  #allocation1 [shape = 'u32[144,128]{1,0:T(1,128)}', space=vmem, size = 0x12000, scoped, tag = 'internal scratch']
  %s0 = inlined_call_operand.vmem [shape: bf16[2,326,4], index: 0, kind: input, shape index: {}]
  %s1 = inlined_call_operand.vmem [shape: bf16[3,3,4,128], index: 1, kind: input, shape index: {}]
  %s2 = inlined_call_operand.vmem [shape: f32[288,1], index: 2, kind: input, shape index: {}]
  %s3 = inlined_call_operand.vmem [shape: bf16[2,288,128], index: 3, kind: output, shape index: {0}]
  %s4 = inlined_call_operand.vmem [shape: f32[16,128], index: 4, kind: output, shape index: {1}]
  %5 = xla_tuple %s3, %s4
  %s6 = sld [smem:[#allocation0]]
  $region53: #{conv2d_bn.1} parent=0
    _
  %s8 = ssub.s32 1, %s6
  %s9 = scalar_select 0, %s8, %s6
  loop: start=0, step=1, limit=4
  $region2: #{conv2d_bn.1} parent=0 // loop_pre_header
    _
  $region3: #{conv2d_bn.1} parent=0 // loop_header
    %s11 = sphi 0, %s15
    %p12 = scmp.ge.s32.totalorder %s11, 4
    %s18 = sphi 0, %s30
    %s19 = sphi 0, %s26
    %s20 = sphi 0, %s18
    %s21 = sphi 0, %s19
    %s22 = sphi 0, %s20
    %s23 = sphi 0, %s21
    %s33 = sphi 0, %s35
    %s36 = sphi 0, %s33
    %s37 = sphi 0, %s36
    %s53 = sphi 0, %s37
    %s59 = sphi 0, %s61
    %s62 = sphi 0, %s59
    %s63 = sphi 0, %s62
    %s79 = sphi 0, %s63
    %s83 = sphi 0, %s83
    %s85 = sphi 0, %s83
    %s86 = sphi 0, %s85
    %s100 = sphi 0, %s86
    %s108 = sphi 0, %s110
    %s111 = sphi 0, %s108
    %s112 = sphi 0, %s111
    %s128 = sphi 0, %s112
    %s136 = sphi 0, %s138
    %s139 = sphi 0, %s136
    %s140 = sphi 0, %s139
    %s156 = sphi 0, %s140
  $region4: #{conv2d_bn.1} parent=0 // loop_header_branch
    %14 = sbr.rel (%p12) target = $region8
  $region5: #{conv2d_bn.1} parent=0 // loop_body
    %s16 = ssub.s32 %s11, 1
    %s17 = ssub.s32 %s11, 2
    %s24 = sadd.s32 1, %s19
    %p25 = scmp.ge.s32.totalorder %s24, 1
    %s26 = scalar_select %p25, 0, %s24
    %s27 = sadd.s32 1, %s18
    %s28 = scalar_select %p25, %s27, %s18
    %p29 = scmp.ge.s32.totalorder %s28, 2
    %s30 = scalar_select %p29, 0, %s28
    %s31 = ssub.s32 %s18, %s30
    %p32 = scmp.eq.s32.totalorder %s31, 0
    %s34 = sadd.s32 %s33, 1
    %s35 = scalar_select %p32, %s33, %s34
    %p38 = pneg %p32
    %p39 = scmp.eq.s32.totalorder %s11, 1
    %p40 = por %p38, %p39
    %p41 = scmp.ne.s32.totalorder %s33, %s36
    %p42 = scmp.eq.s32.totalorder %s11, 0
    %p43 = por %p41, %p42
    %p44 = scmp.ne.s32.totalorder %s33, %s36
    %p45 = scmp.eq.s32.totalorder %s16, 1
    %p46 = por %p44, %p45
    %p47 = scmp.ne.s32.totalorder %s36, %s37
    %p48 = scmp.eq.s32.totalorder %s16, 0
    %p49 = por %p47, %p48
    %p50 = scmp.ne.s32.totalorder %s36, %s37
    %p51 = scmp.eq.s32.totalorder %s17, 1
    %p52 = por %p50, %p51
    %p54 = scmp.ne.s32.totalorder %s37, %s53
    %p55 = scmp.eq.s32.totalorder %s17, 0
    %p56 = por %p54, %p55
    %s57 = ssub.s32 %s19, %s26
    %p58 = scmp.eq.s32.totalorder %s57, 0
    %s60 = sadd.s32 %s59, 1
    %s61 = scalar_select %p58, %s59, %s60
    %p64 = pneg %p58
    %p65 = scmp.eq.s32.totalorder %s11, 1
    %p66 = por %p64, %p65
    %p67 = scmp.ne.s32.totalorder %s59, %s62
    %p68 = scmp.eq.s32.totalorder %s11, 0
    %p69 = por %p67, %p68
    %p70 = scmp.ne.s32.totalorder %s59, %s62
    %p71 = scmp.eq.s32.totalorder %s16, 1
    %p72 = por %p70, %p71
    %p73 = scmp.ne.s32.totalorder %s62, %s63
    %p74 = scmp.eq.s32.totalorder %s16, 0
    %p75 = por %p73, %p74
    %p76 = scmp.ne.s32.totalorder %s62, %s63
    %p77 = scmp.eq.s32.totalorder %s17, 1
    %p78 = por %p76, %p77
    %p80 = scmp.ne.s32.totalorder %s63, %s79
    %p81 = scmp.eq.s32.totalorder %s17, 0
    %p82 = por %p80, %p81
    %s84 = sadd.s32 %s83, 1
    %p87 = scmp.eq.s32.totalorder %s11, 1
    %p88 = scmp.ne.s32.totalorder %s83, %s85
    %p89 = scmp.eq.s32.totalorder %s11, 0
    %p90 = por %p88, %p89
    %p91 = scmp.ne.s32.totalorder %s83, %s85
    %p92 = scmp.eq.s32.totalorder %s16, 1
    %p93 = por %p91, %p92
    %p94 = scmp.ne.s32.totalorder %s85, %s86
    %p95 = scmp.eq.s32.totalorder %s16, 0
    %p96 = por %p94, %p95
    %p97 = scmp.ne.s32.totalorder %s85, %s86
    %p98 = scmp.eq.s32.totalorder %s17, 1
    %p99 = por %p97, %p98
    %p101 = scmp.ne.s32.totalorder %s86, %s100
    %p102 = scmp.eq.s32.totalorder %s17, 0
    %p103 = por %p101, %p102
    %s104 = ssub.s32 %s18, %s30
    %s105 = ssub.s32 %s19, %s26
    %s106 = sor.u32 %s104, %s105
    %p107 = scmp.eq.s32.totalorder %s106, 0
    %s109 = sadd.s32 %s108, 1
    %s110 = scalar_select %p107, %s108, %s109
    %p113 = pneg %p107
    %p114 = scmp.eq.s32.totalorder %s11, 1
    %p115 = por %p113, %p114
    %p116 = scmp.ne.s32.totalorder %s108, %s111
    %p117 = scmp.eq.s32.totalorder %s11, 0
    %p118 = por %p116, %p117
    %p119 = scmp.ne.s32.totalorder %s108, %s111
    %p120 = scmp.eq.s32.totalorder %s16, 1
    %p121 = por %p119, %p120
    %p122 = scmp.ne.s32.totalorder %s111, %s112
    %p123 = scmp.eq.s32.totalorder %s16, 0
    %p124 = por %p122, %p123
    %p125 = scmp.ne.s32.totalorder %s111, %s112
    %p126 = scmp.eq.s32.totalorder %s17, 1
    %p127 = por %p125, %p126
    %p129 = scmp.ne.s32.totalorder %s112, %s128
    %p130 = scmp.eq.s32.totalorder %s17, 0
    %p131 = por %p129, %p130
    %s132 = ssub.s32 %s18, %s30
    %s133 = ssub.s32 %s19, %s26
    %s134 = sor.u32 %s132, %s133
    %p135 = scmp.eq.s32.totalorder %s134, 0
    %s137 = sadd.s32 %s136, 1
    %s138 = scalar_select %p135, %s136, %s137
    %p141 = pneg %p135
    %p142 = scmp.eq.s32.totalorder %s11, 1
    %p143 = por %p141, %p142
    %p144 = scmp.ne.s32.totalorder %s136, %s139
    %p145 = scmp.eq.s32.totalorder %s11, 0
    %p146 = por %p144, %p145
    %p147 = scmp.ne.s32.totalorder %s136, %s139
    %p148 = scmp.eq.s32.totalorder %s16, 1
    %p149 = por %p147, %p148
    %p150 = scmp.ne.s32.totalorder %s139, %s140
    %p151 = scmp.eq.s32.totalorder %s16, 0
    %p152 = por %p150, %p151
    %p153 = scmp.ne.s32.totalorder %s139, %s140
    %p154 = scmp.eq.s32.totalorder %s17, 1
    %p155 = por %p153, %p154
    %p157 = scmp.ne.s32.totalorder %s140, %s156
    %p158 = scmp.eq.s32.totalorder %s17, 0
    %p159 = por %p157, %p158
    %p160 = scmp.le.s32.totalorder 1, %s11
    %p161 = scmp.lt.s32.totalorder %s11, 3
    %p162 = pnand %p160, %p161
    %p163 = pneg %p162
    // Predicated region
    $region9: #{conv2d_bn.1} parent=5 // pred_check
      _
    $region10: #{conv2d_bn.1} parent=5 // pred_check_branch
      %165 = sbr.rel (%p162) target = $region12
    $region11: #{conv2d_bn.1} parent=5 // pred_region
      %s166 = ssub.s32 %s11, 1
      // Predicated region
      $region13: #{conv2d_bn.1} parent=11 // pred_check
        %p167 = pneg %p75
      $region14: #{conv2d_bn.1} parent=11 // pred_check_branch
        %169 = sbr.rel (%p167) target = $region16
      $region15: #{conv2d_bn.1} parent=11 // pred_region
        %p170 = scmp.lt.s32.totalorder %s21, 0
        %s171 = scalar_select %p170, %s21, 0
        %s172 = smul.addr %s171, 2
        %s173 = scalar_lea.vmem %s1, %s172
      $region16: #{conv2d_bn.1} parent=11 // pred_fallthru
        _
      // Predicated region
      $region17: #{conv2d_bn.1} parent=11 // pred_check
        %p174 = pneg %p96
      $region18: #{conv2d_bn.1} parent=11 // pred_check_branch
        %176 = sbr.rel (%p174) target = $region20
      $region19: #{conv2d_bn.1} parent=11 // pred_region
        _
      $region20: #{conv2d_bn.1} parent=11 // pred_fallthru
        _
    $region12: #{conv2d_bn.1} parent=5 // pred_fallthru
      _
    %p177 = scmp.lt.s32.totalorder %s11, 2
    // Predicated region
    $region21: #{conv2d_bn.1} parent=5 // pred_check
      %p178 = pneg %p177
    $region22: #{conv2d_bn.1} parent=5 // pred_check_branch
      %180 = sbr.rel (%p178) target = $region24
    $region23: #{conv2d_bn.1} parent=5 // pred_region
      // Predicated region
      $region25: #{conv2d_bn.1} parent=23 // pred_check
        %p181 = pneg %p43
      $region26: #{conv2d_bn.1} parent=23 // pred_check_branch
        %183 = sbr.rel (%p181) target = $region28
      $region27: #{conv2d_bn.1} parent=23 // pred_region
        %p184 = scmp.lt.s32.totalorder %s18, 1
        %s185 = scalar_select %p184, %s18, 1
        %s186 = smul.addr %s185, 41
        %s187 = smul.addr %s186, 4
        %s188 = scalar_lea.vmem %s0, %s187
      $region28: #{conv2d_bn.1} parent=23 // pred_fallthru
        _
    $region24: #{conv2d_bn.1} parent=5 // pred_fallthru
      _
    %p189 = scmp.le.s32.totalorder 1, %s11
    %p190 = scmp.lt.s32.totalorder %s11, 3
    %p191 = pnand %p189, %p190
    %p192 = pneg %p191
    // Predicated region
    $region29: #{conv2d_bn.1} parent=5 // pred_check
      _
    $region30: #{conv2d_bn.1} parent=5 // pred_check_branch
      %194 = sbr.rel (%p191) target = $region32
    $region31: #{conv2d_bn.1} parent=5 // pred_region
      %s195 = ssub.s32 %s11, 1
      %p196 = scmp.lt.s32.totalorder %s20, 1
      %s197 = scalar_select %p196, %s20, 1
      %s198 = smul.addr %s197, 41
      %s199 = smul.addr %s198, 4
      %s200 = scalar_lea.vmem %s0, %s199
      %p201 = pneg %p49
      %p202 = pneg %p46
      %p203 = scmp.lt.s32.totalorder %s21, 0
      %s204 = scalar_select %p203, %s21, 0
      %s205 = smul.addr %s204, 2
      %s206 = scalar_lea.vmem %s1, %s205
      %p207 = pneg %p75
      %p208 = pneg %p72
      %p209 = pneg %p96
      %p210 = pneg %p93
      %p211 = pneg %p124
      %p212 = pneg %p121
      %p213 = scmp.lt.s32.totalorder %s20, 1
      %s214 = scalar_select %p213, %s20, 1
      %p215 = scmp.lt.s32.totalorder %s21, 0
      %s216 = scalar_select %p215, %s21, 0
      %s217 = smul.addr %s214, 36
      %s218 = sadd.s32 %s216, %s217
      %s219 = smul.addr %s218, 4
      %s220 = scalar_lea.vmem %s3, %s219
      %p221 = pneg %p152
      %p222 = pneg %p149
      %p223 = scmp.lt.s32.totalorder %s20, 1
      %s224 = scalar_select %p223, %s20, 1
      %p225 = scmp.lt.s32.totalorder %s21, 0
      %s226 = scalar_select %p225, %s21, 0
      %s227 = sadd.s32 %s226, %s224
      %s228 = smul.addr %s227, 8
      %s229 = scalar_lea.vmem %s4, %s228
      %p230 = scmp.lt.s32.totalorder %s20, 1
      %s231 = scalar_select %p230, %s20, 1
      %s232 = smul.addr %s231, 41
      %s233 = smul.addr %s232, 4
      %s234 = scalar_lea.vmem %s0, %s233
      %p235 = scmp.lt.s32.totalorder %s21, 0
      %s236 = scalar_select %p235, %s21, 0
      %s237 = smul.addr %s236, 2
      %s238 = scalar_lea.vmem %s1, %s237
      %p239 = scmp.lt.s32.totalorder %s20, 1
      %s240 = scalar_select %p239, %s20, 1
      %p241 = scmp.lt.s32.totalorder %s21, 0
      %s242 = scalar_select %p241, %s21, 0
      %s243 = smul.addr %s240, 36
      %s244 = sadd.s32 %s242, %s243
      %s245 = smul.addr %s244, 4
      %s246 = scalar_lea.vmem %s3, %s245
      %p247 = scmp.lt.s32.totalorder %s20, 1
      %s248 = scalar_select %p247, %s20, 1
      %p249 = scmp.lt.s32.totalorder %s21, 0
      %s250 = scalar_select %p249, %s21, 0
      %s251 = sadd.s32 %s250, %s248
      %s252 = smul.addr %s251, 8
      %s253 = scalar_lea.vmem %s4, %s252
      %v255 = vld [vmem:[%s234] sm:$0xf]
      %v256 = vld [vmem:[%s234 + $0x4] sm:$0xf]
      %v257 = vld [vmem:[%s234 + $0x8] sm:$0xf]
      %v258 = vld [vmem:[%s234 + $0xc] sm:$0xf]
      %v259 = vld [vmem:[%s234 + $0x10] sm:$0xf]
      %v260 = vld [vmem:[%s234 + $0x14] sm:$0xf]
      %v261 = vld [vmem:[%s234 + $0x18] sm:$0xf]
      %v262 = vld [vmem:[%s234 + $0x1c] sm:$0xf]
      %v263 = vld [vmem:[%s234 + $0x20] sm:$0xf]
      %v264 = vld [vmem:[%s234 + $0x24] sm:$0xf]
      %v265 = vld [vmem:[%s234 + $0x28] sm:$0xf]
      %v266 = vld [vmem:[%s234 + $0x2c] sm:$0xf]
      %v267 = vld [vmem:[%s234 + $0x30] sm:$0xf]
      %v268 = vld [vmem:[%s234 + $0x34] sm:$0xf]
      %v269 = vld [vmem:[%s234 + $0x38] sm:$0xf]
      %v270 = vld [vmem:[%s234 + $0x3c] sm:$0xf]
      %v271 = vld [vmem:[%s234 + $0x40] sm:$0xf]
      %v272 = vld [vmem:[%s234 + $0x44] sm:$0xf]
      %v273 = vld [vmem:[%s234 + $0x48] sm:$0xf]
      %v274 = vld [vmem:[%s234 + $0x4c] sm:$0xf]
      %v275 = vld [vmem:[%s234 + $0x50] sm:$0xf]
      %v276 = vld [vmem:[%s234 + $0x54] sm:$0xf]
      %v277 = vld [vmem:[%s234 + $0x58] sm:$0xf]
      %v278 = vld [vmem:[%s234 + $0x5c] sm:$0xf]
      %v279 = vld [vmem:[%s234 + $0x60] sm:$0xf]
      %v280 = vld [vmem:[%s234 + $0x64] sm:$0xf]
      %v281 = vld [vmem:[%s234 + $0x68] sm:$0xf]
      %v282 = vld [vmem:[%s234 + $0x6c] sm:$0xf]
      %v283 = vld [vmem:[%s234 + $0x70] sm:$0xf]
      %v284 = vld [vmem:[%s234 + $0x74] sm:$0xf]
      %v285 = vld [vmem:[%s234 + $0x78] sm:$0xf]
      %v286 = vld [vmem:[%s234 + $0x7c] sm:$0xf]
      %v287 = vld [vmem:[%s234 + $0x80] sm:$0xf]
      %v288 = vld [vmem:[%s234 + $0x84] sm:$0xf]
      %v289 = vld [vmem:[%s234 + $0x88] sm:$0xf]
      %v290 = vld [vmem:[%s234 + $0x8c] sm:$0xf]
      %v291 = vld [vmem:[%s238] sm:$0x3]
      %v292 = vld [vmem:[%s234 + $0x90] sm:$0x1]
      %s293 = scalar_lea.vmem %s238, 2
      %v294 = vld [vmem:[%s293] sm:$0x3]
      %v332 = vunpack.c.l.b16 %v255
      %v333 = vunpack.c.l.b16 %v256
      %v334 = vunpack.c.l.b16 %v257
      %v335 = vunpack.c.l.b16 %v258
      %v336 = vunpack.c.l.b16 %v259
      %v337 = vunpack.c.l.b16 %v260
      %v338 = vunpack.c.l.b16 %v261
      %v339 = vunpack.c.l.b16 %v262
      %v340 = vunpack.c.l.b16 %v263
      %v341 = vunpack.c.l.b16 %v264
      %v342 = vunpack.c.l.b16 %v265
      %v343 = vunpack.c.l.b16 %v266
      %v344 = vunpack.c.l.b16 %v267
      %v345 = vunpack.c.l.b16 %v268
      %v346 = vunpack.c.l.b16 %v269
      %v347 = vunpack.c.l.b16 %v270
      %v348 = vunpack.c.l.b16 %v271
      %v349 = vunpack.c.l.b16 %v272
      %v350 = vunpack.c.l.b16 %v273
      %v351 = vunpack.c.l.b16 %v274
      %v352 = vunpack.c.l.b16 %v275
      %v353 = vunpack.c.l.b16 %v276
      %v354 = vunpack.c.l.b16 %v277
      %v355 = vunpack.c.l.b16 %v278
      %v356 = vunpack.c.l.b16 %v279
      %v357 = vunpack.c.l.b16 %v280
      %v358 = vunpack.c.l.b16 %v281
      %v359 = vunpack.c.l.b16 %v282
      %v360 = vunpack.c.l.b16 %v283
      %v361 = vunpack.c.l.b16 %v284
      %v362 = vunpack.c.l.b16 %v285
      %v363 = vunpack.c.l.b16 %v286
      %v364 = vunpack.c.l.b16 %v287
      %v365 = vunpack.c.l.b16 %v288
      %v366 = vunpack.c.l.b16 %v289
      %v367 = vunpack.c.l.b16 %v290
      %v368 = vunpack.c.l.b16 %v292
      %v369 = vpack.c.b16 %v333, %v332
      %v370 = vpack.c.b16 %v335, %v334
      %v371 = vpack.c.b16 %v337, %v336
      %v372 = vpack.c.b16 %v339, %v338
      %v373 = vpack.c.b16 %v341, %v340
      %v374 = vpack.c.b16 %v343, %v342
      %v375 = vpack.c.b16 %v345, %v344
      %v376 = vpack.c.b16 %v347, %v346
      %v377 = vpack.c.b16 %v349, %v348
      %v378 = vpack.c.b16 %v351, %v350
      %v379 = vpack.c.b16 %v353, %v352
      %v380 = vpack.c.b16 %v355, %v354
      %v381 = vpack.c.b16 %v357, %v356
      %v382 = vpack.c.b16 %v359, %v358
      %v383 = vpack.c.b16 %v361, %v360
      %v384 = vpack.c.b16 %v363, %v362
      %v385 = vpack.c.b16 %v365, %v364
      %v386 = vpack.c.b16 %v367, %v366
      %v387 = vpack.c.b16 %v368, %v368
      %vm388 = vsmask.f32 7424
      %v390 = vshrl.u32 %v369, 16
      %v392 = vshll.u32 %v369, 16
      %v394 = vrot.slane %v392, 1
      %v395 = vor.u32 %v390, %v394
      %v397 = vshll.u32 %v370, 16
      %v399 = vrot.slane %v397, 1
      %v400 = vsel %vm388, %v395, %v399
      %v401 = vshrl.u32 %v370, 16
      %v403 = vor.u32 %v401, %v399
      %v405 = vshll.u32 %v371, 16
      %v407 = vrot.slane %v405, 1
      %v408 = vsel %vm388, %v403, %v407
      %v409 = vshrl.u32 %v371, 16
      %v411 = vor.u32 %v409, %v407
      %v413 = vshll.u32 %v372, 16
      %v415 = vrot.slane %v413, 1
      %v416 = vsel %vm388, %v411, %v415
      %v417 = vshrl.u32 %v372, 16
      %v419 = vor.u32 %v417, %v415
      %v421 = vshll.u32 %v373, 16
      %v423 = vrot.slane %v421, 1
      %v424 = vsel %vm388, %v419, %v423
      %v425 = vshrl.u32 %v373, 16
      %v427 = vor.u32 %v425, %v423
      %v429 = vshll.u32 %v374, 16
      %v431 = vrot.slane %v429, 1
      %v432 = vsel %vm388, %v427, %v431
      %v433 = vshrl.u32 %v374, 16
      %v435 = vor.u32 %v433, %v431
      %v437 = vshll.u32 %v375, 16
      %v439 = vrot.slane %v437, 1
      %v440 = vsel %vm388, %v435, %v439
      %v441 = vshrl.u32 %v375, 16
      %v443 = vor.u32 %v441, %v439
      %v445 = vshll.u32 %v376, 16
      %v447 = vrot.slane %v445, 1
      %v448 = vsel %vm388, %v443, %v447
      %v449 = vshrl.u32 %v376, 16
      %v451 = vor.u32 %v449, %v447
      %v453 = vshll.u32 %v377, 16
      %v455 = vrot.slane %v453, 1
      %v456 = vsel %vm388, %v451, %v455
      %v457 = vshrl.u32 %v377, 16
      %v459 = vor.u32 %v457, %v455
      %v461 = vshll.u32 %v378, 16
      %v463 = vrot.slane %v461, 1
      %v464 = vsel %vm388, %v459, %v463
      %v465 = vshrl.u32 %v378, 16
      %v467 = vor.u32 %v465, %v463
      %v469 = vshll.u32 %v379, 16
      %v471 = vrot.slane %v469, 1
      %v472 = vsel %vm388, %v467, %v471
      %v473 = vshrl.u32 %v379, 16
      %v475 = vor.u32 %v473, %v471
      %v477 = vshll.u32 %v380, 16
      %v479 = vrot.slane %v477, 1
      %v480 = vsel %vm388, %v475, %v479
      %v481 = vshrl.u32 %v380, 16
      %v483 = vor.u32 %v481, %v479
      %v485 = vshll.u32 %v381, 16
      %v487 = vrot.slane %v485, 1
      %v488 = vsel %vm388, %v483, %v487
      %v489 = vshrl.u32 %v381, 16
      %v491 = vor.u32 %v489, %v487
      %v493 = vshll.u32 %v382, 16
      %v495 = vrot.slane %v493, 1
      %v496 = vsel %vm388, %v491, %v495
      %v497 = vshrl.u32 %v382, 16
      %v499 = vor.u32 %v497, %v495
      %v501 = vshll.u32 %v383, 16
      %v503 = vrot.slane %v501, 1
      %v504 = vsel %vm388, %v499, %v503
      %v505 = vshrl.u32 %v383, 16
      %v507 = vor.u32 %v505, %v503
      %v509 = vshll.u32 %v384, 16
      %v511 = vrot.slane %v509, 1
      %v512 = vsel %vm388, %v507, %v511
      %v513 = vshrl.u32 %v384, 16
      %v515 = vor.u32 %v513, %v511
      %v517 = vshll.u32 %v385, 16
      %v519 = vrot.slane %v517, 1
      %v520 = vsel %vm388, %v515, %v519
      %v521 = vshrl.u32 %v385, 16
      %v523 = vor.u32 %v521, %v519
      %v525 = vshll.u32 %v386, 16
      %v527 = vrot.slane %v525, 1
      %v528 = vsel %vm388, %v523, %v527
      %v529 = vshrl.u32 %v386, 16
      %v531 = vor.u32 %v529, %v527
      %v533 = vshll.u32 %v387, 16
      %v535 = vrot.slane %v533, 1
      %v536 = vsel %vm388, %v531, %v535
      %vm537 = vcmask 31744
      %v539 = vsel %vm537, %v400, 0
      %v542 = vsel %vm537, %v408, 0
      %v545 = vsel %vm537, %v416, 0
      %v548 = vsel %vm537, %v424, 0
      %v551 = vsel %vm537, %v432, 0
      %v554 = vsel %vm537, %v440, 0
      %v557 = vsel %vm537, %v448, 0
      %v560 = vsel %vm537, %v456, 0
      %v563 = vsel %vm537, %v464, 0
      %v566 = vsel %vm537, %v472, 0
      %v569 = vsel %vm537, %v480, 0
      %v572 = vsel %vm537, %v488, 0
      %v575 = vsel %vm537, %v496, 0
      %v578 = vsel %vm537, %v504, 0
      %v581 = vsel %vm537, %v512, 0
      %v584 = vsel %vm537, %v520, 0
      %v587 = vsel %vm537, %v528, 0
      %v590 = vsel %vm537, %v536, 0
      %vm592 = vcmask 1041408
      %v594 = vsel %vm592, %v294, 0
      %596 = vmatprep.subr.bf16.mxu0 0
      %597 = vmatpush1.bf16.msra.mxu0 %v594
      %598 = vmatprep.subr.bf16.mxu0 0
      %599 = vmatpush1.bf16.msra.mxu0 0
      %600 = vmatprep.subr.bf16.mxu0 0
      %601 = vmatpush1.bf16.msra.mxu0 0
      %602 = vmatprep.subr.bf16.mxu0 0
      %603 = vmatpush1.bf16.msra.mxu0 0
      %604 = vmatprep.subr.bf16.mxu0 0
      %605 = vmatpush1.bf16.msra.mxu0 0
      %606 = vmatprep.subr.bf16.mxu0 0
      %607 = vmatpush1.bf16.msra.mxu0 0
      %608 = vmatprep.subr.bf16.mxu0 0
      %609 = vmatpush1.bf16.msra.mxu0 0
      %610 = vmatprep.subr.bf16.mxu0 0
      %611 = vmatpush1.bf16.msra.mxu0 0
      %612 = vmatprep.subr.bf16.mxu0 0
      %613 = vmatpush1.bf16.msra.mxu0 0
      %614 = vmatprep.subr.bf16.mxu0 0
      %615 = vmatpush1.bf16.msra.mxu0 0
      %616 = vmatprep.subr.bf16.mxu0 0
      %617 = vmatpush1.bf16.msra.mxu0 0
      %618 = vmatprep.subr.bf16.mxu0 0
      %619 = vmatpush1.bf16.msra.mxu0 0
      %620 = vmatprep.subr.bf16.mxu0 0
      %621 = vmatpush1.bf16.msra.mxu0 0
      %622 = vmatprep.subr.bf16.mxu0 0
      %623 = vmatpush1.bf16.msra.mxu0 0
      %624 = vmatprep.subr.bf16.mxu0 0
      %625 = vmatpush1.bf16.msra.mxu0 0
      %626 = vmatprep.subr.bf16.mxu0 0
      %627 = vmatpush1.bf16.msra.mxu0 0
      %628 = vmatprep.mubr.bf16.mxu0 0
      %629 = vmatmul.mubr.bf16.gmra.mrb[0].mxu0 %v539
      %v630 = vpop.f32.mrb[0].mxu0
      %v631 = vadd.f32 0.0, %v630
      %v632 = vpop.f32.mrb[0].mxu0
      %v633 = vpop.f32.mrb[0].mxu0
      %v634 = vadd.f32 0.0, %v633
      %v635 = vpop.f32.mrb[0].mxu0
      %636 = vmatprep.mubr.bf16.mxu0 0
      %637 = vmatmul.mubr.bf16.gmra.mrb[0].mxu0 %v542
      %v638 = vpop.f32.mrb[0].mxu0
      %v639 = vadd.f32 0.0, %v638
      %v640 = vpop.f32.mrb[0].mxu0
      %v641 = vpop.f32.mrb[0].mxu0
      %v642 = vadd.f32 0.0, %v641
      %v643 = vpop.f32.mrb[0].mxu0
      %644 = vmatprep.mubr.bf16.mxu0 0
      %645 = vmatmul.mubr.bf16.gmra.mrb[0].mxu0 %v545
      %v646 = vpop.f32.mrb[0].mxu0
      %v647 = vadd.f32 0.0, %v646
      %v648 = vpop.f32.mrb[0].mxu0
      %v649 = vpop.f32.mrb[0].mxu0
      %v650 = vadd.f32 0.0, %v649
      %v651 = vpop.f32.mrb[0].mxu0
      %652 = vmatprep.mubr.bf16.mxu0 0
      %653 = vmatmul.mubr.bf16.gmra.mrb[0].mxu0 %v548
      %v654 = vpop.f32.mrb[0].mxu0
      %v655 = vadd.f32 0.0, %v654
      %v656 = vpop.f32.mrb[0].mxu0
      %v657 = vpop.f32.mrb[0].mxu0
      %v658 = vadd.f32 0.0, %v657
      %v659 = vpop.f32.mrb[0].mxu0
      %660 = vmatprep.mubr.bf16.mxu0 0
      %661 = vmatmul.mubr.bf16.gmra.mrb[0].mxu0 %v551
      %v662 = vpop.f32.mrb[0].mxu0
      %v663 = vadd.f32 0.0, %v662
      %v664 = vpop.f32.mrb[0].mxu0
      %v665 = vpop.f32.mrb[0].mxu0
      %v666 = vadd.f32 0.0, %v665
      %v667 = vpop.f32.mrb[0].mxu0
      %668 = vmatprep.mubr.bf16.mxu0 0
      %669 = vmatmul.mubr.bf16.gmra.mrb[0].mxu0 %v554
      %v670 = vpop.f32.mrb[0].mxu0
      %v671 = vadd.f32 0.0, %v670
      %v672 = vpop.f32.mrb[0].mxu0
      %v673 = vpop.f32.mrb[0].mxu0
      %v674 = vadd.f32 0.0, %v673
      %v675 = vpop.f32.mrb[0].mxu0
      %676 = vmatprep.mubr.bf16.mxu0 0
      %677 = vmatmul.mubr.bf16.gmra.mrb[0].mxu0 %v557
      %v678 = vpop.f32.mrb[0].mxu0
      %v679 = vadd.f32 0.0, %v678
      %v680 = vpop.f32.mrb[0].mxu0
      %v681 = vpop.f32.mrb[0].mxu0
      %v682 = vadd.f32 0.0, %v681
      %v683 = vpop.f32.mrb[0].mxu0
      %684 = vmatprep.mubr.bf16.mxu0 0
      %685 = vmatmul.mubr.bf16.gmra.mrb[0].mxu0 %v560
      %v686 = vpop.f32.mrb[0].mxu0
      %v687 = vadd.f32 0.0, %v686
      %v688 = vpop.f32.mrb[0].mxu0
      %v689 = vpop.f32.mrb[0].mxu0
      %v690 = vadd.f32 0.0, %v689
      %v691 = vpop.f32.mrb[0].mxu0
      %692 = vmatprep.mubr.bf16.mxu0 0
      %693 = vmatmul.mubr.bf16.gmra.mrb[0].mxu0 %v563
      %v694 = vpop.f32.mrb[0].mxu0
      %v695 = vadd.f32 0.0, %v694
      %v696 = vpop.f32.mrb[0].mxu0
      %v697 = vpop.f32.mrb[0].mxu0
      %v698 = vadd.f32 0.0, %v697
      %v699 = vpop.f32.mrb[0].mxu0
      %700 = vmatprep.mubr.bf16.mxu0 0
      %701 = vmatmul.mubr.bf16.gmra.mrb[0].mxu0 %v566
      %v702 = vpop.f32.mrb[0].mxu0
      %v703 = vadd.f32 0.0, %v702
      %v704 = vpop.f32.mrb[0].mxu0
      %v705 = vpop.f32.mrb[0].mxu0
      %v706 = vadd.f32 0.0, %v705
      %v707 = vpop.f32.mrb[0].mxu0
      %708 = vmatprep.mubr.bf16.mxu0 0
      %709 = vmatmul.mubr.bf16.gmra.mrb[0].mxu0 %v569
      %v710 = vpop.f32.mrb[0].mxu0
      %v711 = vadd.f32 0.0, %v710
      %v712 = vpop.f32.mrb[0].mxu0
      %v713 = vpop.f32.mrb[0].mxu0
      %v714 = vadd.f32 0.0, %v713
      %v715 = vpop.f32.mrb[0].mxu0
      %716 = vmatprep.mubr.bf16.mxu0 0
      %717 = vmatmul.mubr.bf16.gmra.mrb[0].mxu0 %v572
      %v718 = vpop.f32.mrb[0].mxu0
      %v719 = vadd.f32 0.0, %v718
      %v720 = vpop.f32.mrb[0].mxu0
      %v721 = vpop.f32.mrb[0].mxu0
      %v722 = vadd.f32 0.0, %v721
      %v723 = vpop.f32.mrb[0].mxu0
      %724 = vmatprep.mubr.bf16.mxu0 0
      %725 = vmatmul.mubr.bf16.gmra.mrb[0].mxu0 %v575
      %v726 = vpop.f32.mrb[0].mxu0
      %v727 = vadd.f32 0.0, %v726
      %v728 = vpop.f32.mrb[0].mxu0
      %v729 = vpop.f32.mrb[0].mxu0
      %v730 = vadd.f32 0.0, %v729
      %v731 = vpop.f32.mrb[0].mxu0
      %732 = vmatprep.mubr.bf16.mxu0 0
      %733 = vmatmul.mubr.bf16.gmra.mrb[0].mxu0 %v578
      %v734 = vpop.f32.mrb[0].mxu0
      %v735 = vadd.f32 0.0, %v734
      %v736 = vpop.f32.mrb[0].mxu0
      %v737 = vpop.f32.mrb[0].mxu0
      %v738 = vadd.f32 0.0, %v737
      %v739 = vpop.f32.mrb[0].mxu0
      %740 = vmatprep.mubr.bf16.mxu0 0
      %741 = vmatmul.mubr.bf16.gmra.mrb[0].mxu0 %v581
      %v742 = vpop.f32.mrb[0].mxu0
      %v743 = vadd.f32 0.0, %v742
      %v744 = vpop.f32.mrb[0].mxu0
      %v745 = vpop.f32.mrb[0].mxu0
      %v746 = vadd.f32 0.0, %v745
      %v747 = vpop.f32.mrb[0].mxu0
      %748 = vmatprep.mubr.bf16.mxu0 0
      %749 = vmatmul.mubr.bf16.gmra.mrb[0].mxu0 %v584
      %v750 = vpop.f32.mrb[0].mxu0
      %v751 = vadd.f32 0.0, %v750
      %v752 = vpop.f32.mrb[0].mxu0
      %v753 = vpop.f32.mrb[0].mxu0
      %v754 = vadd.f32 0.0, %v753
      %v755 = vpop.f32.mrb[0].mxu0
      %756 = vmatprep.mubr.bf16.mxu0 0
      %757 = vmatmul.mubr.bf16.gmra.mrb[0].mxu0 %v587
      %v758 = vpop.f32.mrb[0].mxu0
      %v759 = vadd.f32 0.0, %v758
      %v760 = vpop.f32.mrb[0].mxu0
      %v761 = vpop.f32.mrb[0].mxu0
      %v762 = vadd.f32 0.0, %v761
      %v763 = vpop.f32.mrb[0].mxu0
      %764 = vmatprep.mubr.bf16.mxu0 0
      %765 = vmatmul.mubr.bf16.gmra.mrb[0].mxu0 %v590
      %v766 = vpop.f32.mrb[0].mxu0
      %v767 = vadd.f32 0.0, %v766
      %v768 = vpop.f32.mrb[0].mxu0
      %v769 = vpop.f32.mrb[0].mxu0
      %v770 = vadd.f32 0.0, %v769
      %v771 = vpop.f32.mrb[0].mxu0
      %772 = vdwg.mxu0
      %v773 = vsel %vm537, %v369, 0
      %v775 = vsel %vm537, %v370, 0
      %v777 = vsel %vm537, %v371, 0
      %v779 = vsel %vm537, %v372, 0
      %v781 = vsel %vm537, %v373, 0
      %v783 = vsel %vm537, %v374, 0
      %v785 = vsel %vm537, %v375, 0
      %v787 = vsel %vm537, %v376, 0
      %v789 = vsel %vm537, %v377, 0
      %v791 = vsel %vm537, %v378, 0
      %v793 = vsel %vm537, %v379, 0
      %v795 = vsel %vm537, %v380, 0
      %v797 = vsel %vm537, %v381, 0
      %v799 = vsel %vm537, %v382, 0
      %v801 = vsel %vm537, %v383, 0
      %v803 = vsel %vm537, %v384, 0
      %v805 = vsel %vm537, %v385, 0
      %v807 = vsel %vm537, %v386, 0
      %v810 = vsel %vm592, %v291, 0
      %812 = vmatprep.subr.bf16.mxu0 0
      %813 = vmatpush1.bf16.msra.mxu0 %v810
      %814 = vmatprep.subr.bf16.mxu0 0
      %815 = vmatpush1.bf16.msra.mxu0 0
      %816 = vmatprep.subr.bf16.mxu0 0
      %817 = vmatpush1.bf16.msra.mxu0 0
      %818 = vmatprep.subr.bf16.mxu0 0
      %819 = vmatpush1.bf16.msra.mxu0 0
      %820 = vmatprep.subr.bf16.mxu0 0
      %821 = vmatpush1.bf16.msra.mxu0 0
      %822 = vmatprep.subr.bf16.mxu0 0
      %823 = vmatpush1.bf16.msra.mxu0 0
      %824 = vmatprep.subr.bf16.mxu0 0
      %825 = vmatpush1.bf16.msra.mxu0 0
      %826 = vmatprep.subr.bf16.mxu0 0
      %827 = vmatpush1.bf16.msra.mxu0 0
      %828 = vmatprep.subr.bf16.mxu0 0
      %829 = vmatpush1.bf16.msra.mxu0 0
      %830 = vmatprep.subr.bf16.mxu0 0
      %831 = vmatpush1.bf16.msra.mxu0 0
      %832 = vmatprep.subr.bf16.mxu0 0
      %833 = vmatpush1.bf16.msra.mxu0 0
      %834 = vmatprep.subr.bf16.mxu0 0
      %835 = vmatpush1.bf16.msra.mxu0 0
      %836 = vmatprep.subr.bf16.mxu0 0
      %837 = vmatpush1.bf16.msra.mxu0 0
      %838 = vmatprep.subr.bf16.mxu0 0
      %839 = vmatpush1.bf16.msra.mxu0 0
      %840 = vmatprep.subr.bf16.mxu0 0
      %841 = vmatpush1.bf16.msra.mxu0 0
      %842 = vmatprep.subr.bf16.mxu0 0
      %843 = vmatpush1.bf16.msra.mxu0 0
      %844 = vmatprep.mubr.bf16.mxu0 0
      %845 = vmatmul.mubr.bf16.gmra.mrb[0].mxu0 %v773
      %v846 = vpop.f32.mrb[0].mxu0
      %v847 = vadd.f32 %v631, %v846
      %v848 = vpop.f32.mrb[0].mxu0
      %v849 = vpop.f32.mrb[0].mxu0
      %v850 = vadd.f32 %v634, %v849
      %v851 = vpop.f32.mrb[0].mxu0
      %852 = vmatprep.mubr.bf16.mxu0 0
      %853 = vmatmul.mubr.bf16.gmra.mrb[0].mxu0 %v775
      %v854 = vpop.f32.mrb[0].mxu0
      %v855 = vadd.f32 %v639, %v854
      %v856 = vpop.f32.mrb[0].mxu0
      %v857 = vpop.f32.mrb[0].mxu0
      %v858 = vadd.f32 %v642, %v857
      %v859 = vpop.f32.mrb[0].mxu0
      %860 = vmatprep.mubr.bf16.mxu0 0
      %861 = vmatmul.mubr.bf16.gmra.mrb[0].mxu0 %v777
      %v862 = vpop.f32.mrb[0].mxu0
      %v863 = vadd.f32 %v647, %v862
      %v864 = vpop.f32.mrb[0].mxu0
      %v865 = vpop.f32.mrb[0].mxu0
      %v866 = vadd.f32 %v650, %v865
      %v867 = vpop.f32.mrb[0].mxu0
      %868 = vmatprep.mubr.bf16.mxu0 0
      %869 = vmatmul.mubr.bf16.gmra.mrb[0].mxu0 %v779
      %v870 = vpop.f32.mrb[0].mxu0
      %v871 = vadd.f32 %v655, %v870
      %v872 = vpop.f32.mrb[0].mxu0
      %v873 = vpop.f32.mrb[0].mxu0
      %v874 = vadd.f32 %v658, %v873
      %v875 = vpop.f32.mrb[0].mxu0
      %876 = vmatprep.mubr.bf16.mxu0 0
      %877 = vmatmul.mubr.bf16.gmra.mrb[0].mxu0 %v781
      %v878 = vpop.f32.mrb[0].mxu0
      %v879 = vadd.f32 %v663, %v878
      %v880 = vpop.f32.mrb[0].mxu0
      %v881 = vpop.f32.mrb[0].mxu0
      %v882 = vadd.f32 %v666, %v881
      %v883 = vpop.f32.mrb[0].mxu0
      %884 = vmatprep.mubr.bf16.mxu0 0
      %885 = vmatmul.mubr.bf16.gmra.mrb[0].mxu0 %v783
      %v886 = vpop.f32.mrb[0].mxu0
      %v887 = vadd.f32 %v671, %v886
      %v888 = vpop.f32.mrb[0].mxu0
      %v889 = vpop.f32.mrb[0].mxu0
      %v890 = vadd.f32 %v674, %v889
      %v891 = vpop.f32.mrb[0].mxu0
      %892 = vmatprep.mubr.bf16.mxu0 0
      %893 = vmatmul.mubr.bf16.gmra.mrb[0].mxu0 %v785
      %v894 = vpop.f32.mrb[0].mxu0
      %v895 = vadd.f32 %v679, %v894
      %v896 = vpop.f32.mrb[0].mxu0
      %v897 = vpop.f32.mrb[0].mxu0
      %v898 = vadd.f32 %v682, %v897
      %v899 = vpop.f32.mrb[0].mxu0
      %900 = vmatprep.mubr.bf16.mxu0 0
      %901 = vmatmul.mubr.bf16.gmra.mrb[0].mxu0 %v787
      %v902 = vpop.f32.mrb[0].mxu0
      %v903 = vadd.f32 %v687, %v902
      %v904 = vpop.f32.mrb[0].mxu0
      %v905 = vpop.f32.mrb[0].mxu0
      %v906 = vadd.f32 %v690, %v905
      %v907 = vpop.f32.mrb[0].mxu0
      %908 = vmatprep.mubr.bf16.mxu0 0
      %909 = vmatmul.mubr.bf16.gmra.mrb[0].mxu0 %v789
      %v910 = vpop.f32.mrb[0].mxu0
      %v911 = vadd.f32 %v695, %v910
      %v912 = vpop.f32.mrb[0].mxu0
      %v913 = vpop.f32.mrb[0].mxu0
      %v914 = vadd.f32 %v698, %v913
      %v915 = vpop.f32.mrb[0].mxu0
      %916 = vmatprep.mubr.bf16.mxu0 0
      %917 = vmatmul.mubr.bf16.gmra.mrb[0].mxu0 %v791
      %v918 = vpop.f32.mrb[0].mxu0
      %v919 = vadd.f32 %v703, %v918
      %v920 = vpop.f32.mrb[0].mxu0
      %v921 = vpop.f32.mrb[0].mxu0
      %v922 = vadd.f32 %v706, %v921
      %v923 = vpop.f32.mrb[0].mxu0
      %924 = vmatprep.mubr.bf16.mxu0 0
      %925 = vmatmul.mubr.bf16.gmra.mrb[0].mxu0 %v793
      %v926 = vpop.f32.mrb[0].mxu0
      %v927 = vadd.f32 %v711, %v926
      %v928 = vpop.f32.mrb[0].mxu0
      %v929 = vpop.f32.mrb[0].mxu0
      %v930 = vadd.f32 %v714, %v929
      %v931 = vpop.f32.mrb[0].mxu0
      %932 = vmatprep.mubr.bf16.mxu0 0
      %933 = vmatmul.mubr.bf16.gmra.mrb[0].mxu0 %v795
      %v934 = vpop.f32.mrb[0].mxu0
      %v935 = vadd.f32 %v719, %v934
      %v936 = vpop.f32.mrb[0].mxu0
      %v937 = vpop.f32.mrb[0].mxu0
      %v938 = vadd.f32 %v722, %v937
      %v939 = vpop.f32.mrb[0].mxu0
      %940 = vmatprep.mubr.bf16.mxu0 0
      %941 = vmatmul.mubr.bf16.gmra.mrb[0].mxu0 %v797
      %v942 = vpop.f32.mrb[0].mxu0
      %v943 = vadd.f32 %v727, %v942
      %v944 = vpop.f32.mrb[0].mxu0
      %v945 = vpop.f32.mrb[0].mxu0
      %v946 = vadd.f32 %v730, %v945
      %v947 = vpop.f32.mrb[0].mxu0
      %948 = vmatprep.mubr.bf16.mxu0 0
      %949 = vmatmul.mubr.bf16.gmra.mrb[0].mxu0 %v799
      %v950 = vpop.f32.mrb[0].mxu0
      %v951 = vadd.f32 %v735, %v950
      %v952 = vpop.f32.mrb[0].mxu0
      %v953 = vpop.f32.mrb[0].mxu0
      %v954 = vadd.f32 %v738, %v953
      %v955 = vpop.f32.mrb[0].mxu0
      %956 = vmatprep.mubr.bf16.mxu0 0
      %957 = vmatmul.mubr.bf16.gmra.mrb[0].mxu0 %v801
      %v958 = vpop.f32.mrb[0].mxu0
      %v959 = vadd.f32 %v743, %v958
      %v960 = vpop.f32.mrb[0].mxu0
      %v961 = vpop.f32.mrb[0].mxu0
      %v962 = vadd.f32 %v746, %v961
      %v963 = vpop.f32.mrb[0].mxu0
      %964 = vmatprep.mubr.bf16.mxu0 0
      %965 = vmatmul.mubr.bf16.gmra.mrb[0].mxu0 %v803
      %v966 = vpop.f32.mrb[0].mxu0
      %v967 = vadd.f32 %v751, %v966
      %v968 = vpop.f32.mrb[0].mxu0
      %v969 = vpop.f32.mrb[0].mxu0
      %v970 = vadd.f32 %v754, %v969
      %v971 = vpop.f32.mrb[0].mxu0
      %972 = vmatprep.mubr.bf16.mxu0 0
      %973 = vmatmul.mubr.bf16.gmra.mrb[0].mxu0 %v805
      %v974 = vpop.f32.mrb[0].mxu0
      %v975 = vadd.f32 %v759, %v974
      %v976 = vpop.f32.mrb[0].mxu0
      %v977 = vpop.f32.mrb[0].mxu0
      %v978 = vadd.f32 %v762, %v977
      %v979 = vpop.f32.mrb[0].mxu0
      %980 = vmatprep.mubr.bf16.mxu0 0
      %981 = vmatmul.mubr.bf16.gmra.mrb[0].mxu0 %v807
      %v982 = vpop.f32.mrb[0].mxu0
      %v983 = vadd.f32 %v767, %v982
      %v984 = vpop.f32.mrb[0].mxu0
      %v985 = vpop.f32.mrb[0].mxu0
      %v986 = vadd.f32 %v770, %v985
      %v987 = vpop.f32.mrb[0].mxu0
      %988 = vdwg.mxu0
      %v989 = vld [vmem:[%s234] sm:$0xe]
      %s990 = scalar_lea.vmem %s238, 4
      %v991 = vld [vmem:[%s990] sm:$0x3]
      %v993 = vunpack.c.l.b16 %v989
      %v994 = vpack.c.b16 %v333, %v993
      %vm995 = vcmask 1046528
      %v996 = vrot.slane %v994, 1
      %v997 = vrot.slane %v370, 1
      %v998 = vsel %vm995, %v996, %v997
      %v999 = vrot.slane %v371, 1
      %v1000 = vsel %vm995, %v997, %v999
      %v1001 = vrot.slane %v372, 1
      %v1002 = vsel %vm995, %v999, %v1001
      %v1003 = vrot.slane %v373, 1
      %v1004 = vsel %vm995, %v1001, %v1003
      %v1005 = vrot.slane %v374, 1
      %v1006 = vsel %vm995, %v1003, %v1005
      %v1007 = vrot.slane %v375, 1
      %v1008 = vsel %vm995, %v1005, %v1007
      %v1009 = vrot.slane %v376, 1
      %v1010 = vsel %vm995, %v1007, %v1009
      %v1011 = vrot.slane %v377, 1
      %v1012 = vsel %vm995, %v1009, %v1011
      %v1013 = vrot.slane %v378, 1
      %v1014 = vsel %vm995, %v1011, %v1013
      %v1015 = vrot.slane %v379, 1
      %v1016 = vsel %vm995, %v1013, %v1015
      %v1017 = vrot.slane %v380, 1
      %v1018 = vsel %vm995, %v1015, %v1017
      %v1019 = vrot.slane %v381, 1
      %v1020 = vsel %vm995, %v1017, %v1019
      %v1021 = vrot.slane %v382, 1
      %v1022 = vsel %vm995, %v1019, %v1021
      %v1023 = vrot.slane %v383, 1
      %v1024 = vsel %vm995, %v1021, %v1023
      %v1025 = vrot.slane %v384, 1
      %v1026 = vsel %vm995, %v1023, %v1025
      %v1027 = vrot.slane %v385, 1
      %v1028 = vsel %vm995, %v1025, %v1027
      %v1029 = vrot.slane %v386, 1
      %v1030 = vsel %vm995, %v1027, %v1029
      %v1031 = vrot.slane %v387, 1
      %v1032 = vsel %vm995, %v1029, %v1031
      %v1034 = vsel %vm537, %v998, 0
      %v1037 = vsel %vm537, %v1000, 0
      %v1040 = vsel %vm537, %v1002, 0
      %v1043 = vsel %vm537, %v1004, 0
      %v1046 = vsel %vm537, %v1006, 0
      %v1049 = vsel %vm537, %v1008, 0
      %v1052 = vsel %vm537, %v1010, 0
      %v1055 = vsel %vm537, %v1012, 0
      %v1058 = vsel %vm537, %v1014, 0
      %v1061 = vsel %vm537, %v1016, 0
      %v1064 = vsel %vm537, %v1018, 0
      %v1067 = vsel %vm537, %v1020, 0
      %v1070 = vsel %vm537, %v1022, 0
      %v1073 = vsel %vm537, %v1024, 0
      %v1076 = vsel %vm537, %v1026, 0
      %v1079 = vsel %vm537, %v1028, 0
      %v1082 = vsel %vm537, %v1030, 0
      %v1085 = vsel %vm537, %v1032, 0
      %v1088 = vsel %vm592, %v991, 0
      %1090 = vmatprep.subr.bf16.mxu0 0
      %1091 = vmatpush1.bf16.msra.mxu0 %v1088
      %1092 = vmatprep.subr.bf16.mxu0 0
      %1093 = vmatpush1.bf16.msra.mxu0 0
      %1094 = vmatprep.subr.bf16.mxu0 0
      %1095 = vmatpush1.bf16.msra.mxu0 0
      %1096 = vmatprep.subr.bf16.mxu0 0
      %1097 = vmatpush1.bf16.msra.mxu0 0
      %1098 = vmatprep.subr.bf16.mxu0 0
      %1099 = vmatpush1.bf16.msra.mxu0 0
      %1100 = vmatprep.subr.bf16.mxu0 0
      %1101 = vmatpush1.bf16.msra.mxu0 0
      %1102 = vmatprep.subr.bf16.mxu0 0
      %1103 = vmatpush1.bf16.msra.mxu0 0
      %1104 = vmatprep.subr.bf16.mxu0 0
      %1105 = vmatpush1.bf16.msra.mxu0 0
      %1106 = vmatprep.subr.bf16.mxu0 0
      %1107 = vmatpush1.bf16.msra.mxu0 0
      %1108 = vmatprep.subr.bf16.mxu0 0
      %1109 = vmatpush1.bf16.msra.mxu0 0
      %1110 = vmatprep.subr.bf16.mxu0 0
      %1111 = vmatpush1.bf16.msra.mxu0 0
      %1112 = vmatprep.subr.bf16.mxu0 0
      %1113 = vmatpush1.bf16.msra.mxu0 0
      %1114 = vmatprep.subr.bf16.mxu0 0
      %1115 = vmatpush1.bf16.msra.mxu0 0
      %1116 = vmatprep.subr.bf16.mxu0 0
      %1117 = vmatpush1.bf16.msra.mxu0 0
      %1118 = vmatprep.subr.bf16.mxu0 0
      %1119 = vmatpush1.bf16.msra.mxu0 0
      %1120 = vmatprep.subr.bf16.mxu0 0
      %1121 = vmatpush1.bf16.msra.mxu0 0
      %1122 = vmatprep.mubr.bf16.mxu0 0
      %1123 = vmatmul.mubr.bf16.gmra.mrb[0].mxu0 %v1034
      %v1124 = vpop.f32.mrb[0].mxu0
      %v1125 = vadd.f32 0.0, %v1124
      %v1126 = vpop.f32.mrb[0].mxu0
      %v1127 = vpop.f32.mrb[0].mxu0
      %v1128 = vadd.f32 0.0, %v1127
      %v1129 = vpop.f32.mrb[0].mxu0
      %1130 = vmatprep.mubr.bf16.mxu0 0
      %1131 = vmatmul.mubr.bf16.gmra.mrb[0].mxu0 %v1037
      %v1132 = vpop.f32.mrb[0].mxu0
      %v1133 = vadd.f32 0.0, %v1132
      %v1134 = vpop.f32.mrb[0].mxu0
      %v1135 = vpop.f32.mrb[0].mxu0
      %v1136 = vadd.f32 0.0, %v1135
      %v1137 = vpop.f32.mrb[0].mxu0
      %1138 = vmatprep.mubr.bf16.mxu0 0
      %1139 = vmatmul.mubr.bf16.gmra.mrb[0].mxu0 %v1040
      %v1140 = vpop.f32.mrb[0].mxu0
      %v1141 = vadd.f32 0.0, %v1140
      %v1142 = vpop.f32.mrb[0].mxu0
      %v1143 = vpop.f32.mrb[0].mxu0
      %v1144 = vadd.f32 0.0, %v1143
      %v1145 = vpop.f32.mrb[0].mxu0
      %1146 = vmatprep.mubr.bf16.mxu0 0
      %1147 = vmatmul.mubr.bf16.gmra.mrb[0].mxu0 %v1043
      %v1148 = vpop.f32.mrb[0].mxu0
      %v1149 = vadd.f32 0.0, %v1148
      %v1150 = vpop.f32.mrb[0].mxu0
      %v1151 = vpop.f32.mrb[0].mxu0
      %v1152 = vadd.f32 0.0, %v1151
      %v1153 = vpop.f32.mrb[0].mxu0
      %1154 = vmatprep.mubr.bf16.mxu0 0
      %1155 = vmatmul.mubr.bf16.gmra.mrb[0].mxu0 %v1046
      %v1156 = vpop.f32.mrb[0].mxu0
      %v1157 = vadd.f32 0.0, %v1156
      %v1158 = vpop.f32.mrb[0].mxu0
      %v1159 = vpop.f32.mrb[0].mxu0
      %v1160 = vadd.f32 0.0, %v1159
      %v1161 = vpop.f32.mrb[0].mxu0
      %1162 = vmatprep.mubr.bf16.mxu0 0
      %1163 = vmatmul.mubr.bf16.gmra.mrb[0].mxu0 %v1049
      %v1164 = vpop.f32.mrb[0].mxu0
      %v1165 = vadd.f32 0.0, %v1164
      %v1166 = vpop.f32.mrb[0].mxu0
      %v1167 = vpop.f32.mrb[0].mxu0
      %v1168 = vadd.f32 0.0, %v1167
      %v1169 = vpop.f32.mrb[0].mxu0
      %1170 = vmatprep.mubr.bf16.mxu0 0
      %1171 = vmatmul.mubr.bf16.gmra.mrb[0].mxu0 %v1052
      %v1172 = vpop.f32.mrb[0].mxu0
      %v1173 = vadd.f32 0.0, %v1172
      %v1174 = vpop.f32.mrb[0].mxu0
      %v1175 = vpop.f32.mrb[0].mxu0
      %v1176 = vadd.f32 0.0, %v1175
      %v1177 = vpop.f32.mrb[0].mxu0
      %1178 = vmatprep.mubr.bf16.mxu0 0
      %1179 = vmatmul.mubr.bf16.gmra.mrb[0].mxu0 %v1055
      %v1180 = vpop.f32.mrb[0].mxu0
      %v1181 = vadd.f32 0.0, %v1180
      %v1182 = vpop.f32.mrb[0].mxu0
      %v1183 = vpop.f32.mrb[0].mxu0
      %v1184 = vadd.f32 0.0, %v1183
      %v1185 = vpop.f32.mrb[0].mxu0
      %1186 = vmatprep.mubr.bf16.mxu0 0
      %1187 = vmatmul.mubr.bf16.gmra.mrb[0].mxu0 %v1058
      %v1188 = vpop.f32.mrb[0].mxu0
      %v1189 = vadd.f32 0.0, %v1188
      %v1190 = vpop.f32.mrb[0].mxu0
      %v1191 = vpop.f32.mrb[0].mxu0
      %v1192 = vadd.f32 0.0, %v1191
      %v1193 = vpop.f32.mrb[0].mxu0
      %1194 = vmatprep.mubr.bf16.mxu0 0
      %1195 = vmatmul.mubr.bf16.gmra.mrb[0].mxu0 %v1061
      %v1196 = vpop.f32.mrb[0].mxu0
      %v1197 = vadd.f32 0.0, %v1196
      %v1198 = vpop.f32.mrb[0].mxu0
      %v1199 = vpop.f32.mrb[0].mxu0
      %v1200 = vadd.f32 0.0, %v1199
      %v1201 = vpop.f32.mrb[0].mxu0
      %1202 = vmatprep.mubr.bf16.mxu0 0
      %1203 = vmatmul.mubr.bf16.gmra.mrb[0].mxu0 %v1064
      %v1204 = vpop.f32.mrb[0].mxu0
      %v1205 = vadd.f32 0.0, %v1204
      %v1206 = vpop.f32.mrb[0].mxu0
      %v1207 = vpop.f32.mrb[0].mxu0
      %v1208 = vadd.f32 0.0, %v1207
      %v1209 = vpop.f32.mrb[0].mxu0
      %1210 = vmatprep.mubr.bf16.mxu0 0
      %1211 = vmatmul.mubr.bf16.gmra.mrb[0].mxu0 %v1067
      %v1212 = vpop.f32.mrb[0].mxu0
      %v1213 = vadd.f32 0.0, %v1212
      %v1214 = vpop.f32.mrb[0].mxu0
      %v1215 = vpop.f32.mrb[0].mxu0
      %v1216 = vadd.f32 0.0, %v1215
      %v1217 = vpop.f32.mrb[0].mxu0
      %1218 = vmatprep.mubr.bf16.mxu0 0
      %1219 = vmatmul.mubr.bf16.gmra.mrb[0].mxu0 %v1070
      %v1220 = vpop.f32.mrb[0].mxu0
      %v1221 = vadd.f32 0.0, %v1220
      %v1222 = vpop.f32.mrb[0].mxu0
      %v1223 = vpop.f32.mrb[0].mxu0
      %v1224 = vadd.f32 0.0, %v1223
      %v1225 = vpop.f32.mrb[0].mxu0
      %1226 = vmatprep.mubr.bf16.mxu0 0
      %1227 = vmatmul.mubr.bf16.gmra.mrb[0].mxu0 %v1073
      %v1228 = vpop.f32.mrb[0].mxu0
      %v1229 = vadd.f32 0.0, %v1228
      %v1230 = vpop.f32.mrb[0].mxu0
      %v1231 = vpop.f32.mrb[0].mxu0
      %v1232 = vadd.f32 0.0, %v1231
      %v1233 = vpop.f32.mrb[0].mxu0
      %1234 = vmatprep.mubr.bf16.mxu0 0
      %1235 = vmatmul.mubr.bf16.gmra.mrb[0].mxu0 %v1076
      %v1236 = vpop.f32.mrb[0].mxu0
      %v1237 = vadd.f32 0.0, %v1236
      %v1238 = vpop.f32.mrb[0].mxu0
      %v1239 = vpop.f32.mrb[0].mxu0
      %v1240 = vadd.f32 0.0, %v1239
      %v1241 = vpop.f32.mrb[0].mxu0
      %1242 = vmatprep.mubr.bf16.mxu0 0
      %1243 = vmatmul.mubr.bf16.gmra.mrb[0].mxu0 %v1079
      %v1244 = vpop.f32.mrb[0].mxu0
      %v1245 = vadd.f32 0.0, %v1244
      %v1246 = vpop.f32.mrb[0].mxu0
      %v1247 = vpop.f32.mrb[0].mxu0
      %v1248 = vadd.f32 0.0, %v1247
      %v1249 = vpop.f32.mrb[0].mxu0
      %1250 = vmatprep.mubr.bf16.mxu0 0
      %1251 = vmatmul.mubr.bf16.gmra.mrb[0].mxu0 %v1082
      %v1252 = vpop.f32.mrb[0].mxu0
      %v1253 = vadd.f32 0.0, %v1252
      %v1254 = vpop.f32.mrb[0].mxu0
      %v1255 = vpop.f32.mrb[0].mxu0
      %v1256 = vadd.f32 0.0, %v1255
      %v1257 = vpop.f32.mrb[0].mxu0
      %1258 = vmatprep.mubr.bf16.mxu0 0
      %1259 = vmatmul.mubr.bf16.gmra.mrb[0].mxu0 %v1085
      %v1260 = vpop.f32.mrb[0].mxu0
      %v1261 = vadd.f32 0.0, %v1260
      %v1262 = vpop.f32.mrb[0].mxu0
      %v1263 = vpop.f32.mrb[0].mxu0
      %v1264 = vadd.f32 0.0, %v1263
      %v1265 = vpop.f32.mrb[0].mxu0
      %1266 = vdwg.mxu0
      %v1267 = vadd.f32 %v847, %v1125
      %v1268 = vadd.f32 %v850, %v1128
      %v1269 = vadd.f32 %v855, %v1133
      %v1270 = vadd.f32 %v858, %v1136
      %v1271 = vadd.f32 %v863, %v1141
      %v1272 = vadd.f32 %v866, %v1144
      %v1273 = vadd.f32 %v871, %v1149
      %v1274 = vadd.f32 %v874, %v1152
      %v1275 = vadd.f32 %v879, %v1157
      %v1276 = vadd.f32 %v882, %v1160
      %v1277 = vadd.f32 %v887, %v1165
      %v1278 = vadd.f32 %v890, %v1168
      %v1279 = vadd.f32 %v895, %v1173
      %v1280 = vadd.f32 %v898, %v1176
      %v1281 = vadd.f32 %v903, %v1181
      %v1282 = vadd.f32 %v906, %v1184
      %v1283 = vadd.f32 %v911, %v1189
      %v1284 = vadd.f32 %v914, %v1192
      %v1285 = vadd.f32 %v919, %v1197
      %v1286 = vadd.f32 %v922, %v1200
      %v1287 = vadd.f32 %v927, %v1205
      %v1288 = vadd.f32 %v930, %v1208
      %v1289 = vadd.f32 %v935, %v1213
      %v1290 = vadd.f32 %v938, %v1216
      %v1291 = vadd.f32 %v943, %v1221
      %v1292 = vadd.f32 %v946, %v1224
      %v1293 = vadd.f32 %v951, %v1229
      %v1294 = vadd.f32 %v954, %v1232
      %v1295 = vadd.f32 %v959, %v1237
      %v1296 = vadd.f32 %v962, %v1240
      %v1297 = vadd.f32 %v967, %v1245
      %v1298 = vadd.f32 %v970, %v1248
      %v1299 = vadd.f32 %v975, %v1253
      %v1300 = vadd.f32 %v978, %v1256
      %v1301 = vadd.f32 %v983, %v1261
      %v1302 = vadd.f32 %v986, %v1264
      %v1303 = vld [vmem:[%s234 + $0x8] sm:$0xe]
      %v1304 = vld [vmem:[%s234 + $0xc] sm:$0xf]
      %v1305 = vld [vmem:[%s234 + $0x10] sm:$0xf]
      %v1306 = vld [vmem:[%s234 + $0x14] sm:$0xf]
      %v1307 = vld [vmem:[%s234 + $0x18] sm:$0xf]
      %v1308 = vld [vmem:[%s234 + $0x1c] sm:$0xf]
      %v1309 = vld [vmem:[%s234 + $0x20] sm:$0xf]
      %v1310 = vld [vmem:[%s234 + $0x24] sm:$0xf]
      %v1311 = vld [vmem:[%s234 + $0x28] sm:$0xf]
      %v1312 = vld [vmem:[%s234 + $0x2c] sm:$0xf]
      %v1313 = vld [vmem:[%s234 + $0x30] sm:$0xf]
      %v1314 = vld [vmem:[%s234 + $0x34] sm:$0xf]
      %v1315 = vld [vmem:[%s234 + $0x38] sm:$0xf]
      %v1316 = vld [vmem:[%s234 + $0x3c] sm:$0xf]
      %v1317 = vld [vmem:[%s234 + $0x40] sm:$0xf]
      %v1318 = vld [vmem:[%s234 + $0x44] sm:$0xf]
      %v1319 = vld [vmem:[%s234 + $0x48] sm:$0xf]
      %v1320 = vld [vmem:[%s234 + $0x4c] sm:$0xf]
      %v1321 = vld [vmem:[%s234 + $0x50] sm:$0xf]
      %v1322 = vld [vmem:[%s234 + $0x54] sm:$0xf]
      %v1323 = vld [vmem:[%s234 + $0x58] sm:$0xf]
      %v1324 = vld [vmem:[%s234 + $0x5c] sm:$0xf]
      %v1325 = vld [vmem:[%s234 + $0x60] sm:$0xf]
      %v1326 = vld [vmem:[%s234 + $0x64] sm:$0xf]
      %v1327 = vld [vmem:[%s234 + $0x68] sm:$0xf]
      %v1328 = vld [vmem:[%s234 + $0x6c] sm:$0xf]
      %v1329 = vld [vmem:[%s234 + $0x70] sm:$0xf]
      %v1330 = vld [vmem:[%s234 + $0x74] sm:$0xf]
      %v1331 = vld [vmem:[%s234 + $0x78] sm:$0xf]
      %v1332 = vld [vmem:[%s234 + $0x7c] sm:$0xf]
      %v1333 = vld [vmem:[%s234 + $0x80] sm:$0xf]
      %v1334 = vld [vmem:[%s234 + $0x84] sm:$0xf]
      %v1335 = vld [vmem:[%s234 + $0x88] sm:$0xf]
      %v1336 = vld [vmem:[%s234 + $0x8c] sm:$0xf]
      %v1337 = vld [vmem:[%s234 + $0x90] sm:$0xf]
      %v1338 = vld [vmem:[%s234 + $0x94] sm:$0xf]
      %v1339 = vld [vmem:[%s234 + $0x98] sm:$0x1]
      %s1340 = scalar_lea.vmem %s238, 6
      %v1341 = vld [vmem:[%s1340] sm:$0x3]
      %v1379 = vunpack.c.l.b16 %v1303
      %v1380 = vunpack.c.l.b16 %v1304
      %v1381 = vunpack.c.l.b16 %v1305
      %v1382 = vunpack.c.l.b16 %v1306
      %v1383 = vunpack.c.l.b16 %v1307
      %v1384 = vunpack.c.l.b16 %v1308
      %v1385 = vunpack.c.l.b16 %v1309
      %v1386 = vunpack.c.l.b16 %v1310
      %v1387 = vunpack.c.l.b16 %v1311
      %v1388 = vunpack.c.l.b16 %v1312
      %v1389 = vunpack.c.l.b16 %v1313
      %v1390 = vunpack.c.l.b16 %v1314
      %v1391 = vunpack.c.l.b16 %v1315
      %v1392 = vunpack.c.l.b16 %v1316
      %v1393 = vunpack.c.l.b16 %v1317
      %v1394 = vunpack.c.l.b16 %v1318
      %v1395 = vunpack.c.l.b16 %v1319
      %v1396 = vunpack.c.l.b16 %v1320
      %v1397 = vunpack.c.l.b16 %v1321
      %v1398 = vunpack.c.l.b16 %v1322
      %v1399 = vunpack.c.l.b16 %v1323
      %v1400 = vunpack.c.l.b16 %v1324
      %v1401 = vunpack.c.l.b16 %v1325
      %v1402 = vunpack.c.l.b16 %v1326
      %v1403 = vunpack.c.l.b16 %v1327
      %v1404 = vunpack.c.l.b16 %v1328
      %v1405 = vunpack.c.l.b16 %v1329
      %v1406 = vunpack.c.l.b16 %v1330
      %v1407 = vunpack.c.l.b16 %v1331
      %v1408 = vunpack.c.l.b16 %v1332
      %v1409 = vunpack.c.l.b16 %v1333
      %v1410 = vunpack.c.l.b16 %v1334
      %v1411 = vunpack.c.l.b16 %v1335
      %v1412 = vunpack.c.l.b16 %v1336
      %v1413 = vunpack.c.l.b16 %v1337
      %v1414 = vunpack.c.l.b16 %v1338
      %v1415 = vunpack.c.l.b16 %v1339
      %v1416 = vpack.c.b16 %v1380, %v1379
      %v1417 = vpack.c.b16 %v1382, %v1381
      %v1418 = vpack.c.b16 %v1384, %v1383
      %v1419 = vpack.c.b16 %v1386, %v1385
      %v1420 = vpack.c.b16 %v1388, %v1387
      %v1421 = vpack.c.b16 %v1390, %v1389
      %v1422 = vpack.c.b16 %v1392, %v1391
      %v1423 = vpack.c.b16 %v1394, %v1393
      %v1424 = vpack.c.b16 %v1396, %v1395
      %v1425 = vpack.c.b16 %v1398, %v1397
      %v1426 = vpack.c.b16 %v1400, %v1399
      %v1427 = vpack.c.b16 %v1402, %v1401
      %v1428 = vpack.c.b16 %v1404, %v1403
      %v1429 = vpack.c.b16 %v1406, %v1405
      %v1430 = vpack.c.b16 %v1408, %v1407
      %v1431 = vpack.c.b16 %v1410, %v1409
      %v1432 = vpack.c.b16 %v1412, %v1411
      %v1433 = vpack.c.b16 %v1414, %v1413
      %v1434 = vpack.c.b16 %v1415, %v1415
      %v1435 = vrot.slane %v1416, 1
      %v1436 = vrot.slane %v1417, 1
      %v1437 = vsel %vm995, %v1435, %v1436
      %v1438 = vrot.slane %v1418, 1
      %v1439 = vsel %vm995, %v1436, %v1438
      %v1440 = vrot.slane %v1419, 1
      %v1441 = vsel %vm995, %v1438, %v1440
      %v1442 = vrot.slane %v1420, 1
      %v1443 = vsel %vm995, %v1440, %v1442
      %v1444 = vrot.slane %v1421, 1
      %v1445 = vsel %vm995, %v1442, %v1444
      %v1446 = vrot.slane %v1422, 1
      %v1447 = vsel %vm995, %v1444, %v1446
      %v1448 = vrot.slane %v1423, 1
      %v1449 = vsel %vm995, %v1446, %v1448
      %v1450 = vrot.slane %v1424, 1
      %v1451 = vsel %vm995, %v1448, %v1450
      %v1452 = vrot.slane %v1425, 1
      %v1453 = vsel %vm995, %v1450, %v1452
      %v1454 = vrot.slane %v1426, 1
      %v1455 = vsel %vm995, %v1452, %v1454
      %v1456 = vrot.slane %v1427, 1
      %v1457 = vsel %vm995, %v1454, %v1456
      %v1458 = vrot.slane %v1428, 1
      %v1459 = vsel %vm995, %v1456, %v1458
      %v1460 = vrot.slane %v1429, 1
      %v1461 = vsel %vm995, %v1458, %v1460
      %v1462 = vrot.slane %v1430, 1
      %v1463 = vsel %vm995, %v1460, %v1462
      %v1464 = vrot.slane %v1431, 1
      %v1465 = vsel %vm995, %v1462, %v1464
      %v1466 = vrot.slane %v1432, 1
      %v1467 = vsel %vm995, %v1464, %v1466
      %v1468 = vrot.slane %v1433, 1
      %v1469 = vsel %vm995, %v1466, %v1468
      %v1470 = vrot.slane %v1434, 1
      %v1471 = vsel %vm995, %v1468, %v1470
      %v1473 = vsel %vm537, %v1437, 0
      %v1476 = vsel %vm537, %v1439, 0
      %v1479 = vsel %vm537, %v1441, 0
      %v1482 = vsel %vm537, %v1443, 0
      %v1485 = vsel %vm537, %v1445, 0
      %v1488 = vsel %vm537, %v1447, 0
      %v1491 = vsel %vm537, %v1449, 0
      %v1494 = vsel %vm537, %v1451, 0
      %v1497 = vsel %vm537, %v1453, 0
      %v1500 = vsel %vm537, %v1455, 0
      %v1503 = vsel %vm537, %v1457, 0
      %v1506 = vsel %vm537, %v1459, 0
      %v1509 = vsel %vm537, %v1461, 0
      %v1512 = vsel %vm537, %v1463, 0
      %v1515 = vsel %vm537, %v1465, 0
      %v1518 = vsel %vm537, %v1467, 0
      %v1521 = vsel %vm537, %v1469, 0
      %v1524 = vsel %vm537, %v1471, 0
      %v1527 = vsel %vm592, %v1341, 0
      %1529 = vmatprep.subr.bf16.mxu0 0
      %1530 = vmatpush1.bf16.msra.mxu0 %v1527
      %1531 = vmatprep.subr.bf16.mxu0 0
      %1532 = vmatpush1.bf16.msra.mxu0 0
      %1533 = vmatprep.subr.bf16.mxu0 0
      %1534 = vmatpush1.bf16.msra.mxu0 0
      %1535 = vmatprep.subr.bf16.mxu0 0
      %1536 = vmatpush1.bf16.msra.mxu0 0
      %1537 = vmatprep.subr.bf16.mxu0 0
      %1538 = vmatpush1.bf16.msra.mxu0 0
      %1539 = vmatprep.subr.bf16.mxu0 0
      %1540 = vmatpush1.bf16.msra.mxu0 0
      %1541 = vmatprep.subr.bf16.mxu0 0
      %1542 = vmatpush1.bf16.msra.mxu0 0
      %1543 = vmatprep.subr.bf16.mxu0 0
      %1544 = vmatpush1.bf16.msra.mxu0 0
      %1545 = vmatprep.subr.bf16.mxu0 0
      %1546 = vmatpush1.bf16.msra.mxu0 0
      %1547 = vmatprep.subr.bf16.mxu0 0
      %1548 = vmatpush1.bf16.msra.mxu0 0
      %1549 = vmatprep.subr.bf16.mxu0 0
      %1550 = vmatpush1.bf16.msra.mxu0 0
      %1551 = vmatprep.subr.bf16.mxu0 0
      %1552 = vmatpush1.bf16.msra.mxu0 0
      %1553 = vmatprep.subr.bf16.mxu0 0
      %1554 = vmatpush1.bf16.msra.mxu0 0
      %1555 = vmatprep.subr.bf16.mxu0 0
      %1556 = vmatpush1.bf16.msra.mxu0 0
      %1557 = vmatprep.subr.bf16.mxu0 0
      %1558 = vmatpush1.bf16.msra.mxu0 0
      %1559 = vmatprep.subr.bf16.mxu0 0
      %1560 = vmatpush1.bf16.msra.mxu0 0
      %1561 = vmatprep.mubr.bf16.mxu0 0
      %1562 = vmatmul.mubr.bf16.gmra.mrb[0].mxu0 %v1473
      %v1563 = vpop.f32.mrb[0].mxu0
      %v1564 = vadd.f32 0.0, %v1563
      %v1565 = vpop.f32.mrb[0].mxu0
      %v1566 = vpop.f32.mrb[0].mxu0
      %v1567 = vadd.f32 0.0, %v1566
      %v1568 = vpop.f32.mrb[0].mxu0
      %1569 = vmatprep.mubr.bf16.mxu0 0
      %1570 = vmatmul.mubr.bf16.gmra.mrb[0].mxu0 %v1476
      %v1571 = vpop.f32.mrb[0].mxu0
      %v1572 = vadd.f32 0.0, %v1571
      %v1573 = vpop.f32.mrb[0].mxu0
      %v1574 = vpop.f32.mrb[0].mxu0
      %v1575 = vadd.f32 0.0, %v1574
      %v1576 = vpop.f32.mrb[0].mxu0
      %1577 = vmatprep.mubr.bf16.mxu0 0
      %1578 = vmatmul.mubr.bf16.gmra.mrb[0].mxu0 %v1479
      %v1579 = vpop.f32.mrb[0].mxu0
      %v1580 = vadd.f32 0.0, %v1579
      %v1581 = vpop.f32.mrb[0].mxu0
      %v1582 = vpop.f32.mrb[0].mxu0
      %v1583 = vadd.f32 0.0, %v1582
      %v1584 = vpop.f32.mrb[0].mxu0
      %1585 = vmatprep.mubr.bf16.mxu0 0
      %1586 = vmatmul.mubr.bf16.gmra.mrb[0].mxu0 %v1482
      %v1587 = vpop.f32.mrb[0].mxu0
      %v1588 = vadd.f32 0.0, %v1587
      %v1589 = vpop.f32.mrb[0].mxu0
      %v1590 = vpop.f32.mrb[0].mxu0
      %v1591 = vadd.f32 0.0, %v1590
      %v1592 = vpop.f32.mrb[0].mxu0
      %1593 = vmatprep.mubr.bf16.mxu0 0
      %1594 = vmatmul.mubr.bf16.gmra.mrb[0].mxu0 %v1485
      %v1595 = vpop.f32.mrb[0].mxu0
      %v1596 = vadd.f32 0.0, %v1595
      %v1597 = vpop.f32.mrb[0].mxu0
      %v1598 = vpop.f32.mrb[0].mxu0
      %v1599 = vadd.f32 0.0, %v1598
      %v1600 = vpop.f32.mrb[0].mxu0
      %1601 = vmatprep.mubr.bf16.mxu0 0
      %1602 = vmatmul.mubr.bf16.gmra.mrb[0].mxu0 %v1488
      %v1603 = vpop.f32.mrb[0].mxu0
      %v1604 = vadd.f32 0.0, %v1603
      %v1605 = vpop.f32.mrb[0].mxu0
      %v1606 = vpop.f32.mrb[0].mxu0
      %v1607 = vadd.f32 0.0, %v1606
      %v1608 = vpop.f32.mrb[0].mxu0
      %1609 = vmatprep.mubr.bf16.mxu0 0
      %1610 = vmatmul.mubr.bf16.gmra.mrb[0].mxu0 %v1491
      %v1611 = vpop.f32.mrb[0].mxu0
      %v1612 = vadd.f32 0.0, %v1611
      %v1613 = vpop.f32.mrb[0].mxu0
      %v1614 = vpop.f32.mrb[0].mxu0
      %v1615 = vadd.f32 0.0, %v1614
      %v1616 = vpop.f32.mrb[0].mxu0
      %1617 = vmatprep.mubr.bf16.mxu0 0
      %1618 = vmatmul.mubr.bf16.gmra.mrb[0].mxu0 %v1494
      %v1619 = vpop.f32.mrb[0].mxu0
      %v1620 = vadd.f32 0.0, %v1619
      %v1621 = vpop.f32.mrb[0].mxu0
      %v1622 = vpop.f32.mrb[0].mxu0
      %v1623 = vadd.f32 0.0, %v1622
      %v1624 = vpop.f32.mrb[0].mxu0
      %1625 = vmatprep.mubr.bf16.mxu0 0
      %1626 = vmatmul.mubr.bf16.gmra.mrb[0].mxu0 %v1497
      %v1627 = vpop.f32.mrb[0].mxu0
      %v1628 = vadd.f32 0.0, %v1627
      %v1629 = vpop.f32.mrb[0].mxu0
      %v1630 = vpop.f32.mrb[0].mxu0
      %v1631 = vadd.f32 0.0, %v1630
      %v1632 = vpop.f32.mrb[0].mxu0
      %1633 = vmatprep.mubr.bf16.mxu0 0
      %1634 = vmatmul.mubr.bf16.gmra.mrb[0].mxu0 %v1500
      %v1635 = vpop.f32.mrb[0].mxu0
      %v1636 = vadd.f32 0.0, %v1635
      %v1637 = vpop.f32.mrb[0].mxu0
      %v1638 = vpop.f32.mrb[0].mxu0
      %v1639 = vadd.f32 0.0, %v1638
      %v1640 = vpop.f32.mrb[0].mxu0
      %1641 = vmatprep.mubr.bf16.mxu0 0
      %1642 = vmatmul.mubr.bf16.gmra.mrb[0].mxu0 %v1503
      %v1643 = vpop.f32.mrb[0].mxu0
      %v1644 = vadd.f32 0.0, %v1643
      %v1645 = vpop.f32.mrb[0].mxu0
      %v1646 = vpop.f32.mrb[0].mxu0
      %v1647 = vadd.f32 0.0, %v1646
      %v1648 = vpop.f32.mrb[0].mxu0
      %1649 = vmatprep.mubr.bf16.mxu0 0
      %1650 = vmatmul.mubr.bf16.gmra.mrb[0].mxu0 %v1506
      %v1651 = vpop.f32.mrb[0].mxu0
      %v1652 = vadd.f32 0.0, %v1651
      %v1653 = vpop.f32.mrb[0].mxu0
      %v1654 = vpop.f32.mrb[0].mxu0
      %v1655 = vadd.f32 0.0, %v1654
      %v1656 = vpop.f32.mrb[0].mxu0
      %1657 = vmatprep.mubr.bf16.mxu0 0
      %1658 = vmatmul.mubr.bf16.gmra.mrb[0].mxu0 %v1509
      %v1659 = vpop.f32.mrb[0].mxu0
      %v1660 = vadd.f32 0.0, %v1659
      %v1661 = vpop.f32.mrb[0].mxu0
      %v1662 = vpop.f32.mrb[0].mxu0
      %v1663 = vadd.f32 0.0, %v1662
      %v1664 = vpop.f32.mrb[0].mxu0
      %1665 = vmatprep.mubr.bf16.mxu0 0
      %1666 = vmatmul.mubr.bf16.gmra.mrb[0].mxu0 %v1512
      %v1667 = vpop.f32.mrb[0].mxu0
      %v1668 = vadd.f32 0.0, %v1667
      %v1669 = vpop.f32.mrb[0].mxu0
      %v1670 = vpop.f32.mrb[0].mxu0
      %v1671 = vadd.f32 0.0, %v1670
      %v1672 = vpop.f32.mrb[0].mxu0
      %1673 = vmatprep.mubr.bf16.mxu0 0
      %1674 = vmatmul.mubr.bf16.gmra.mrb[0].mxu0 %v1515
      %v1675 = vpop.f32.mrb[0].mxu0
      %v1676 = vadd.f32 0.0, %v1675
      %v1677 = vpop.f32.mrb[0].mxu0
      %v1678 = vpop.f32.mrb[0].mxu0
      %v1679 = vadd.f32 0.0, %v1678
      %v1680 = vpop.f32.mrb[0].mxu0
      %1681 = vmatprep.mubr.bf16.mxu0 0
      %1682 = vmatmul.mubr.bf16.gmra.mrb[0].mxu0 %v1518
      %v1683 = vpop.f32.mrb[0].mxu0
      %v1684 = vadd.f32 0.0, %v1683
      %v1685 = vpop.f32.mrb[0].mxu0
      %v1686 = vpop.f32.mrb[0].mxu0
      %v1687 = vadd.f32 0.0, %v1686
      %v1688 = vpop.f32.mrb[0].mxu0
      %1689 = vmatprep.mubr.bf16.mxu0 0
      %1690 = vmatmul.mubr.bf16.gmra.mrb[0].mxu0 %v1521
      %v1691 = vpop.f32.mrb[0].mxu0
      %v1692 = vadd.f32 0.0, %v1691
      %v1693 = vpop.f32.mrb[0].mxu0
      %v1694 = vpop.f32.mrb[0].mxu0
      %v1695 = vadd.f32 0.0, %v1694
      %v1696 = vpop.f32.mrb[0].mxu0
      %1697 = vmatprep.mubr.bf16.mxu0 0
      %1698 = vmatmul.mubr.bf16.gmra.mrb[0].mxu0 %v1524
      %v1699 = vpop.f32.mrb[0].mxu0
      %v1700 = vadd.f32 0.0, %v1699
      %v1701 = vpop.f32.mrb[0].mxu0
      %v1702 = vpop.f32.mrb[0].mxu0
      %v1703 = vadd.f32 0.0, %v1702
      %v1704 = vpop.f32.mrb[0].mxu0
      %1705 = vdwg.mxu0
      %v1706 = vadd.f32 %v1267, %v1564
      %v1707 = vadd.f32 %v1268, %v1567
      %v1708 = vadd.f32 %v1269, %v1572
      %v1709 = vadd.f32 %v1270, %v1575
      %v1710 = vadd.f32 %v1271, %v1580
      %v1711 = vadd.f32 %v1272, %v1583
      %v1712 = vadd.f32 %v1273, %v1588
      %v1713 = vadd.f32 %v1274, %v1591
      %v1714 = vadd.f32 %v1275, %v1596
      %v1715 = vadd.f32 %v1276, %v1599
      %v1716 = vadd.f32 %v1277, %v1604
      %v1717 = vadd.f32 %v1278, %v1607
      %v1718 = vadd.f32 %v1279, %v1612
      %v1719 = vadd.f32 %v1280, %v1615
      %v1720 = vadd.f32 %v1281, %v1620
      %v1721 = vadd.f32 %v1282, %v1623
      %v1722 = vadd.f32 %v1283, %v1628
      %v1723 = vadd.f32 %v1284, %v1631
      %v1724 = vadd.f32 %v1285, %v1636
      %v1725 = vadd.f32 %v1286, %v1639
      %v1726 = vadd.f32 %v1287, %v1644
      %v1727 = vadd.f32 %v1288, %v1647
      %v1728 = vadd.f32 %v1289, %v1652
      %v1729 = vadd.f32 %v1290, %v1655
      %v1730 = vadd.f32 %v1291, %v1660
      %v1731 = vadd.f32 %v1292, %v1663
      %v1732 = vadd.f32 %v1293, %v1668
      %v1733 = vadd.f32 %v1294, %v1671
      %v1734 = vadd.f32 %v1295, %v1676
      %v1735 = vadd.f32 %v1296, %v1679
      %v1736 = vadd.f32 %v1297, %v1684
      %v1737 = vadd.f32 %v1298, %v1687
      %v1738 = vadd.f32 %v1299, %v1692
      %v1739 = vadd.f32 %v1300, %v1695
      %v1740 = vadd.f32 %v1301, %v1700
      %v1741 = vadd.f32 %v1302, %v1703
      %v1742 = vld [vmem:[%s234 + $0x98] sm:$0x3]
      %s1743 = scalar_lea.vmem %s238, 8
      %v1744 = vld [vmem:[%s1743] sm:$0x3]
      %v1746 = vunpack.c.l.b16 %v1742
      %v1747 = vpack.c.b16 %v1746, %v1746
      %vm1748 = vsmask.f32 6400
      %v1750 = vshrl.u32 %v1416, 16
      %v1752 = vrot.slane %v1750, 1
      %v1753 = vshll.u32 %v1416, 16
      %v1755 = vrot.slane %v1753, 2
      %v1756 = vor.u32 %v1752, %v1755
      %v1758 = vshrl.u32 %v1417, 16
      %v1760 = vrot.slane %v1758, 1
      %v1761 = vshll.u32 %v1417, 16
      %v1763 = vrot.slane %v1761, 2
      %v1764 = vor.u32 %v1760, %v1763
      %v1765 = vsel %vm1748, %v1756, %v1764
      %v1767 = vshrl.u32 %v1418, 16
      %v1769 = vrot.slane %v1767, 1
      %v1770 = vshll.u32 %v1418, 16
      %v1772 = vrot.slane %v1770, 2
      %v1773 = vor.u32 %v1769, %v1772
      %v1774 = vsel %vm1748, %v1764, %v1773
      %v1776 = vshrl.u32 %v1419, 16
      %v1778 = vrot.slane %v1776, 1
      %v1779 = vshll.u32 %v1419, 16
      %v1781 = vrot.slane %v1779, 2
      %v1782 = vor.u32 %v1778, %v1781
      %v1783 = vsel %vm1748, %v1773, %v1782
      %v1785 = vshrl.u32 %v1420, 16
      %v1787 = vrot.slane %v1785, 1
      %v1788 = vshll.u32 %v1420, 16
      %v1790 = vrot.slane %v1788, 2
      %v1791 = vor.u32 %v1787, %v1790
      %v1792 = vsel %vm1748, %v1782, %v1791
      %v1794 = vshrl.u32 %v1421, 16
      %v1796 = vrot.slane %v1794, 1
      %v1797 = vshll.u32 %v1421, 16
      %v1799 = vrot.slane %v1797, 2
      %v1800 = vor.u32 %v1796, %v1799
      %v1801 = vsel %vm1748, %v1791, %v1800
      %v1803 = vshrl.u32 %v1422, 16
      %v1805 = vrot.slane %v1803, 1
      %v1806 = vshll.u32 %v1422, 16
      %v1808 = vrot.slane %v1806, 2
      %v1809 = vor.u32 %v1805, %v1808
      %v1810 = vsel %vm1748, %v1800, %v1809
      %v1812 = vshrl.u32 %v1423, 16
      %v1814 = vrot.slane %v1812, 1
      %v1815 = vshll.u32 %v1423, 16
      %v1817 = vrot.slane %v1815, 2
      %v1818 = vor.u32 %v1814, %v1817
      %v1819 = vsel %vm1748, %v1809, %v1818
      %v1821 = vshrl.u32 %v1424, 16
      %v1823 = vrot.slane %v1821, 1
      %v1824 = vshll.u32 %v1424, 16
      %v1826 = vrot.slane %v1824, 2
      %v1827 = vor.u32 %v1823, %v1826
      %v1828 = vsel %vm1748, %v1818, %v1827
      %v1830 = vshrl.u32 %v1425, 16
      %v1832 = vrot.slane %v1830, 1
      %v1833 = vshll.u32 %v1425, 16
      %v1835 = vrot.slane %v1833, 2
      %v1836 = vor.u32 %v1832, %v1835
      %v1837 = vsel %vm1748, %v1827, %v1836
      %v1839 = vshrl.u32 %v1426, 16
      %v1841 = vrot.slane %v1839, 1
      %v1842 = vshll.u32 %v1426, 16
      %v1844 = vrot.slane %v1842, 2
      %v1845 = vor.u32 %v1841, %v1844
      %v1846 = vsel %vm1748, %v1836, %v1845
      %v1848 = vshrl.u32 %v1427, 16
      %v1850 = vrot.slane %v1848, 1
      %v1851 = vshll.u32 %v1427, 16
      %v1853 = vrot.slane %v1851, 2
      %v1854 = vor.u32 %v1850, %v1853
      %v1855 = vsel %vm1748, %v1845, %v1854
      %v1857 = vshrl.u32 %v1428, 16
      %v1859 = vrot.slane %v1857, 1
      %v1860 = vshll.u32 %v1428, 16
      %v1862 = vrot.slane %v1860, 2
      %v1863 = vor.u32 %v1859, %v1862
      %v1864 = vsel %vm1748, %v1854, %v1863
      %v1866 = vshrl.u32 %v1429, 16
      %v1868 = vrot.slane %v1866, 1
      %v1869 = vshll.u32 %v1429, 16
      %v1871 = vrot.slane %v1869, 2
      %v1872 = vor.u32 %v1868, %v1871
      %v1873 = vsel %vm1748, %v1863, %v1872
      %v1875 = vshrl.u32 %v1430, 16
      %v1877 = vrot.slane %v1875, 1
      %v1878 = vshll.u32 %v1430, 16
      %v1880 = vrot.slane %v1878, 2
      %v1881 = vor.u32 %v1877, %v1880
      %v1882 = vsel %vm1748, %v1872, %v1881
      %v1884 = vshrl.u32 %v1431, 16
      %v1886 = vrot.slane %v1884, 1
      %v1887 = vshll.u32 %v1431, 16
      %v1889 = vrot.slane %v1887, 2
      %v1890 = vor.u32 %v1886, %v1889
      %v1891 = vsel %vm1748, %v1881, %v1890
      %v1893 = vshrl.u32 %v1432, 16
      %v1895 = vrot.slane %v1893, 1
      %v1896 = vshll.u32 %v1432, 16
      %v1898 = vrot.slane %v1896, 2
      %v1899 = vor.u32 %v1895, %v1898
      %v1900 = vsel %vm1748, %v1890, %v1899
      %v1902 = vshrl.u32 %v1433, 16
      %v1904 = vrot.slane %v1902, 1
      %v1905 = vshll.u32 %v1433, 16
      %v1907 = vrot.slane %v1905, 2
      %v1908 = vor.u32 %v1904, %v1907
      %v1909 = vsel %vm1748, %v1899, %v1908
      %v1911 = vshrl.u32 %v1747, 16
      %v1913 = vrot.slane %v1911, 1
      %v1914 = vshll.u32 %v1747, 16
      %v1916 = vrot.slane %v1914, 2
      %v1917 = vor.u32 %v1913, %v1916
      %v1918 = vsel %vm1748, %v1908, %v1917
      %v1920 = vsel %vm537, %v1765, 0
      %v1923 = vsel %vm537, %v1774, 0
      %v1926 = vsel %vm537, %v1783, 0
      %v1929 = vsel %vm537, %v1792, 0
      %v1932 = vsel %vm537, %v1801, 0
      %v1935 = vsel %vm537, %v1810, 0
      %v1938 = vsel %vm537, %v1819, 0
      %v1941 = vsel %vm537, %v1828, 0
      %v1944 = vsel %vm537, %v1837, 0
      %v1947 = vsel %vm537, %v1846, 0
      %v1950 = vsel %vm537, %v1855, 0
      %v1953 = vsel %vm537, %v1864, 0
      %v1956 = vsel %vm537, %v1873, 0
      %v1959 = vsel %vm537, %v1882, 0
      %v1962 = vsel %vm537, %v1891, 0
      %v1965 = vsel %vm537, %v1900, 0
      %v1968 = vsel %vm537, %v1909, 0
      %v1971 = vsel %vm537, %v1918, 0
      %v1974 = vsel %vm592, %v1744, 0
      %1976 = vmatprep.subr.bf16.mxu0 0
      %1977 = vmatpush1.bf16.msra.mxu0 %v1974
      %1978 = vmatprep.subr.bf16.mxu0 0
      %1979 = vmatpush1.bf16.msra.mxu0 0
      %1980 = vmatprep.subr.bf16.mxu0 0
      %1981 = vmatpush1.bf16.msra.mxu0 0
      %1982 = vmatprep.subr.bf16.mxu0 0
      %1983 = vmatpush1.bf16.msra.mxu0 0
      %1984 = vmatprep.subr.bf16.mxu0 0
      %1985 = vmatpush1.bf16.msra.mxu0 0
      %1986 = vmatprep.subr.bf16.mxu0 0
      %1987 = vmatpush1.bf16.msra.mxu0 0
      %1988 = vmatprep.subr.bf16.mxu0 0
      %1989 = vmatpush1.bf16.msra.mxu0 0
      %1990 = vmatprep.subr.bf16.mxu0 0
      %1991 = vmatpush1.bf16.msra.mxu0 0
      %1992 = vmatprep.subr.bf16.mxu0 0
      %1993 = vmatpush1.bf16.msra.mxu0 0
      %1994 = vmatprep.subr.bf16.mxu0 0
      %1995 = vmatpush1.bf16.msra.mxu0 0
      %1996 = vmatprep.subr.bf16.mxu0 0
      %1997 = vmatpush1.bf16.msra.mxu0 0
      %1998 = vmatprep.subr.bf16.mxu0 0
      %1999 = vmatpush1.bf16.msra.mxu0 0
      %2000 = vmatprep.subr.bf16.mxu0 0
      %2001 = vmatpush1.bf16.msra.mxu0 0
      %2002 = vmatprep.subr.bf16.mxu0 0
      %2003 = vmatpush1.bf16.msra.mxu0 0
      %2004 = vmatprep.subr.bf16.mxu0 0
      %2005 = vmatpush1.bf16.msra.mxu0 0
      %2006 = vmatprep.subr.bf16.mxu0 0
      %2007 = vmatpush1.bf16.msra.mxu0 0
      %2008 = vmatprep.mubr.bf16.mxu0 0
      %2009 = vmatmul.mubr.bf16.gmra.mrb[0].mxu0 %v1920
      %v2010 = vpop.f32.mrb[0].mxu0
      %v2011 = vadd.f32 0.0, %v2010
      %v2012 = vpop.f32.mrb[0].mxu0
      %v2013 = vpop.f32.mrb[0].mxu0
      %v2014 = vadd.f32 0.0, %v2013
      %v2015 = vpop.f32.mrb[0].mxu0
      %2016 = vmatprep.mubr.bf16.mxu0 0
      %2017 = vmatmul.mubr.bf16.gmra.mrb[0].mxu0 %v1923
      %v2018 = vpop.f32.mrb[0].mxu0
      %v2019 = vadd.f32 0.0, %v2018
      %v2020 = vpop.f32.mrb[0].mxu0
      %v2021 = vpop.f32.mrb[0].mxu0
      %v2022 = vadd.f32 0.0, %v2021
      %v2023 = vpop.f32.mrb[0].mxu0
      %2024 = vmatprep.mubr.bf16.mxu0 0
      %2025 = vmatmul.mubr.bf16.gmra.mrb[0].mxu0 %v1926
      %v2026 = vpop.f32.mrb[0].mxu0
      %v2027 = vadd.f32 0.0, %v2026
      %v2028 = vpop.f32.mrb[0].mxu0
      %v2029 = vpop.f32.mrb[0].mxu0
      %v2030 = vadd.f32 0.0, %v2029
      %v2031 = vpop.f32.mrb[0].mxu0
      %2032 = vmatprep.mubr.bf16.mxu0 0
      %2033 = vmatmul.mubr.bf16.gmra.mrb[0].mxu0 %v1929
      %v2034 = vpop.f32.mrb[0].mxu0
      %v2035 = vadd.f32 0.0, %v2034
      %v2036 = vpop.f32.mrb[0].mxu0
      %v2037 = vpop.f32.mrb[0].mxu0
      %v2038 = vadd.f32 0.0, %v2037
      %v2039 = vpop.f32.mrb[0].mxu0
      %2040 = vmatprep.mubr.bf16.mxu0 0
      %2041 = vmatmul.mubr.bf16.gmra.mrb[0].mxu0 %v1932
      %v2042 = vpop.f32.mrb[0].mxu0
      %v2043 = vadd.f32 0.0, %v2042
      %v2044 = vpop.f32.mrb[0].mxu0
      %v2045 = vpop.f32.mrb[0].mxu0
      %v2046 = vadd.f32 0.0, %v2045
      %v2047 = vpop.f32.mrb[0].mxu0
      %2048 = vmatprep.mubr.bf16.mxu0 0
      %2049 = vmatmul.mubr.bf16.gmra.mrb[0].mxu0 %v1935
      %v2050 = vpop.f32.mrb[0].mxu0
      %v2051 = vadd.f32 0.0, %v2050
      %v2052 = vpop.f32.mrb[0].mxu0
      %v2053 = vpop.f32.mrb[0].mxu0
      %v2054 = vadd.f32 0.0, %v2053
      %v2055 = vpop.f32.mrb[0].mxu0
      %2056 = vmatprep.mubr.bf16.mxu0 0
      %2057 = vmatmul.mubr.bf16.gmra.mrb[0].mxu0 %v1938
      %v2058 = vpop.f32.mrb[0].mxu0
      %v2059 = vadd.f32 0.0, %v2058
      %v2060 = vpop.f32.mrb[0].mxu0
      %v2061 = vpop.f32.mrb[0].mxu0
      %v2062 = vadd.f32 0.0, %v2061
      %v2063 = vpop.f32.mrb[0].mxu0
      %2064 = vmatprep.mubr.bf16.mxu0 0
      %2065 = vmatmul.mubr.bf16.gmra.mrb[0].mxu0 %v1941
      %v2066 = vpop.f32.mrb[0].mxu0
      %v2067 = vadd.f32 0.0, %v2066
      %v2068 = vpop.f32.mrb[0].mxu0
      %v2069 = vpop.f32.mrb[0].mxu0
      %v2070 = vadd.f32 0.0, %v2069
      %v2071 = vpop.f32.mrb[0].mxu0
      %2072 = vmatprep.mubr.bf16.mxu0 0
      %2073 = vmatmul.mubr.bf16.gmra.mrb[0].mxu0 %v1944
      %v2074 = vpop.f32.mrb[0].mxu0
      %v2075 = vadd.f32 0.0, %v2074
      %v2076 = vpop.f32.mrb[0].mxu0
      %v2077 = vpop.f32.mrb[0].mxu0
      %v2078 = vadd.f32 0.0, %v2077
      %v2079 = vpop.f32.mrb[0].mxu0
      %2080 = vmatprep.mubr.bf16.mxu0 0
      %2081 = vmatmul.mubr.bf16.gmra.mrb[0].mxu0 %v1947
      %v2082 = vpop.f32.mrb[0].mxu0
      %v2083 = vadd.f32 0.0, %v2082
      %v2084 = vpop.f32.mrb[0].mxu0
      %v2085 = vpop.f32.mrb[0].mxu0
      %v2086 = vadd.f32 0.0, %v2085
      %v2087 = vpop.f32.mrb[0].mxu0
      %2088 = vmatprep.mubr.bf16.mxu0 0
      %2089 = vmatmul.mubr.bf16.gmra.mrb[0].mxu0 %v1950
      %v2090 = vpop.f32.mrb[0].mxu0
      %v2091 = vadd.f32 0.0, %v2090
      %v2092 = vpop.f32.mrb[0].mxu0
      %v2093 = vpop.f32.mrb[0].mxu0
      %v2094 = vadd.f32 0.0, %v2093
      %v2095 = vpop.f32.mrb[0].mxu0
      %2096 = vmatprep.mubr.bf16.mxu0 0
      %2097 = vmatmul.mubr.bf16.gmra.mrb[0].mxu0 %v1953
      %v2098 = vpop.f32.mrb[0].mxu0
      %v2099 = vadd.f32 0.0, %v2098
      %v2100 = vpop.f32.mrb[0].mxu0
      %v2101 = vpop.f32.mrb[0].mxu0
      %v2102 = vadd.f32 0.0, %v2101
      %v2103 = vpop.f32.mrb[0].mxu0
      %2104 = vmatprep.mubr.bf16.mxu0 0
      %2105 = vmatmul.mubr.bf16.gmra.mrb[0].mxu0 %v1956
      %v2106 = vpop.f32.mrb[0].mxu0
      %v2107 = vadd.f32 0.0, %v2106
      %v2108 = vpop.f32.mrb[0].mxu0
      %v2109 = vpop.f32.mrb[0].mxu0
      %v2110 = vadd.f32 0.0, %v2109
      %v2111 = vpop.f32.mrb[0].mxu0
      %2112 = vmatprep.mubr.bf16.mxu0 0
      %2113 = vmatmul.mubr.bf16.gmra.mrb[0].mxu0 %v1959
      %v2114 = vpop.f32.mrb[0].mxu0
      %v2115 = vadd.f32 0.0, %v2114
      %v2116 = vpop.f32.mrb[0].mxu0
      %v2117 = vpop.f32.mrb[0].mxu0
      %v2118 = vadd.f32 0.0, %v2117
      %v2119 = vpop.f32.mrb[0].mxu0
      %2120 = vmatprep.mubr.bf16.mxu0 0
      %2121 = vmatmul.mubr.bf16.gmra.mrb[0].mxu0 %v1962
      %v2122 = vpop.f32.mrb[0].mxu0
      %v2123 = vadd.f32 0.0, %v2122
      %v2124 = vpop.f32.mrb[0].mxu0
      %v2125 = vpop.f32.mrb[0].mxu0
      %v2126 = vadd.f32 0.0, %v2125
      %v2127 = vpop.f32.mrb[0].mxu0
      %2128 = vmatprep.mubr.bf16.mxu0 0
      %2129 = vmatmul.mubr.bf16.gmra.mrb[0].mxu0 %v1965
      %v2130 = vpop.f32.mrb[0].mxu0
      %v2131 = vadd.f32 0.0, %v2130
      %v2132 = vpop.f32.mrb[0].mxu0
      %v2133 = vpop.f32.mrb[0].mxu0
      %v2134 = vadd.f32 0.0, %v2133
      %v2135 = vpop.f32.mrb[0].mxu0
      %2136 = vmatprep.mubr.bf16.mxu0 0
      %2137 = vmatmul.mubr.bf16.gmra.mrb[0].mxu0 %v1968
      %v2138 = vpop.f32.mrb[0].mxu0
      %v2139 = vadd.f32 0.0, %v2138
      %v2140 = vpop.f32.mrb[0].mxu0
      %v2141 = vpop.f32.mrb[0].mxu0
      %v2142 = vadd.f32 0.0, %v2141
      %v2143 = vpop.f32.mrb[0].mxu0
      %2144 = vmatprep.mubr.bf16.mxu0 0
      %2145 = vmatmul.mubr.bf16.gmra.mrb[0].mxu0 %v1971
      %v2146 = vpop.f32.mrb[0].mxu0
      %v2147 = vadd.f32 0.0, %v2146
      %v2148 = vpop.f32.mrb[0].mxu0
      %v2149 = vpop.f32.mrb[0].mxu0
      %v2150 = vadd.f32 0.0, %v2149
      %v2151 = vpop.f32.mrb[0].mxu0
      %2152 = vdwg.mxu0
      %v2153 = vadd.f32 %v1706, %v2011
      %v2154 = vadd.f32 %v1707, %v2014
      %v2155 = vadd.f32 %v1708, %v2019
      %v2156 = vadd.f32 %v1709, %v2022
      %v2157 = vadd.f32 %v1710, %v2027
      %v2158 = vadd.f32 %v1711, %v2030
      %v2159 = vadd.f32 %v1712, %v2035
      %v2160 = vadd.f32 %v1713, %v2038
      %v2161 = vadd.f32 %v1714, %v2043
      %v2162 = vadd.f32 %v1715, %v2046
      %v2163 = vadd.f32 %v1716, %v2051
      %v2164 = vadd.f32 %v1717, %v2054
      %v2165 = vadd.f32 %v1718, %v2059
      %v2166 = vadd.f32 %v1719, %v2062
      %v2167 = vadd.f32 %v1720, %v2067
      %v2168 = vadd.f32 %v1721, %v2070
      %v2169 = vadd.f32 %v1722, %v2075
      %v2170 = vadd.f32 %v1723, %v2078
      %v2171 = vadd.f32 %v1724, %v2083
      %v2172 = vadd.f32 %v1725, %v2086
      %v2173 = vadd.f32 %v1726, %v2091
      %v2174 = vadd.f32 %v1727, %v2094
      %v2175 = vadd.f32 %v1728, %v2099
      %v2176 = vadd.f32 %v1729, %v2102
      %v2177 = vadd.f32 %v1730, %v2107
      %v2178 = vadd.f32 %v1731, %v2110
      %v2179 = vadd.f32 %v1732, %v2115
      %v2180 = vadd.f32 %v1733, %v2118
      %v2181 = vadd.f32 %v1734, %v2123
      %v2182 = vadd.f32 %v1735, %v2126
      %v2183 = vadd.f32 %v1736, %v2131
      %v2184 = vadd.f32 %v1737, %v2134
      %v2185 = vadd.f32 %v1738, %v2139
      %v2186 = vadd.f32 %v1739, %v2142
      %v2187 = vadd.f32 %v1740, %v2147
      %v2188 = vadd.f32 %v1741, %v2150
      %v2189 = vld [vmem:[%s234 + $0x8] sm:$0xc]
      %s2190 = scalar_lea.vmem %s238, 10
      %v2191 = vld [vmem:[%s2190] sm:$0x3]
      %v2193 = vunpack.c.l.b16 %v2189
      %v2194 = vpack.c.b16 %v1380, %v2193
      %vm2195 = vcmask 1045504
      %v2196 = vrot.slane %v2194, 2
      %v2197 = vrot.slane %v1417, 2
      %v2198 = vsel %vm2195, %v2196, %v2197
      %v2199 = vrot.slane %v1418, 2
      %v2200 = vsel %vm2195, %v2197, %v2199
      %v2201 = vrot.slane %v1419, 2
      %v2202 = vsel %vm2195, %v2199, %v2201
      %v2203 = vrot.slane %v1420, 2
      %v2204 = vsel %vm2195, %v2201, %v2203
      %v2205 = vrot.slane %v1421, 2
      %v2206 = vsel %vm2195, %v2203, %v2205
      %v2207 = vrot.slane %v1422, 2
      %v2208 = vsel %vm2195, %v2205, %v2207
      %v2209 = vrot.slane %v1423, 2
      %v2210 = vsel %vm2195, %v2207, %v2209
      %v2211 = vrot.slane %v1424, 2
      %v2212 = vsel %vm2195, %v2209, %v2211
      %v2213 = vrot.slane %v1425, 2
      %v2214 = vsel %vm2195, %v2211, %v2213
      %v2215 = vrot.slane %v1426, 2
      %v2216 = vsel %vm2195, %v2213, %v2215
      %v2217 = vrot.slane %v1427, 2
      %v2218 = vsel %vm2195, %v2215, %v2217
      %v2219 = vrot.slane %v1428, 2
      %v2220 = vsel %vm2195, %v2217, %v2219
      %v2221 = vrot.slane %v1429, 2
      %v2222 = vsel %vm2195, %v2219, %v2221
      %v2223 = vrot.slane %v1430, 2
      %v2224 = vsel %vm2195, %v2221, %v2223
      %v2225 = vrot.slane %v1431, 2
      %v2226 = vsel %vm2195, %v2223, %v2225
      %v2227 = vrot.slane %v1432, 2
      %v2228 = vsel %vm2195, %v2225, %v2227
      %v2229 = vrot.slane %v1433, 2
      %v2230 = vsel %vm2195, %v2227, %v2229
      %v2231 = vrot.slane %v1747, 2
      %v2232 = vsel %vm2195, %v2229, %v2231
      %v2234 = vsel %vm537, %v2198, 0
      %v2237 = vsel %vm537, %v2200, 0
      %v2240 = vsel %vm537, %v2202, 0
      %v2243 = vsel %vm537, %v2204, 0
      %v2246 = vsel %vm537, %v2206, 0
      %v2249 = vsel %vm537, %v2208, 0
      %v2252 = vsel %vm537, %v2210, 0
      %v2255 = vsel %vm537, %v2212, 0
      %v2258 = vsel %vm537, %v2214, 0
      %v2261 = vsel %vm537, %v2216, 0
      %v2264 = vsel %vm537, %v2218, 0
      %v2267 = vsel %vm537, %v2220, 0
      %v2270 = vsel %vm537, %v2222, 0
      %v2273 = vsel %vm537, %v2224, 0
      %v2276 = vsel %vm537, %v2226, 0
      %v2279 = vsel %vm537, %v2228, 0
      %v2282 = vsel %vm537, %v2230, 0
      %v2285 = vsel %vm537, %v2232, 0
      %v2288 = vsel %vm592, %v2191, 0
      %2290 = vmatprep.subr.bf16.mxu0 0
      %2291 = vmatpush1.bf16.msra.mxu0 %v2288
      %2292 = vmatprep.subr.bf16.mxu0 0
      %2293 = vmatpush1.bf16.msra.mxu0 0
      %2294 = vmatprep.subr.bf16.mxu0 0
      %2295 = vmatpush1.bf16.msra.mxu0 0
      %2296 = vmatprep.subr.bf16.mxu0 0
      %2297 = vmatpush1.bf16.msra.mxu0 0
      %2298 = vmatprep.subr.bf16.mxu0 0
      %2299 = vmatpush1.bf16.msra.mxu0 0
      %2300 = vmatprep.subr.bf16.mxu0 0
      %2301 = vmatpush1.bf16.msra.mxu0 0
      %2302 = vmatprep.subr.bf16.mxu0 0
      %2303 = vmatpush1.bf16.msra.mxu0 0
      %2304 = vmatprep.subr.bf16.mxu0 0
      %2305 = vmatpush1.bf16.msra.mxu0 0
      %2306 = vmatprep.subr.bf16.mxu0 0
      %2307 = vmatpush1.bf16.msra.mxu0 0
      %2308 = vmatprep.subr.bf16.mxu0 0
      %2309 = vmatpush1.bf16.msra.mxu0 0
      %2310 = vmatprep.subr.bf16.mxu0 0
      %2311 = vmatpush1.bf16.msra.mxu0 0
      %2312 = vmatprep.subr.bf16.mxu0 0
      %2313 = vmatpush1.bf16.msra.mxu0 0
      %2314 = vmatprep.subr.bf16.mxu0 0
      %2315 = vmatpush1.bf16.msra.mxu0 0
      %2316 = vmatprep.subr.bf16.mxu0 0
      %2317 = vmatpush1.bf16.msra.mxu0 0
      %2318 = vmatprep.subr.bf16.mxu0 0
      %2319 = vmatpush1.bf16.msra.mxu0 0
      %2320 = vmatprep.subr.bf16.mxu0 0
      %2321 = vmatpush1.bf16.msra.mxu0 0
      %2322 = vmatprep.mubr.bf16.mxu0 0
      %2323 = vmatmul.mubr.bf16.gmra.mrb[0].mxu0 %v2234
      %v2324 = vpop.f32.mrb[0].mxu0
      %v2325 = vadd.f32 0.0, %v2324
      %v2326 = vpop.f32.mrb[0].mxu0
      %v2327 = vpop.f32.mrb[0].mxu0
      %v2328 = vadd.f32 0.0, %v2327
      %v2329 = vpop.f32.mrb[0].mxu0
      %2330 = vmatprep.mubr.bf16.mxu0 0
      %2331 = vmatmul.mubr.bf16.gmra.mrb[0].mxu0 %v2237
      %v2332 = vpop.f32.mrb[0].mxu0
      %v2333 = vadd.f32 0.0, %v2332
      %v2334 = vpop.f32.mrb[0].mxu0
      %v2335 = vpop.f32.mrb[0].mxu0
      %v2336 = vadd.f32 0.0, %v2335
      %v2337 = vpop.f32.mrb[0].mxu0
      %2338 = vmatprep.mubr.bf16.mxu0 0
      %2339 = vmatmul.mubr.bf16.gmra.mrb[0].mxu0 %v2240
      %v2340 = vpop.f32.mrb[0].mxu0
      %v2341 = vadd.f32 0.0, %v2340
      %v2342 = vpop.f32.mrb[0].mxu0
      %v2343 = vpop.f32.mrb[0].mxu0
      %v2344 = vadd.f32 0.0, %v2343
      %v2345 = vpop.f32.mrb[0].mxu0
      %2346 = vmatprep.mubr.bf16.mxu0 0
      %2347 = vmatmul.mubr.bf16.gmra.mrb[0].mxu0 %v2243
      %v2348 = vpop.f32.mrb[0].mxu0
      %v2349 = vadd.f32 0.0, %v2348
      %v2350 = vpop.f32.mrb[0].mxu0
      %v2351 = vpop.f32.mrb[0].mxu0
      %v2352 = vadd.f32 0.0, %v2351
      %v2353 = vpop.f32.mrb[0].mxu0
      %2354 = vmatprep.mubr.bf16.mxu0 0
      %2355 = vmatmul.mubr.bf16.gmra.mrb[0].mxu0 %v2246
      %v2356 = vpop.f32.mrb[0].mxu0
      %v2357 = vadd.f32 0.0, %v2356
      %v2358 = vpop.f32.mrb[0].mxu0
      %v2359 = vpop.f32.mrb[0].mxu0
      %v2360 = vadd.f32 0.0, %v2359
      %v2361 = vpop.f32.mrb[0].mxu0
      %2362 = vmatprep.mubr.bf16.mxu0 0
      %2363 = vmatmul.mubr.bf16.gmra.mrb[0].mxu0 %v2249
      %v2364 = vpop.f32.mrb[0].mxu0
      %v2365 = vadd.f32 0.0, %v2364
      %v2366 = vpop.f32.mrb[0].mxu0
      %v2367 = vpop.f32.mrb[0].mxu0
      %v2368 = vadd.f32 0.0, %v2367
      %v2369 = vpop.f32.mrb[0].mxu0
      %2370 = vmatprep.mubr.bf16.mxu0 0
      %2371 = vmatmul.mubr.bf16.gmra.mrb[0].mxu0 %v2252
      %v2372 = vpop.f32.mrb[0].mxu0
      %v2373 = vadd.f32 0.0, %v2372
      %v2374 = vpop.f32.mrb[0].mxu0
      %v2375 = vpop.f32.mrb[0].mxu0
      %v2376 = vadd.f32 0.0, %v2375
      %v2377 = vpop.f32.mrb[0].mxu0
      %2378 = vmatprep.mubr.bf16.mxu0 0
      %2379 = vmatmul.mubr.bf16.gmra.mrb[0].mxu0 %v2255
      %v2380 = vpop.f32.mrb[0].mxu0
      %v2381 = vadd.f32 0.0, %v2380
      %v2382 = vpop.f32.mrb[0].mxu0
      %v2383 = vpop.f32.mrb[0].mxu0
      %v2384 = vadd.f32 0.0, %v2383
      %v2385 = vpop.f32.mrb[0].mxu0
      %2386 = vmatprep.mubr.bf16.mxu0 0
      %2387 = vmatmul.mubr.bf16.gmra.mrb[0].mxu0 %v2258
      %v2388 = vpop.f32.mrb[0].mxu0
      %v2389 = vadd.f32 0.0, %v2388
      %v2390 = vpop.f32.mrb[0].mxu0
      %v2391 = vpop.f32.mrb[0].mxu0
      %v2392 = vadd.f32 0.0, %v2391
      %v2393 = vpop.f32.mrb[0].mxu0
      %2394 = vmatprep.mubr.bf16.mxu0 0
      %2395 = vmatmul.mubr.bf16.gmra.mrb[0].mxu0 %v2261
      %v2396 = vpop.f32.mrb[0].mxu0
      %v2397 = vadd.f32 0.0, %v2396
      %v2398 = vpop.f32.mrb[0].mxu0
      %v2399 = vpop.f32.mrb[0].mxu0
      %v2400 = vadd.f32 0.0, %v2399
      %v2401 = vpop.f32.mrb[0].mxu0
      %2402 = vmatprep.mubr.bf16.mxu0 0
      %2403 = vmatmul.mubr.bf16.gmra.mrb[0].mxu0 %v2264
      %v2404 = vpop.f32.mrb[0].mxu0
      %v2405 = vadd.f32 0.0, %v2404
      %v2406 = vpop.f32.mrb[0].mxu0
      %v2407 = vpop.f32.mrb[0].mxu0
      %v2408 = vadd.f32 0.0, %v2407
      %v2409 = vpop.f32.mrb[0].mxu0
      %2410 = vmatprep.mubr.bf16.mxu0 0
      %2411 = vmatmul.mubr.bf16.gmra.mrb[0].mxu0 %v2267
      %v2412 = vpop.f32.mrb[0].mxu0
      %v2413 = vadd.f32 0.0, %v2412
      %v2414 = vpop.f32.mrb[0].mxu0
      %v2415 = vpop.f32.mrb[0].mxu0
      %v2416 = vadd.f32 0.0, %v2415
      %v2417 = vpop.f32.mrb[0].mxu0
      %2418 = vmatprep.mubr.bf16.mxu0 0
      %2419 = vmatmul.mubr.bf16.gmra.mrb[0].mxu0 %v2270
      %v2420 = vpop.f32.mrb[0].mxu0
      %v2421 = vadd.f32 0.0, %v2420
      %v2422 = vpop.f32.mrb[0].mxu0
      %v2423 = vpop.f32.mrb[0].mxu0
      %v2424 = vadd.f32 0.0, %v2423
      %v2425 = vpop.f32.mrb[0].mxu0
      %2426 = vmatprep.mubr.bf16.mxu0 0
      %2427 = vmatmul.mubr.bf16.gmra.mrb[0].mxu0 %v2273
      %v2428 = vpop.f32.mrb[0].mxu0
      %v2429 = vadd.f32 0.0, %v2428
      %v2430 = vpop.f32.mrb[0].mxu0
      %v2431 = vpop.f32.mrb[0].mxu0
      %v2432 = vadd.f32 0.0, %v2431
      %v2433 = vpop.f32.mrb[0].mxu0
      %2434 = vmatprep.mubr.bf16.mxu0 0
      %2435 = vmatmul.mubr.bf16.gmra.mrb[0].mxu0 %v2276
      %v2436 = vpop.f32.mrb[0].mxu0
      %v2437 = vadd.f32 0.0, %v2436
      %v2438 = vpop.f32.mrb[0].mxu0
      %v2439 = vpop.f32.mrb[0].mxu0
      %v2440 = vadd.f32 0.0, %v2439
      %v2441 = vpop.f32.mrb[0].mxu0
      %2442 = vmatprep.mubr.bf16.mxu0 0
      %2443 = vmatmul.mubr.bf16.gmra.mrb[0].mxu0 %v2279
      %v2444 = vpop.f32.mrb[0].mxu0
      %v2445 = vadd.f32 0.0, %v2444
      %v2446 = vpop.f32.mrb[0].mxu0
      %v2447 = vpop.f32.mrb[0].mxu0
      %v2448 = vadd.f32 0.0, %v2447
      %v2449 = vpop.f32.mrb[0].mxu0
      %2450 = vmatprep.mubr.bf16.mxu0 0
      %2451 = vmatmul.mubr.bf16.gmra.mrb[0].mxu0 %v2282
      %v2452 = vpop.f32.mrb[0].mxu0
      %v2453 = vadd.f32 0.0, %v2452
      %v2454 = vpop.f32.mrb[0].mxu0
      %v2455 = vpop.f32.mrb[0].mxu0
      %v2456 = vadd.f32 0.0, %v2455
      %v2457 = vpop.f32.mrb[0].mxu0
      %2458 = vmatprep.mubr.bf16.mxu0 0
      %2459 = vmatmul.mubr.bf16.gmra.mrb[0].mxu0 %v2285
      %v2460 = vpop.f32.mrb[0].mxu0
      %v2461 = vadd.f32 0.0, %v2460
      %v2462 = vpop.f32.mrb[0].mxu0
      %v2463 = vpop.f32.mrb[0].mxu0
      %v2464 = vadd.f32 0.0, %v2463
      %v2465 = vpop.f32.mrb[0].mxu0
      %2466 = vdwg.mxu0
      %v2467 = vadd.f32 %v2153, %v2325
      %v2468 = vadd.f32 %v2154, %v2328
      %v2469 = vadd.f32 %v2155, %v2333
      %v2470 = vadd.f32 %v2156, %v2336
      %v2471 = vadd.f32 %v2157, %v2341
      %v2472 = vadd.f32 %v2158, %v2344
      %v2473 = vadd.f32 %v2159, %v2349
      %v2474 = vadd.f32 %v2160, %v2352
      %v2475 = vadd.f32 %v2161, %v2357
      %v2476 = vadd.f32 %v2162, %v2360
      %v2477 = vadd.f32 %v2163, %v2365
      %v2478 = vadd.f32 %v2164, %v2368
      %v2479 = vadd.f32 %v2165, %v2373
      %v2480 = vadd.f32 %v2166, %v2376
      %v2481 = vadd.f32 %v2167, %v2381
      %v2482 = vadd.f32 %v2168, %v2384
      %v2483 = vadd.f32 %v2169, %v2389
      %v2484 = vadd.f32 %v2170, %v2392
      %v2485 = vadd.f32 %v2171, %v2397
      %v2486 = vadd.f32 %v2172, %v2400
      %v2487 = vadd.f32 %v2173, %v2405
      %v2488 = vadd.f32 %v2174, %v2408
      %v2489 = vadd.f32 %v2175, %v2413
      %v2490 = vadd.f32 %v2176, %v2416
      %v2491 = vadd.f32 %v2177, %v2421
      %v2492 = vadd.f32 %v2178, %v2424
      %v2493 = vadd.f32 %v2179, %v2429
      %v2494 = vadd.f32 %v2180, %v2432
      %v2495 = vadd.f32 %v2181, %v2437
      %v2496 = vadd.f32 %v2182, %v2440
      %v2497 = vadd.f32 %v2183, %v2445
      %v2498 = vadd.f32 %v2184, %v2448
      %v2499 = vadd.f32 %v2185, %v2453
      %v2500 = vadd.f32 %v2186, %v2456
      %v2501 = vadd.f32 %v2187, %v2461
      %v2502 = vadd.f32 %v2188, %v2464
      %v2503 = vld [vmem:[%s234 + $0x10] sm:$0xc]
      %v2504 = vld [vmem:[%s234 + $0x14] sm:$0xf]
      %v2505 = vld [vmem:[%s234 + $0x18] sm:$0xf]
      %v2506 = vld [vmem:[%s234 + $0x1c] sm:$0xf]
      %v2507 = vld [vmem:[%s234 + $0x20] sm:$0xf]
      %v2508 = vld [vmem:[%s234 + $0x24] sm:$0xf]
      %v2509 = vld [vmem:[%s234 + $0x28] sm:$0xf]
      %v2510 = vld [vmem:[%s234 + $0x2c] sm:$0xf]
      %v2511 = vld [vmem:[%s234 + $0x30] sm:$0xf]
      %v2512 = vld [vmem:[%s234 + $0x34] sm:$0xf]
      %v2513 = vld [vmem:[%s234 + $0x38] sm:$0xf]
      %v2514 = vld [vmem:[%s234 + $0x3c] sm:$0xf]
      %v2515 = vld [vmem:[%s234 + $0x40] sm:$0xf]
      %v2516 = vld [vmem:[%s234 + $0x44] sm:$0xf]
      %v2517 = vld [vmem:[%s234 + $0x48] sm:$0xf]
      %v2518 = vld [vmem:[%s234 + $0x4c] sm:$0xf]
      %v2519 = vld [vmem:[%s234 + $0x50] sm:$0xf]
      %v2520 = vld [vmem:[%s234 + $0x54] sm:$0xf]
      %v2521 = vld [vmem:[%s234 + $0x58] sm:$0xf]
      %v2522 = vld [vmem:[%s234 + $0x5c] sm:$0xf]
      %v2523 = vld [vmem:[%s234 + $0x60] sm:$0xf]
      %v2524 = vld [vmem:[%s234 + $0x64] sm:$0xf]
      %v2525 = vld [vmem:[%s234 + $0x68] sm:$0xf]
      %v2526 = vld [vmem:[%s234 + $0x6c] sm:$0xf]
      %v2527 = vld [vmem:[%s234 + $0x70] sm:$0xf]
      %v2528 = vld [vmem:[%s234 + $0x74] sm:$0xf]
      %v2529 = vld [vmem:[%s234 + $0x78] sm:$0xf]
      %v2530 = vld [vmem:[%s234 + $0x7c] sm:$0xf]
      %v2531 = vld [vmem:[%s234 + $0x80] sm:$0xf]
      %v2532 = vld [vmem:[%s234 + $0x84] sm:$0xf]
      %v2533 = vld [vmem:[%s234 + $0x88] sm:$0xf]
      %v2534 = vld [vmem:[%s234 + $0x8c] sm:$0xf]
      %v2535 = vld [vmem:[%s234 + $0x90] sm:$0xf]
      %v2536 = vld [vmem:[%s234 + $0x94] sm:$0xf]
      %v2537 = vld [vmem:[%s234 + $0x98] sm:$0xf]
      %v2538 = vld [vmem:[%s234 + $0x9c] sm:$0xf]
      %v2539 = vld [vmem:[%s234 + $0xa0] sm:$0x3]
      %s2540 = scalar_lea.vmem %s238, 12
      %v2541 = vld [vmem:[%s2540] sm:$0x3]
      %v2579 = vunpack.c.l.b16 %v2503
      %v2580 = vunpack.c.l.b16 %v2504
      %v2581 = vunpack.c.l.b16 %v2505
      %v2582 = vunpack.c.l.b16 %v2506
      %v2583 = vunpack.c.l.b16 %v2507
      %v2584 = vunpack.c.l.b16 %v2508
      %v2585 = vunpack.c.l.b16 %v2509
      %v2586 = vunpack.c.l.b16 %v2510
      %v2587 = vunpack.c.l.b16 %v2511
      %v2588 = vunpack.c.l.b16 %v2512
      %v2589 = vunpack.c.l.b16 %v2513
      %v2590 = vunpack.c.l.b16 %v2514
      %v2591 = vunpack.c.l.b16 %v2515
      %v2592 = vunpack.c.l.b16 %v2516
      %v2593 = vunpack.c.l.b16 %v2517
      %v2594 = vunpack.c.l.b16 %v2518
      %v2595 = vunpack.c.l.b16 %v2519
      %v2596 = vunpack.c.l.b16 %v2520
      %v2597 = vunpack.c.l.b16 %v2521
      %v2598 = vunpack.c.l.b16 %v2522
      %v2599 = vunpack.c.l.b16 %v2523
      %v2600 = vunpack.c.l.b16 %v2524
      %v2601 = vunpack.c.l.b16 %v2525
      %v2602 = vunpack.c.l.b16 %v2526
      %v2603 = vunpack.c.l.b16 %v2527
      %v2604 = vunpack.c.l.b16 %v2528
      %v2605 = vunpack.c.l.b16 %v2529
      %v2606 = vunpack.c.l.b16 %v2530
      %v2607 = vunpack.c.l.b16 %v2531
      %v2608 = vunpack.c.l.b16 %v2532
      %v2609 = vunpack.c.l.b16 %v2533
      %v2610 = vunpack.c.l.b16 %v2534
      %v2611 = vunpack.c.l.b16 %v2535
      %v2612 = vunpack.c.l.b16 %v2536
      %v2613 = vunpack.c.l.b16 %v2537
      %v2614 = vunpack.c.l.b16 %v2538
      %v2615 = vunpack.c.l.b16 %v2539
      %v2616 = vpack.c.b16 %v2580, %v2579
      %v2617 = vpack.c.b16 %v2582, %v2581
      %v2618 = vpack.c.b16 %v2584, %v2583
      %v2619 = vpack.c.b16 %v2586, %v2585
      %v2620 = vpack.c.b16 %v2588, %v2587
      %v2621 = vpack.c.b16 %v2590, %v2589
      %v2622 = vpack.c.b16 %v2592, %v2591
      %v2623 = vpack.c.b16 %v2594, %v2593
      %v2624 = vpack.c.b16 %v2596, %v2595
      %v2625 = vpack.c.b16 %v2598, %v2597
      %v2626 = vpack.c.b16 %v2600, %v2599
      %v2627 = vpack.c.b16 %v2602, %v2601
      %v2628 = vpack.c.b16 %v2604, %v2603
      %v2629 = vpack.c.b16 %v2606, %v2605
      %v2630 = vpack.c.b16 %v2608, %v2607
      %v2631 = vpack.c.b16 %v2610, %v2609
      %v2632 = vpack.c.b16 %v2612, %v2611
      %v2633 = vpack.c.b16 %v2614, %v2613
      %v2634 = vpack.c.b16 %v2615, %v2615
      %v2635 = vrot.slane %v2616, 2
      %v2636 = vrot.slane %v2617, 2
      %v2637 = vsel %vm2195, %v2635, %v2636
      %v2638 = vrot.slane %v2618, 2
      %v2639 = vsel %vm2195, %v2636, %v2638
      %v2640 = vrot.slane %v2619, 2
      %v2641 = vsel %vm2195, %v2638, %v2640
      %v2642 = vrot.slane %v2620, 2
      %v2643 = vsel %vm2195, %v2640, %v2642
      %v2644 = vrot.slane %v2621, 2
      %v2645 = vsel %vm2195, %v2642, %v2644
      %v2646 = vrot.slane %v2622, 2
      %v2647 = vsel %vm2195, %v2644, %v2646
      %v2648 = vrot.slane %v2623, 2
      %v2649 = vsel %vm2195, %v2646, %v2648
      %v2650 = vrot.slane %v2624, 2
      %v2651 = vsel %vm2195, %v2648, %v2650
      %v2652 = vrot.slane %v2625, 2
      %v2653 = vsel %vm2195, %v2650, %v2652
      %v2654 = vrot.slane %v2626, 2
      %v2655 = vsel %vm2195, %v2652, %v2654
      %v2656 = vrot.slane %v2627, 2
      %v2657 = vsel %vm2195, %v2654, %v2656
      %v2658 = vrot.slane %v2628, 2
      %v2659 = vsel %vm2195, %v2656, %v2658
      %v2660 = vrot.slane %v2629, 2
      %v2661 = vsel %vm2195, %v2658, %v2660
      %v2662 = vrot.slane %v2630, 2
      %v2663 = vsel %vm2195, %v2660, %v2662
      %v2664 = vrot.slane %v2631, 2
      %v2665 = vsel %vm2195, %v2662, %v2664
      %v2666 = vrot.slane %v2632, 2
      %v2667 = vsel %vm2195, %v2664, %v2666
      %v2668 = vrot.slane %v2633, 2
      %v2669 = vsel %vm2195, %v2666, %v2668
      %v2670 = vrot.slane %v2634, 2
      %v2671 = vsel %vm2195, %v2668, %v2670
      %v2673 = vsel %vm537, %v2637, 0
      %v2676 = vsel %vm537, %v2639, 0
      %v2679 = vsel %vm537, %v2641, 0
      %v2682 = vsel %vm537, %v2643, 0
      %v2685 = vsel %vm537, %v2645, 0
      %v2688 = vsel %vm537, %v2647, 0
      %v2691 = vsel %vm537, %v2649, 0
      %v2694 = vsel %vm537, %v2651, 0
      %v2697 = vsel %vm537, %v2653, 0
      %v2700 = vsel %vm537, %v2655, 0
      %v2703 = vsel %vm537, %v2657, 0
      %v2706 = vsel %vm537, %v2659, 0
      %v2709 = vsel %vm537, %v2661, 0
      %v2712 = vsel %vm537, %v2663, 0
      %v2715 = vsel %vm537, %v2665, 0
      %v2718 = vsel %vm537, %v2667, 0
      %v2721 = vsel %vm537, %v2669, 0
      %v2724 = vsel %vm537, %v2671, 0
      %v2727 = vsel %vm592, %v2541, 0
      %2729 = vmatprep.subr.bf16.mxu0 0
      %2730 = vmatpush1.bf16.msra.mxu0 %v2727
      %2731 = vmatprep.subr.bf16.mxu0 0
      %2732 = vmatpush1.bf16.msra.mxu0 0
      %2733 = vmatprep.subr.bf16.mxu0 0
      %2734 = vmatpush1.bf16.msra.mxu0 0
      %2735 = vmatprep.subr.bf16.mxu0 0
      %2736 = vmatpush1.bf16.msra.mxu0 0
      %2737 = vmatprep.subr.bf16.mxu0 0
      %2738 = vmatpush1.bf16.msra.mxu0 0
      %2739 = vmatprep.subr.bf16.mxu0 0
      %2740 = vmatpush1.bf16.msra.mxu0 0
      %2741 = vmatprep.subr.bf16.mxu0 0
      %2742 = vmatpush1.bf16.msra.mxu0 0
      %2743 = vmatprep.subr.bf16.mxu0 0
      %2744 = vmatpush1.bf16.msra.mxu0 0
      %2745 = vmatprep.subr.bf16.mxu0 0
      %2746 = vmatpush1.bf16.msra.mxu0 0
      %2747 = vmatprep.subr.bf16.mxu0 0
      %2748 = vmatpush1.bf16.msra.mxu0 0
      %2749 = vmatprep.subr.bf16.mxu0 0
      %2750 = vmatpush1.bf16.msra.mxu0 0
      %2751 = vmatprep.subr.bf16.mxu0 0
      %2752 = vmatpush1.bf16.msra.mxu0 0
      %2753 = vmatprep.subr.bf16.mxu0 0
      %2754 = vmatpush1.bf16.msra.mxu0 0
      %2755 = vmatprep.subr.bf16.mxu0 0
      %2756 = vmatpush1.bf16.msra.mxu0 0
      %2757 = vmatprep.subr.bf16.mxu0 0
      %2758 = vmatpush1.bf16.msra.mxu0 0
      %2759 = vmatprep.subr.bf16.mxu0 0
      %2760 = vmatpush1.bf16.msra.mxu0 0
      %2761 = vmatprep.mubr.bf16.mxu0 0
      %2762 = vmatmul.mubr.bf16.gmra.mrb[0].mxu0 %v2673
      %v2763 = vpop.f32.mrb[0].mxu0
      %v2764 = vadd.f32 0.0, %v2763
      %v2765 = vpop.f32.mrb[0].mxu0
      %v2766 = vpop.f32.mrb[0].mxu0
      %v2767 = vadd.f32 0.0, %v2766
      %v2768 = vpop.f32.mrb[0].mxu0
      %2769 = vmatprep.mubr.bf16.mxu0 0
      %2770 = vmatmul.mubr.bf16.gmra.mrb[0].mxu0 %v2676
      %v2771 = vpop.f32.mrb[0].mxu0
      %v2772 = vadd.f32 0.0, %v2771
      %v2773 = vpop.f32.mrb[0].mxu0
      %v2774 = vpop.f32.mrb[0].mxu0
      %v2775 = vadd.f32 0.0, %v2774
      %v2776 = vpop.f32.mrb[0].mxu0
      %2777 = vmatprep.mubr.bf16.mxu0 0
      %2778 = vmatmul.mubr.bf16.gmra.mrb[0].mxu0 %v2679
      %v2779 = vpop.f32.mrb[0].mxu0
      %v2780 = vadd.f32 0.0, %v2779
      %v2781 = vpop.f32.mrb[0].mxu0
      %v2782 = vpop.f32.mrb[0].mxu0
      %v2783 = vadd.f32 0.0, %v2782
      %v2784 = vpop.f32.mrb[0].mxu0
      %2785 = vmatprep.mubr.bf16.mxu0 0
      %2786 = vmatmul.mubr.bf16.gmra.mrb[0].mxu0 %v2682
      %v2787 = vpop.f32.mrb[0].mxu0
      %v2788 = vadd.f32 0.0, %v2787
      %v2789 = vpop.f32.mrb[0].mxu0
      %v2790 = vpop.f32.mrb[0].mxu0
      %v2791 = vadd.f32 0.0, %v2790
      %v2792 = vpop.f32.mrb[0].mxu0
      %2793 = vmatprep.mubr.bf16.mxu0 0
      %2794 = vmatmul.mubr.bf16.gmra.mrb[0].mxu0 %v2685
      %v2795 = vpop.f32.mrb[0].mxu0
      %v2796 = vadd.f32 0.0, %v2795
      %v2797 = vpop.f32.mrb[0].mxu0
      %v2798 = vpop.f32.mrb[0].mxu0
      %v2799 = vadd.f32 0.0, %v2798
      %v2800 = vpop.f32.mrb[0].mxu0
      %2801 = vmatprep.mubr.bf16.mxu0 0
      %2802 = vmatmul.mubr.bf16.gmra.mrb[0].mxu0 %v2688
      %v2803 = vpop.f32.mrb[0].mxu0
      %v2804 = vadd.f32 0.0, %v2803
      %v2805 = vpop.f32.mrb[0].mxu0
      %v2806 = vpop.f32.mrb[0].mxu0
      %v2807 = vadd.f32 0.0, %v2806
      %v2808 = vpop.f32.mrb[0].mxu0
      %2809 = vmatprep.mubr.bf16.mxu0 0
      %2810 = vmatmul.mubr.bf16.gmra.mrb[0].mxu0 %v2691
      %v2811 = vpop.f32.mrb[0].mxu0
      %v2812 = vadd.f32 0.0, %v2811
      %v2813 = vpop.f32.mrb[0].mxu0
      %v2814 = vpop.f32.mrb[0].mxu0
      %v2815 = vadd.f32 0.0, %v2814
      %v2816 = vpop.f32.mrb[0].mxu0
      %2817 = vmatprep.mubr.bf16.mxu0 0
      %2818 = vmatmul.mubr.bf16.gmra.mrb[0].mxu0 %v2694
      %v2819 = vpop.f32.mrb[0].mxu0
      %v2820 = vadd.f32 0.0, %v2819
      %v2821 = vpop.f32.mrb[0].mxu0
      %v2822 = vpop.f32.mrb[0].mxu0
      %v2823 = vadd.f32 0.0, %v2822
      %v2824 = vpop.f32.mrb[0].mxu0
      %2825 = vmatprep.mubr.bf16.mxu0 0
      %2826 = vmatmul.mubr.bf16.gmra.mrb[0].mxu0 %v2697
      %v2827 = vpop.f32.mrb[0].mxu0
      %v2828 = vadd.f32 0.0, %v2827
      %v2829 = vpop.f32.mrb[0].mxu0
      %v2830 = vpop.f32.mrb[0].mxu0
      %v2831 = vadd.f32 0.0, %v2830
      %v2832 = vpop.f32.mrb[0].mxu0
      %2833 = vmatprep.mubr.bf16.mxu0 0
      %2834 = vmatmul.mubr.bf16.gmra.mrb[0].mxu0 %v2700
      %v2835 = vpop.f32.mrb[0].mxu0
      %v2836 = vadd.f32 0.0, %v2835
      %v2837 = vpop.f32.mrb[0].mxu0
      %v2838 = vpop.f32.mrb[0].mxu0
      %v2839 = vadd.f32 0.0, %v2838
      %v2840 = vpop.f32.mrb[0].mxu0
      %2841 = vmatprep.mubr.bf16.mxu0 0
      %2842 = vmatmul.mubr.bf16.gmra.mrb[0].mxu0 %v2703
      %v2843 = vpop.f32.mrb[0].mxu0
      %v2844 = vadd.f32 0.0, %v2843
      %v2845 = vpop.f32.mrb[0].mxu0
      %v2846 = vpop.f32.mrb[0].mxu0
      %v2847 = vadd.f32 0.0, %v2846
      %v2848 = vpop.f32.mrb[0].mxu0
      %2849 = vmatprep.mubr.bf16.mxu0 0
      %2850 = vmatmul.mubr.bf16.gmra.mrb[0].mxu0 %v2706
      %v2851 = vpop.f32.mrb[0].mxu0
      %v2852 = vadd.f32 0.0, %v2851
      %v2853 = vpop.f32.mrb[0].mxu0
      %v2854 = vpop.f32.mrb[0].mxu0
      %v2855 = vadd.f32 0.0, %v2854
      %v2856 = vpop.f32.mrb[0].mxu0
      %2857 = vmatprep.mubr.bf16.mxu0 0
      %2858 = vmatmul.mubr.bf16.gmra.mrb[0].mxu0 %v2709
      %v2859 = vpop.f32.mrb[0].mxu0
      %v2860 = vadd.f32 0.0, %v2859
      %v2861 = vpop.f32.mrb[0].mxu0
      %v2862 = vpop.f32.mrb[0].mxu0
      %v2863 = vadd.f32 0.0, %v2862
      %v2864 = vpop.f32.mrb[0].mxu0
      %2865 = vmatprep.mubr.bf16.mxu0 0
      %2866 = vmatmul.mubr.bf16.gmra.mrb[0].mxu0 %v2712
      %v2867 = vpop.f32.mrb[0].mxu0
      %v2868 = vadd.f32 0.0, %v2867
      %v2869 = vpop.f32.mrb[0].mxu0
      %v2870 = vpop.f32.mrb[0].mxu0
      %v2871 = vadd.f32 0.0, %v2870
      %v2872 = vpop.f32.mrb[0].mxu0
      %2873 = vmatprep.mubr.bf16.mxu0 0
      %2874 = vmatmul.mubr.bf16.gmra.mrb[0].mxu0 %v2715
      %v2875 = vpop.f32.mrb[0].mxu0
      %v2876 = vadd.f32 0.0, %v2875
      %v2877 = vpop.f32.mrb[0].mxu0
      %v2878 = vpop.f32.mrb[0].mxu0
      %v2879 = vadd.f32 0.0, %v2878
      %v2880 = vpop.f32.mrb[0].mxu0
      %2881 = vmatprep.mubr.bf16.mxu0 0
      %2882 = vmatmul.mubr.bf16.gmra.mrb[0].mxu0 %v2718
      %v2883 = vpop.f32.mrb[0].mxu0
      %v2884 = vadd.f32 0.0, %v2883
      %v2885 = vpop.f32.mrb[0].mxu0
      %v2886 = vpop.f32.mrb[0].mxu0
      %v2887 = vadd.f32 0.0, %v2886
      %v2888 = vpop.f32.mrb[0].mxu0
      %2889 = vmatprep.mubr.bf16.mxu0 0
      %2890 = vmatmul.mubr.bf16.gmra.mrb[0].mxu0 %v2721
      %v2891 = vpop.f32.mrb[0].mxu0
      %v2892 = vadd.f32 0.0, %v2891
      %v2893 = vpop.f32.mrb[0].mxu0
      %v2894 = vpop.f32.mrb[0].mxu0
      %v2895 = vadd.f32 0.0, %v2894
      %v2896 = vpop.f32.mrb[0].mxu0
      %2897 = vmatprep.mubr.bf16.mxu0 0
      %2898 = vmatmul.mubr.bf16.gmra.mrb[0].mxu0 %v2724
      %v2899 = vpop.f32.mrb[0].mxu0
      %v2900 = vadd.f32 0.0, %v2899
      %v2901 = vpop.f32.mrb[0].mxu0
      %v2902 = vpop.f32.mrb[0].mxu0
      %v2903 = vadd.f32 0.0, %v2902
      %v2904 = vpop.f32.mrb[0].mxu0
      %2905 = vdwg.mxu0
      %v2906 = vadd.f32 %v2467, %v2764
      %v2907 = vadd.f32 %v2468, %v2767
      %v2908 = vadd.f32 %v2469, %v2772
      %v2909 = vadd.f32 %v2470, %v2775
      %v2910 = vadd.f32 %v2471, %v2780
      %v2911 = vadd.f32 %v2472, %v2783
      %v2912 = vadd.f32 %v2473, %v2788
      %v2913 = vadd.f32 %v2474, %v2791
      %v2914 = vadd.f32 %v2475, %v2796
      %v2915 = vadd.f32 %v2476, %v2799
      %v2916 = vadd.f32 %v2477, %v2804
      %v2917 = vadd.f32 %v2478, %v2807
      %v2918 = vadd.f32 %v2479, %v2812
      %v2919 = vadd.f32 %v2480, %v2815
      %v2920 = vadd.f32 %v2481, %v2820
      %v2921 = vadd.f32 %v2482, %v2823
      %v2922 = vadd.f32 %v2483, %v2828
      %v2923 = vadd.f32 %v2484, %v2831
      %v2924 = vadd.f32 %v2485, %v2836
      %v2925 = vadd.f32 %v2486, %v2839
      %v2926 = vadd.f32 %v2487, %v2844
      %v2927 = vadd.f32 %v2488, %v2847
      %v2928 = vadd.f32 %v2489, %v2852
      %v2929 = vadd.f32 %v2490, %v2855
      %v2930 = vadd.f32 %v2491, %v2860
      %v2931 = vadd.f32 %v2492, %v2863
      %v2932 = vadd.f32 %v2493, %v2868
      %v2933 = vadd.f32 %v2494, %v2871
      %v2934 = vadd.f32 %v2495, %v2876
      %v2935 = vadd.f32 %v2496, %v2879
      %v2936 = vadd.f32 %v2497, %v2884
      %v2937 = vadd.f32 %v2498, %v2887
      %v2938 = vadd.f32 %v2499, %v2892
      %v2939 = vadd.f32 %v2500, %v2895
      %v2940 = vadd.f32 %v2501, %v2900
      %v2941 = vadd.f32 %v2502, %v2903
      %v2942 = vld [vmem:[%s234 + $0xa0] sm:$0x7]
      %s2943 = scalar_lea.vmem %s238, 14
      %v2944 = vld [vmem:[%s2943] sm:$0x3]
      %v2946 = vunpack.c.l.b16 %v2942
      %v2947 = vpack.c.b16 %v2946, %v2946
      %vm2948 = vsmask.f32 5376
      %v2950 = vshrl.u32 %v2616, 16
      %v2952 = vrot.slane %v2950, 2
      %v2953 = vshll.u32 %v2616, 16
      %v2955 = vrot.slane %v2953, 3
      %v2956 = vor.u32 %v2952, %v2955
      %v2958 = vshrl.u32 %v2617, 16
      %v2960 = vrot.slane %v2958, 2
      %v2961 = vshll.u32 %v2617, 16
      %v2963 = vrot.slane %v2961, 3
      %v2964 = vor.u32 %v2960, %v2963
      %v2965 = vsel %vm2948, %v2956, %v2964
      %v2967 = vshrl.u32 %v2618, 16
      %v2969 = vrot.slane %v2967, 2
      %v2970 = vshll.u32 %v2618, 16
      %v2972 = vrot.slane %v2970, 3
      %v2973 = vor.u32 %v2969, %v2972
      %v2974 = vsel %vm2948, %v2964, %v2973
      %v2976 = vshrl.u32 %v2619, 16
      %v2978 = vrot.slane %v2976, 2
      %v2979 = vshll.u32 %v2619, 16
      %v2981 = vrot.slane %v2979, 3
      %v2982 = vor.u32 %v2978, %v2981
      %v2983 = vsel %vm2948, %v2973, %v2982
      %v2985 = vshrl.u32 %v2620, 16
      %v2987 = vrot.slane %v2985, 2
      %v2988 = vshll.u32 %v2620, 16
      %v2990 = vrot.slane %v2988, 3
      %v2991 = vor.u32 %v2987, %v2990
      %v2992 = vsel %vm2948, %v2982, %v2991
      %v2994 = vshrl.u32 %v2621, 16
      %v2996 = vrot.slane %v2994, 2
      %v2997 = vshll.u32 %v2621, 16
      %v2999 = vrot.slane %v2997, 3
      %v3000 = vor.u32 %v2996, %v2999
      %v3001 = vsel %vm2948, %v2991, %v3000
      %v3003 = vshrl.u32 %v2622, 16
      %v3005 = vrot.slane %v3003, 2
      %v3006 = vshll.u32 %v2622, 16
      %v3008 = vrot.slane %v3006, 3
      %v3009 = vor.u32 %v3005, %v3008
      %v3010 = vsel %vm2948, %v3000, %v3009
      %v3012 = vshrl.u32 %v2623, 16
      %v3014 = vrot.slane %v3012, 2
      %v3015 = vshll.u32 %v2623, 16
      %v3017 = vrot.slane %v3015, 3
      %v3018 = vor.u32 %v3014, %v3017
      %v3019 = vsel %vm2948, %v3009, %v3018
      %v3021 = vshrl.u32 %v2624, 16
      %v3023 = vrot.slane %v3021, 2
      %v3024 = vshll.u32 %v2624, 16
      %v3026 = vrot.slane %v3024, 3
      %v3027 = vor.u32 %v3023, %v3026
      %v3028 = vsel %vm2948, %v3018, %v3027
      %v3030 = vshrl.u32 %v2625, 16
      %v3032 = vrot.slane %v3030, 2
      %v3033 = vshll.u32 %v2625, 16
      %v3035 = vrot.slane %v3033, 3
      %v3036 = vor.u32 %v3032, %v3035
      %v3037 = vsel %vm2948, %v3027, %v3036
      %v3039 = vshrl.u32 %v2626, 16
      %v3041 = vrot.slane %v3039, 2
      %v3042 = vshll.u32 %v2626, 16
      %v3044 = vrot.slane %v3042, 3
      %v3045 = vor.u32 %v3041, %v3044
      %v3046 = vsel %vm2948, %v3036, %v3045
      %v3048 = vshrl.u32 %v2627, 16
      %v3050 = vrot.slane %v3048, 2
      %v3051 = vshll.u32 %v2627, 16
      %v3053 = vrot.slane %v3051, 3
      %v3054 = vor.u32 %v3050, %v3053
      %v3055 = vsel %vm2948, %v3045, %v3054
      %v3057 = vshrl.u32 %v2628, 16
      %v3059 = vrot.slane %v3057, 2
      %v3060 = vshll.u32 %v2628, 16
      %v3062 = vrot.slane %v3060, 3
      %v3063 = vor.u32 %v3059, %v3062
      %v3064 = vsel %vm2948, %v3054, %v3063
      %v3066 = vshrl.u32 %v2629, 16
      %v3068 = vrot.slane %v3066, 2
      %v3069 = vshll.u32 %v2629, 16
      %v3071 = vrot.slane %v3069, 3
      %v3072 = vor.u32 %v3068, %v3071
      %v3073 = vsel %vm2948, %v3063, %v3072
      %v3075 = vshrl.u32 %v2630, 16
      %v3077 = vrot.slane %v3075, 2
      %v3078 = vshll.u32 %v2630, 16
      %v3080 = vrot.slane %v3078, 3
      %v3081 = vor.u32 %v3077, %v3080
      %v3082 = vsel %vm2948, %v3072, %v3081
      %v3084 = vshrl.u32 %v2631, 16
      %v3086 = vrot.slane %v3084, 2
      %v3087 = vshll.u32 %v2631, 16
      %v3089 = vrot.slane %v3087, 3
      %v3090 = vor.u32 %v3086, %v3089
      %v3091 = vsel %vm2948, %v3081, %v3090
      %v3093 = vshrl.u32 %v2632, 16
      %v3095 = vrot.slane %v3093, 2
      %v3096 = vshll.u32 %v2632, 16
      %v3098 = vrot.slane %v3096, 3
      %v3099 = vor.u32 %v3095, %v3098
      %v3100 = vsel %vm2948, %v3090, %v3099
      %v3102 = vshrl.u32 %v2633, 16
      %v3104 = vrot.slane %v3102, 2
      %v3105 = vshll.u32 %v2633, 16
      %v3107 = vrot.slane %v3105, 3
      %v3108 = vor.u32 %v3104, %v3107
      %v3109 = vsel %vm2948, %v3099, %v3108
      %v3111 = vshrl.u32 %v2947, 16
      %v3113 = vrot.slane %v3111, 2
      %v3114 = vshll.u32 %v2947, 16
      %v3116 = vrot.slane %v3114, 3
      %v3117 = vor.u32 %v3113, %v3116
      %v3118 = vsel %vm2948, %v3108, %v3117
      %v3120 = vsel %vm537, %v2965, 0
      %v3123 = vsel %vm537, %v2974, 0
      %v3126 = vsel %vm537, %v2983, 0
      %v3129 = vsel %vm537, %v2992, 0
      %v3132 = vsel %vm537, %v3001, 0
      %v3135 = vsel %vm537, %v3010, 0
      %v3138 = vsel %vm537, %v3019, 0
      %v3141 = vsel %vm537, %v3028, 0
      %v3144 = vsel %vm537, %v3037, 0
      %v3147 = vsel %vm537, %v3046, 0
      %v3150 = vsel %vm537, %v3055, 0
      %v3153 = vsel %vm537, %v3064, 0
      %v3156 = vsel %vm537, %v3073, 0
      %v3159 = vsel %vm537, %v3082, 0
      %v3162 = vsel %vm537, %v3091, 0
      %v3165 = vsel %vm537, %v3100, 0
      %v3168 = vsel %vm537, %v3109, 0
      %v3171 = vsel %vm537, %v3118, 0
      %v3174 = vsel %vm592, %v2944, 0
      %3176 = vmatprep.subr.bf16.mxu0 0
      %3177 = vmatpush1.bf16.msra.mxu0 %v3174
      %3178 = vmatprep.subr.bf16.mxu0 0
      %3179 = vmatpush1.bf16.msra.mxu0 0
      %3180 = vmatprep.subr.bf16.mxu0 0
      %3181 = vmatpush1.bf16.msra.mxu0 0
      %3182 = vmatprep.subr.bf16.mxu0 0
      %3183 = vmatpush1.bf16.msra.mxu0 0
      %3184 = vmatprep.subr.bf16.mxu0 0
      %3185 = vmatpush1.bf16.msra.mxu0 0
      %3186 = vmatprep.subr.bf16.mxu0 0
      %3187 = vmatpush1.bf16.msra.mxu0 0
      %3188 = vmatprep.subr.bf16.mxu0 0
      %3189 = vmatpush1.bf16.msra.mxu0 0
      %3190 = vmatprep.subr.bf16.mxu0 0
      %3191 = vmatpush1.bf16.msra.mxu0 0
      %3192 = vmatprep.subr.bf16.mxu0 0
      %3193 = vmatpush1.bf16.msra.mxu0 0
      %3194 = vmatprep.subr.bf16.mxu0 0
      %3195 = vmatpush1.bf16.msra.mxu0 0
      %3196 = vmatprep.subr.bf16.mxu0 0
      %3197 = vmatpush1.bf16.msra.mxu0 0
      %3198 = vmatprep.subr.bf16.mxu0 0
      %3199 = vmatpush1.bf16.msra.mxu0 0
      %3200 = vmatprep.subr.bf16.mxu0 0
      %3201 = vmatpush1.bf16.msra.mxu0 0
      %3202 = vmatprep.subr.bf16.mxu0 0
      %3203 = vmatpush1.bf16.msra.mxu0 0
      %3204 = vmatprep.subr.bf16.mxu0 0
      %3205 = vmatpush1.bf16.msra.mxu0 0
      %3206 = vmatprep.subr.bf16.mxu0 0
      %3207 = vmatpush1.bf16.msra.mxu0 0
      %3208 = vmatprep.mubr.bf16.mxu0 0
      %3209 = vmatmul.mubr.bf16.gmra.mrb[0].mxu0 %v3120
      %v3210 = vpop.f32.mrb[0].mxu0
      %v3211 = vadd.f32 0.0, %v3210
      %v3212 = vpop.f32.mrb[0].mxu0
      %v3213 = vpop.f32.mrb[0].mxu0
      %v3214 = vadd.f32 0.0, %v3213
      %v3215 = vpop.f32.mrb[0].mxu0
      %3216 = vmatprep.mubr.bf16.mxu0 0
      %3217 = vmatmul.mubr.bf16.gmra.mrb[0].mxu0 %v3123
      %v3218 = vpop.f32.mrb[0].mxu0
      %v3219 = vadd.f32 0.0, %v3218
      %v3220 = vpop.f32.mrb[0].mxu0
      %v3221 = vpop.f32.mrb[0].mxu0
      %v3222 = vadd.f32 0.0, %v3221
      %v3223 = vpop.f32.mrb[0].mxu0
      %3224 = vmatprep.mubr.bf16.mxu0 0
      %3225 = vmatmul.mubr.bf16.gmra.mrb[0].mxu0 %v3126
      %v3226 = vpop.f32.mrb[0].mxu0
      %v3227 = vadd.f32 0.0, %v3226
      %v3228 = vpop.f32.mrb[0].mxu0
      %v3229 = vpop.f32.mrb[0].mxu0
      %v3230 = vadd.f32 0.0, %v3229
      %v3231 = vpop.f32.mrb[0].mxu0
      %3232 = vmatprep.mubr.bf16.mxu0 0
      %3233 = vmatmul.mubr.bf16.gmra.mrb[0].mxu0 %v3129
      %v3234 = vpop.f32.mrb[0].mxu0
      %v3235 = vadd.f32 0.0, %v3234
      %v3236 = vpop.f32.mrb[0].mxu0
      %v3237 = vpop.f32.mrb[0].mxu0
      %v3238 = vadd.f32 0.0, %v3237
      %v3239 = vpop.f32.mrb[0].mxu0
      %3240 = vmatprep.mubr.bf16.mxu0 0
      %3241 = vmatmul.mubr.bf16.gmra.mrb[0].mxu0 %v3132
      %v3242 = vpop.f32.mrb[0].mxu0
      %v3243 = vadd.f32 0.0, %v3242
      %v3244 = vpop.f32.mrb[0].mxu0
      %v3245 = vpop.f32.mrb[0].mxu0
      %v3246 = vadd.f32 0.0, %v3245
      %v3247 = vpop.f32.mrb[0].mxu0
      %3248 = vmatprep.mubr.bf16.mxu0 0
      %3249 = vmatmul.mubr.bf16.gmra.mrb[0].mxu0 %v3135
      %v3250 = vpop.f32.mrb[0].mxu0
      %v3251 = vadd.f32 0.0, %v3250
      %v3252 = vpop.f32.mrb[0].mxu0
      %v3253 = vpop.f32.mrb[0].mxu0
      %v3254 = vadd.f32 0.0, %v3253
      %v3255 = vpop.f32.mrb[0].mxu0
      %3256 = vmatprep.mubr.bf16.mxu0 0
      %3257 = vmatmul.mubr.bf16.gmra.mrb[0].mxu0 %v3138
      %v3258 = vpop.f32.mrb[0].mxu0
      %v3259 = vadd.f32 0.0, %v3258
      %v3260 = vpop.f32.mrb[0].mxu0
      %v3261 = vpop.f32.mrb[0].mxu0
      %v3262 = vadd.f32 0.0, %v3261
      %v3263 = vpop.f32.mrb[0].mxu0
      %3264 = vmatprep.mubr.bf16.mxu0 0
      %3265 = vmatmul.mubr.bf16.gmra.mrb[0].mxu0 %v3141
      %v3266 = vpop.f32.mrb[0].mxu0
      %v3267 = vadd.f32 0.0, %v3266
      %v3268 = vpop.f32.mrb[0].mxu0
      %v3269 = vpop.f32.mrb[0].mxu0
      %v3270 = vadd.f32 0.0, %v3269
      %v3271 = vpop.f32.mrb[0].mxu0
      %3272 = vmatprep.mubr.bf16.mxu0 0
      %3273 = vmatmul.mubr.bf16.gmra.mrb[0].mxu0 %v3144
      %v3274 = vpop.f32.mrb[0].mxu0
      %v3275 = vadd.f32 0.0, %v3274
      %v3276 = vpop.f32.mrb[0].mxu0
      %v3277 = vpop.f32.mrb[0].mxu0
      %v3278 = vadd.f32 0.0, %v3277
      %v3279 = vpop.f32.mrb[0].mxu0
      %3280 = vmatprep.mubr.bf16.mxu0 0
      %3281 = vmatmul.mubr.bf16.gmra.mrb[0].mxu0 %v3147
      %v3282 = vpop.f32.mrb[0].mxu0
      %v3283 = vadd.f32 0.0, %v3282
      %v3284 = vpop.f32.mrb[0].mxu0
      %v3285 = vpop.f32.mrb[0].mxu0
      %v3286 = vadd.f32 0.0, %v3285
      %v3287 = vpop.f32.mrb[0].mxu0
      %3288 = vmatprep.mubr.bf16.mxu0 0
      %3289 = vmatmul.mubr.bf16.gmra.mrb[0].mxu0 %v3150
      %v3290 = vpop.f32.mrb[0].mxu0
      %v3291 = vadd.f32 0.0, %v3290
      %v3292 = vpop.f32.mrb[0].mxu0
      %v3293 = vpop.f32.mrb[0].mxu0
      %v3294 = vadd.f32 0.0, %v3293
      %v3295 = vpop.f32.mrb[0].mxu0
      %3296 = vmatprep.mubr.bf16.mxu0 0
      %3297 = vmatmul.mubr.bf16.gmra.mrb[0].mxu0 %v3153
      %v3298 = vpop.f32.mrb[0].mxu0
      %v3299 = vadd.f32 0.0, %v3298
      %v3300 = vpop.f32.mrb[0].mxu0
      %v3301 = vpop.f32.mrb[0].mxu0
      %v3302 = vadd.f32 0.0, %v3301
      %v3303 = vpop.f32.mrb[0].mxu0
      %3304 = vmatprep.mubr.bf16.mxu0 0
      %3305 = vmatmul.mubr.bf16.gmra.mrb[0].mxu0 %v3156
      %v3306 = vpop.f32.mrb[0].mxu0
      %v3307 = vadd.f32 0.0, %v3306
      %v3308 = vpop.f32.mrb[0].mxu0
      %v3309 = vpop.f32.mrb[0].mxu0
      %v3310 = vadd.f32 0.0, %v3309
      %v3311 = vpop.f32.mrb[0].mxu0
      %3312 = vmatprep.mubr.bf16.mxu0 0
      %3313 = vmatmul.mubr.bf16.gmra.mrb[0].mxu0 %v3159
      %v3314 = vpop.f32.mrb[0].mxu0
      %v3315 = vadd.f32 0.0, %v3314
      %v3316 = vpop.f32.mrb[0].mxu0
      %v3317 = vpop.f32.mrb[0].mxu0
      %v3318 = vadd.f32 0.0, %v3317
      %v3319 = vpop.f32.mrb[0].mxu0
      %3320 = vmatprep.mubr.bf16.mxu0 0
      %3321 = vmatmul.mubr.bf16.gmra.mrb[0].mxu0 %v3162
      %v3322 = vpop.f32.mrb[0].mxu0
      %v3323 = vadd.f32 0.0, %v3322
      %v3324 = vpop.f32.mrb[0].mxu0
      %v3325 = vpop.f32.mrb[0].mxu0
      %v3326 = vadd.f32 0.0, %v3325
      %v3327 = vpop.f32.mrb[0].mxu0
      %3328 = vmatprep.mubr.bf16.mxu0 0
      %3329 = vmatmul.mubr.bf16.gmra.mrb[0].mxu0 %v3165
      %v3330 = vpop.f32.mrb[0].mxu0
      %v3331 = vadd.f32 0.0, %v3330
      %v3332 = vpop.f32.mrb[0].mxu0
      %v3333 = vpop.f32.mrb[0].mxu0
      %v3334 = vadd.f32 0.0, %v3333
      %v3335 = vpop.f32.mrb[0].mxu0
      %3336 = vmatprep.mubr.bf16.mxu0 0
      %3337 = vmatmul.mubr.bf16.gmra.mrb[0].mxu0 %v3168
      %v3338 = vpop.f32.mrb[0].mxu0
      %v3339 = vadd.f32 0.0, %v3338
      %v3340 = vpop.f32.mrb[0].mxu0
      %v3341 = vpop.f32.mrb[0].mxu0
      %v3342 = vadd.f32 0.0, %v3341
      %v3343 = vpop.f32.mrb[0].mxu0
      %3344 = vmatprep.mubr.bf16.mxu0 0
      %3345 = vmatmul.mubr.bf16.gmra.mrb[0].mxu0 %v3171
      %v3346 = vpop.f32.mrb[0].mxu0
      %v3347 = vadd.f32 0.0, %v3346
      %v3348 = vpop.f32.mrb[0].mxu0
      %v3349 = vpop.f32.mrb[0].mxu0
      %v3350 = vadd.f32 0.0, %v3349
      %v3351 = vpop.f32.mrb[0].mxu0
      %3352 = vdwg.mxu0
      %v3353 = vadd.f32 %v2906, %v3211
      %v3354 = vadd.f32 %v2907, %v3214
      %v3355 = vadd.f32 %v2908, %v3219
      %v3356 = vadd.f32 %v2909, %v3222
      %v3357 = vadd.f32 %v2910, %v3227
      %v3358 = vadd.f32 %v2911, %v3230
      %v3359 = vadd.f32 %v2912, %v3235
      %v3360 = vadd.f32 %v2913, %v3238
      %v3361 = vadd.f32 %v2914, %v3243
      %v3362 = vadd.f32 %v2915, %v3246
      %v3363 = vadd.f32 %v2916, %v3251
      %v3364 = vadd.f32 %v2917, %v3254
      %v3365 = vadd.f32 %v2918, %v3259
      %v3366 = vadd.f32 %v2919, %v3262
      %v3367 = vadd.f32 %v2920, %v3267
      %v3368 = vadd.f32 %v2921, %v3270
      %v3369 = vadd.f32 %v2922, %v3275
      %v3370 = vadd.f32 %v2923, %v3278
      %v3371 = vadd.f32 %v2924, %v3283
      %v3372 = vadd.f32 %v2925, %v3286
      %v3373 = vadd.f32 %v2926, %v3291
      %v3374 = vadd.f32 %v2927, %v3294
      %v3375 = vadd.f32 %v2928, %v3299
      %v3376 = vadd.f32 %v2929, %v3302
      %v3377 = vadd.f32 %v2930, %v3307
      %v3378 = vadd.f32 %v2931, %v3310
      %v3379 = vadd.f32 %v2932, %v3315
      %v3380 = vadd.f32 %v2933, %v3318
      %v3381 = vadd.f32 %v2934, %v3323
      %v3382 = vadd.f32 %v2935, %v3326
      %v3383 = vadd.f32 %v2936, %v3331
      %v3384 = vadd.f32 %v2937, %v3334
      %v3385 = vadd.f32 %v2938, %v3339
      %v3386 = vadd.f32 %v2939, %v3342
      %v3387 = vadd.f32 %v2940, %v3347
      %v3388 = vadd.f32 %v2941, %v3350
      %v3389 = vld [vmem:[%s234 + $0x10] sm:$0x8]
      %s3390 = scalar_lea.vmem %s238, 16
      %v3391 = vld [vmem:[%s3390] sm:$0x3]
      %v3393 = vunpack.c.l.b16 %v3389
      %v3394 = vpack.c.b16 %v2580, %v3393
      %vm3395 = vcmask 1044480
      %v3396 = vrot.slane %v3394, 3
      %v3397 = vrot.slane %v2617, 3
      %v3398 = vsel %vm3395, %v3396, %v3397
      %v3399 = vrot.slane %v2618, 3
      %v3400 = vsel %vm3395, %v3397, %v3399
      %v3401 = vrot.slane %v2619, 3
      %v3402 = vsel %vm3395, %v3399, %v3401
      %v3403 = vrot.slane %v2620, 3
      %v3404 = vsel %vm3395, %v3401, %v3403
      %v3405 = vrot.slane %v2621, 3
      %v3406 = vsel %vm3395, %v3403, %v3405
      %v3407 = vrot.slane %v2622, 3
      %v3408 = vsel %vm3395, %v3405, %v3407
      %v3409 = vrot.slane %v2623, 3
      %v3410 = vsel %vm3395, %v3407, %v3409
      %v3411 = vrot.slane %v2624, 3
      %v3412 = vsel %vm3395, %v3409, %v3411
      %v3413 = vrot.slane %v2625, 3
      %v3414 = vsel %vm3395, %v3411, %v3413
      %v3415 = vrot.slane %v2626, 3
      %v3416 = vsel %vm3395, %v3413, %v3415
      %v3417 = vrot.slane %v2627, 3
      %v3418 = vsel %vm3395, %v3415, %v3417
      %v3419 = vrot.slane %v2628, 3
      %v3420 = vsel %vm3395, %v3417, %v3419
      %v3421 = vrot.slane %v2629, 3
      %v3422 = vsel %vm3395, %v3419, %v3421
      %v3423 = vrot.slane %v2630, 3
      %v3424 = vsel %vm3395, %v3421, %v3423
      %v3425 = vrot.slane %v2631, 3
      %v3426 = vsel %vm3395, %v3423, %v3425
      %v3427 = vrot.slane %v2632, 3
      %v3428 = vsel %vm3395, %v3425, %v3427
      %v3429 = vrot.slane %v2633, 3
      %v3430 = vsel %vm3395, %v3427, %v3429
      %v3431 = vrot.slane %v2947, 3
      %v3432 = vsel %vm3395, %v3429, %v3431
      %v3434 = vsel %vm537, %v3398, 0
      %v3437 = vsel %vm537, %v3400, 0
      %v3440 = vsel %vm537, %v3402, 0
      %v3443 = vsel %vm537, %v3404, 0
      %v3446 = vsel %vm537, %v3406, 0
      %v3449 = vsel %vm537, %v3408, 0
      %v3452 = vsel %vm537, %v3410, 0
      %v3455 = vsel %vm537, %v3412, 0
      %v3458 = vsel %vm537, %v3414, 0
      %v3461 = vsel %vm537, %v3416, 0
      %v3464 = vsel %vm537, %v3418, 0
      %v3467 = vsel %vm537, %v3420, 0
      %v3470 = vsel %vm537, %v3422, 0
      %v3473 = vsel %vm537, %v3424, 0
      %v3476 = vsel %vm537, %v3426, 0
      %v3479 = vsel %vm537, %v3428, 0
      %v3482 = vsel %vm537, %v3430, 0
      %v3485 = vsel %vm537, %v3432, 0
      %v3488 = vsel %vm592, %v3391, 0
      %3490 = vmatprep.subr.bf16.mxu0 0
      %3491 = vmatpush1.bf16.msra.mxu0 %v3488
      %3492 = vmatprep.subr.bf16.mxu0 0
      %3493 = vmatpush1.bf16.msra.mxu0 0
      %3494 = vmatprep.subr.bf16.mxu0 0
      %3495 = vmatpush1.bf16.msra.mxu0 0
      %3496 = vmatprep.subr.bf16.mxu0 0
      %3497 = vmatpush1.bf16.msra.mxu0 0
      %3498 = vmatprep.subr.bf16.mxu0 0
      %3499 = vmatpush1.bf16.msra.mxu0 0
      %3500 = vmatprep.subr.bf16.mxu0 0
      %3501 = vmatpush1.bf16.msra.mxu0 0
      %3502 = vmatprep.subr.bf16.mxu0 0
      %3503 = vmatpush1.bf16.msra.mxu0 0
      %3504 = vmatprep.subr.bf16.mxu0 0
      %3505 = vmatpush1.bf16.msra.mxu0 0
      %3506 = vmatprep.subr.bf16.mxu0 0
      %3507 = vmatpush1.bf16.msra.mxu0 0
      %3508 = vmatprep.subr.bf16.mxu0 0
      %3509 = vmatpush1.bf16.msra.mxu0 0
      %3510 = vmatprep.subr.bf16.mxu0 0
      %3511 = vmatpush1.bf16.msra.mxu0 0
      %3512 = vmatprep.subr.bf16.mxu0 0
      %3513 = vmatpush1.bf16.msra.mxu0 0
      %3514 = vmatprep.subr.bf16.mxu0 0
      %3515 = vmatpush1.bf16.msra.mxu0 0
      %3516 = vmatprep.subr.bf16.mxu0 0
      %3517 = vmatpush1.bf16.msra.mxu0 0
      %3518 = vmatprep.subr.bf16.mxu0 0
      %3519 = vmatpush1.bf16.msra.mxu0 0
      %3520 = vmatprep.subr.bf16.mxu0 0
      %3521 = vmatpush1.bf16.msra.mxu0 0
      %3522 = vmatprep.mubr.bf16.mxu0 0
      %3523 = vmatmul.mubr.bf16.gmra.mrb[0].mxu0 %v3434
      %v3524 = vpop.f32.mrb[0].mxu0
      %v3525 = vadd.f32 0.0, %v3524
      %v3526 = vpop.f32.mrb[0].mxu0
      %v3527 = vpop.f32.mrb[0].mxu0
      %v3528 = vadd.f32 0.0, %v3527
      %v3529 = vpop.f32.mrb[0].mxu0
      %3530 = vmatprep.mubr.bf16.mxu0 0
      %3531 = vmatmul.mubr.bf16.gmra.mrb[0].mxu0 %v3437
      %v3532 = vpop.f32.mrb[0].mxu0
      %v3533 = vadd.f32 0.0, %v3532
      %v3534 = vpop.f32.mrb[0].mxu0
      %v3535 = vpop.f32.mrb[0].mxu0
      %v3536 = vadd.f32 0.0, %v3535
      %v3537 = vpop.f32.mrb[0].mxu0
      %3538 = vmatprep.mubr.bf16.mxu0 0
      %3539 = vmatmul.mubr.bf16.gmra.mrb[0].mxu0 %v3440
      %v3540 = vpop.f32.mrb[0].mxu0
      %v3541 = vadd.f32 0.0, %v3540
      %v3542 = vpop.f32.mrb[0].mxu0
      %v3543 = vpop.f32.mrb[0].mxu0
      %v3544 = vadd.f32 0.0, %v3543
      %v3545 = vpop.f32.mrb[0].mxu0
      %3546 = vmatprep.mubr.bf16.mxu0 0
      %3547 = vmatmul.mubr.bf16.gmra.mrb[0].mxu0 %v3443
      %v3548 = vpop.f32.mrb[0].mxu0
      %v3549 = vadd.f32 0.0, %v3548
      %v3550 = vpop.f32.mrb[0].mxu0
      %v3551 = vpop.f32.mrb[0].mxu0
      %v3552 = vadd.f32 0.0, %v3551
      %v3553 = vpop.f32.mrb[0].mxu0
      %3554 = vmatprep.mubr.bf16.mxu0 0
      %3555 = vmatmul.mubr.bf16.gmra.mrb[0].mxu0 %v3446
      %v3556 = vpop.f32.mrb[0].mxu0
      %v3557 = vadd.f32 0.0, %v3556
      %v3558 = vpop.f32.mrb[0].mxu0
      %v3559 = vpop.f32.mrb[0].mxu0
      %v3560 = vadd.f32 0.0, %v3559
      %v3561 = vpop.f32.mrb[0].mxu0
      %3562 = vmatprep.mubr.bf16.mxu0 0
      %3563 = vmatmul.mubr.bf16.gmra.mrb[0].mxu0 %v3449
      %v3564 = vpop.f32.mrb[0].mxu0
      %v3565 = vadd.f32 0.0, %v3564
      %v3566 = vpop.f32.mrb[0].mxu0
      %v3567 = vpop.f32.mrb[0].mxu0
      %v3568 = vadd.f32 0.0, %v3567
      %v3569 = vpop.f32.mrb[0].mxu0
      %3570 = vmatprep.mubr.bf16.mxu0 0
      %3571 = vmatmul.mubr.bf16.gmra.mrb[0].mxu0 %v3452
      %v3572 = vpop.f32.mrb[0].mxu0
      %v3573 = vadd.f32 0.0, %v3572
      %v3574 = vpop.f32.mrb[0].mxu0
      %v3575 = vpop.f32.mrb[0].mxu0
      %v3576 = vadd.f32 0.0, %v3575
      %v3577 = vpop.f32.mrb[0].mxu0
      %3578 = vmatprep.mubr.bf16.mxu0 0
      %3579 = vmatmul.mubr.bf16.gmra.mrb[0].mxu0 %v3455
      %v3580 = vpop.f32.mrb[0].mxu0
      %v3581 = vadd.f32 0.0, %v3580
      %v3582 = vpop.f32.mrb[0].mxu0
      %v3583 = vpop.f32.mrb[0].mxu0
      %v3584 = vadd.f32 0.0, %v3583
      %v3585 = vpop.f32.mrb[0].mxu0
      %3586 = vmatprep.mubr.bf16.mxu0 0
      %3587 = vmatmul.mubr.bf16.gmra.mrb[0].mxu0 %v3458
      %v3588 = vpop.f32.mrb[0].mxu0
      %v3589 = vadd.f32 0.0, %v3588
      %v3590 = vpop.f32.mrb[0].mxu0
      %v3591 = vpop.f32.mrb[0].mxu0
      %v3592 = vadd.f32 0.0, %v3591
      %v3593 = vpop.f32.mrb[0].mxu0
      %3594 = vmatprep.mubr.bf16.mxu0 0
      %3595 = vmatmul.mubr.bf16.gmra.mrb[0].mxu0 %v3461
      %v3596 = vpop.f32.mrb[0].mxu0
      %v3597 = vadd.f32 0.0, %v3596
      %v3598 = vpop.f32.mrb[0].mxu0
      %v3599 = vpop.f32.mrb[0].mxu0
      %v3600 = vadd.f32 0.0, %v3599
      %v3601 = vpop.f32.mrb[0].mxu0
      %3602 = vmatprep.mubr.bf16.mxu0 0
      %3603 = vmatmul.mubr.bf16.gmra.mrb[0].mxu0 %v3464
      %v3604 = vpop.f32.mrb[0].mxu0
      %v3605 = vadd.f32 0.0, %v3604
      %v3606 = vpop.f32.mrb[0].mxu0
      %v3607 = vpop.f32.mrb[0].mxu0
      %v3608 = vadd.f32 0.0, %v3607
      %v3609 = vpop.f32.mrb[0].mxu0
      %3610 = vmatprep.mubr.bf16.mxu0 0
      %3611 = vmatmul.mubr.bf16.gmra.mrb[0].mxu0 %v3467
      %v3612 = vpop.f32.mrb[0].mxu0
      %v3613 = vadd.f32 0.0, %v3612
      %v3614 = vpop.f32.mrb[0].mxu0
      %v3615 = vpop.f32.mrb[0].mxu0
      %v3616 = vadd.f32 0.0, %v3615
      %v3617 = vpop.f32.mrb[0].mxu0
      %3618 = vmatprep.mubr.bf16.mxu0 0
      %3619 = vmatmul.mubr.bf16.gmra.mrb[0].mxu0 %v3470
      %v3620 = vpop.f32.mrb[0].mxu0
      %v3621 = vadd.f32 0.0, %v3620
      %v3622 = vpop.f32.mrb[0].mxu0
      %v3623 = vpop.f32.mrb[0].mxu0
      %v3624 = vadd.f32 0.0, %v3623
      %v3625 = vpop.f32.mrb[0].mxu0
      %3626 = vmatprep.mubr.bf16.mxu0 0
      %3627 = vmatmul.mubr.bf16.gmra.mrb[0].mxu0 %v3473
      %v3628 = vpop.f32.mrb[0].mxu0
      %v3629 = vadd.f32 0.0, %v3628
      %v3630 = vpop.f32.mrb[0].mxu0
      %v3631 = vpop.f32.mrb[0].mxu0
      %v3632 = vadd.f32 0.0, %v3631
      %v3633 = vpop.f32.mrb[0].mxu0
      %3634 = vmatprep.mubr.bf16.mxu0 0
      %3635 = vmatmul.mubr.bf16.gmra.mrb[0].mxu0 %v3476
      %v3636 = vpop.f32.mrb[0].mxu0
      %v3637 = vadd.f32 0.0, %v3636
      %v3638 = vpop.f32.mrb[0].mxu0
      %v3639 = vpop.f32.mrb[0].mxu0
      %v3640 = vadd.f32 0.0, %v3639
      %v3641 = vpop.f32.mrb[0].mxu0
      %3642 = vmatprep.mubr.bf16.mxu0 0
      %3643 = vmatmul.mubr.bf16.gmra.mrb[0].mxu0 %v3479
      %v3644 = vpop.f32.mrb[0].mxu0
      %v3645 = vadd.f32 0.0, %v3644
      %v3646 = vpop.f32.mrb[0].mxu0
      %v3647 = vpop.f32.mrb[0].mxu0
      %v3648 = vadd.f32 0.0, %v3647
      %v3649 = vpop.f32.mrb[0].mxu0
      %3650 = vmatprep.mubr.bf16.mxu0 0
      %3651 = vmatmul.mubr.bf16.gmra.mrb[0].mxu0 %v3482
      %v3652 = vpop.f32.mrb[0].mxu0
      %v3653 = vadd.f32 0.0, %v3652
      %v3654 = vpop.f32.mrb[0].mxu0
      %v3655 = vpop.f32.mrb[0].mxu0
      %v3656 = vadd.f32 0.0, %v3655
      %v3657 = vpop.f32.mrb[0].mxu0
      %3658 = vmatprep.mubr.bf16.mxu0 0
      %3659 = vmatmul.mubr.bf16.gmra.mrb[0].mxu0 %v3485
      %v3660 = vpop.f32.mrb[0].mxu0
      %v3661 = vadd.f32 0.0, %v3660
      %v3662 = vpop.f32.mrb[0].mxu0
      %v3663 = vpop.f32.mrb[0].mxu0
      %v3664 = vadd.f32 0.0, %v3663
      %v3665 = vpop.f32.mrb[0].mxu0
      %3666 = vdwg.mxu0
      %v3667 = vadd.f32 %v3353, %v3525
      %v3668 = vadd.f32 %v3354, %v3528
      %v3669 = vadd.f32 %v3355, %v3533
      %v3670 = vadd.f32 %v3356, %v3536
      %v3671 = vadd.f32 %v3357, %v3541
      %v3672 = vadd.f32 %v3358, %v3544
      %v3673 = vadd.f32 %v3359, %v3549
      %v3674 = vadd.f32 %v3360, %v3552
      %v3675 = vadd.f32 %v3361, %v3557
      %v3676 = vadd.f32 %v3362, %v3560
      %v3677 = vadd.f32 %v3363, %v3565
      %v3678 = vadd.f32 %v3364, %v3568
      %v3679 = vadd.f32 %v3365, %v3573
      %v3680 = vadd.f32 %v3366, %v3576
      %v3681 = vadd.f32 %v3367, %v3581
      %v3682 = vadd.f32 %v3368, %v3584
      %v3683 = vadd.f32 %v3369, %v3589
      %v3684 = vadd.f32 %v3370, %v3592
      %v3685 = vadd.f32 %v3371, %v3597
      %v3686 = vadd.f32 %v3372, %v3600
      %v3687 = vadd.f32 %v3373, %v3605
      %v3688 = vadd.f32 %v3374, %v3608
      %v3689 = vadd.f32 %v3375, %v3613
      %v3690 = vadd.f32 %v3376, %v3616
      %v3691 = vadd.f32 %v3377, %v3621
      %v3692 = vadd.f32 %v3378, %v3624
      %v3693 = vadd.f32 %v3379, %v3629
      %v3694 = vadd.f32 %v3380, %v3632
      %v3695 = vadd.f32 %v3381, %v3637
      %v3696 = vadd.f32 %v3382, %v3640
      %v3697 = vadd.f32 %v3383, %v3645
      %v3698 = vadd.f32 %v3384, %v3648
      %v3699 = vadd.f32 %v3385, %v3653
      %v3700 = vadd.f32 %v3386, %v3656
      %v3701 = vadd.f32 %v3387, %v3661
      %v3702 = vadd.f32 %v3388, %v3664
      %v3703 = vpack.c.bf16 %v3668, %v3667
      %v3704 = vpack.c.bf16 %v3670, %v3669
      %v3705 = vpack.c.bf16 %v3672, %v3671
      %v3706 = vpack.c.bf16 %v3674, %v3673
      %v3707 = vpack.c.bf16 %v3676, %v3675
      %v3708 = vpack.c.bf16 %v3678, %v3677
      %v3709 = vpack.c.bf16 %v3680, %v3679
      %v3710 = vpack.c.bf16 %v3682, %v3681
      %v3711 = vpack.c.bf16 %v3684, %v3683
      %v3712 = vpack.c.bf16 %v3686, %v3685
      %v3713 = vpack.c.bf16 %v3688, %v3687
      %v3714 = vpack.c.bf16 %v3690, %v3689
      %v3715 = vpack.c.bf16 %v3692, %v3691
      %v3716 = vpack.c.bf16 %v3694, %v3693
      %v3717 = vpack.c.bf16 %v3696, %v3695
      %v3718 = vpack.c.bf16 %v3698, %v3697
      %v3719 = vpack.c.bf16 %v3700, %v3699
      %v3720 = vpack.c.bf16 %v3702, %v3701
      %v3739 = vunpack.c.l.b16 %v3703
      %v3740 = vunpack.c.h.b16 %v3703
      %v3741 = vunpack.c.l.b16 %v3704
      %v3742 = vunpack.c.h.b16 %v3704
      %v3743 = vunpack.c.l.b16 %v3705
      %v3744 = vunpack.c.h.b16 %v3705
      %v3745 = vunpack.c.l.b16 %v3706
      %v3746 = vunpack.c.h.b16 %v3706
      %v3747 = vunpack.c.l.b16 %v3707
      %v3748 = vunpack.c.h.b16 %v3707
      %v3749 = vunpack.c.l.b16 %v3708
      %v3750 = vunpack.c.h.b16 %v3708
      %v3751 = vunpack.c.l.b16 %v3709
      %v3752 = vunpack.c.h.b16 %v3709
      %v3753 = vunpack.c.l.b16 %v3710
      %v3754 = vunpack.c.h.b16 %v3710
      %v3755 = vunpack.c.l.b16 %v3711
      %v3756 = vunpack.c.h.b16 %v3711
      %v3757 = vunpack.c.l.b16 %v3712
      %v3758 = vunpack.c.h.b16 %v3712
      %v3759 = vunpack.c.l.b16 %v3713
      %v3760 = vunpack.c.h.b16 %v3713
      %v3761 = vunpack.c.l.b16 %v3714
      %v3762 = vunpack.c.h.b16 %v3714
      %v3763 = vunpack.c.l.b16 %v3715
      %v3764 = vunpack.c.h.b16 %v3715
      %v3765 = vunpack.c.l.b16 %v3716
      %v3766 = vunpack.c.h.b16 %v3716
      %v3767 = vunpack.c.l.b16 %v3717
      %v3768 = vunpack.c.h.b16 %v3717
      %v3769 = vunpack.c.l.b16 %v3718
      %v3770 = vunpack.c.h.b16 %v3718
      %v3771 = vunpack.c.l.b16 %v3719
      %v3772 = vunpack.c.h.b16 %v3719
      %v3773 = vunpack.c.l.b16 %v3720
      %v3774 = vunpack.c.h.b16 %v3720
      %v3775 = vpack.c.b16 %v3739, %v3739
      %v3776 = vpack.c.b16 %v3740, %v3740
      %v3777 = vpack.c.b16 %v3741, %v3741
      %v3778 = vpack.c.b16 %v3742, %v3742
      %v3779 = vpack.c.b16 %v3743, %v3743
      %v3780 = vpack.c.b16 %v3744, %v3744
      %v3781 = vpack.c.b16 %v3745, %v3745
      %v3782 = vpack.c.b16 %v3746, %v3746
      %v3783 = vpack.c.b16 %v3747, %v3747
      %v3784 = vpack.c.b16 %v3748, %v3748
      %v3785 = vpack.c.b16 %v3749, %v3749
      %v3786 = vpack.c.b16 %v3750, %v3750
      %v3787 = vpack.c.b16 %v3751, %v3751
      %v3788 = vpack.c.b16 %v3752, %v3752
      %v3789 = vpack.c.b16 %v3753, %v3753
      %v3790 = vpack.c.b16 %v3754, %v3754
      %v3791 = vpack.c.b16 %v3755, %v3755
      %v3792 = vpack.c.b16 %v3756, %v3756
      %v3793 = vpack.c.b16 %v3757, %v3757
      %v3794 = vpack.c.b16 %v3758, %v3758
      %v3795 = vpack.c.b16 %v3759, %v3759
      %v3796 = vpack.c.b16 %v3760, %v3760
      %v3797 = vpack.c.b16 %v3761, %v3761
      %v3798 = vpack.c.b16 %v3762, %v3762
      %v3799 = vpack.c.b16 %v3763, %v3763
      %v3800 = vpack.c.b16 %v3764, %v3764
      %v3801 = vpack.c.b16 %v3765, %v3765
      %v3802 = vpack.c.b16 %v3766, %v3766
      %v3803 = vpack.c.b16 %v3767, %v3767
      %v3804 = vpack.c.b16 %v3768, %v3768
      %v3805 = vpack.c.b16 %v3769, %v3769
      %v3806 = vpack.c.b16 %v3770, %v3770
      %v3807 = vpack.c.b16 %v3771, %v3771
      %v3808 = vpack.c.b16 %v3772, %v3772
      %v3809 = vpack.c.b16 %v3773, %v3773
      %v3810 = vpack.c.b16 %v3774, %v3774
      %3847 = vst [vmem:[%s246] sm:$0xf] %v3775
      %3848 = vst [vmem:[%s246 + $0x4] sm:$0xf] %v3776
      %3849 = vst [vmem:[%s246 + $0x8] sm:$0xf] %v3777
      %3850 = vst [vmem:[%s246 + $0xc] sm:$0xf] %v3778
      %3851 = vst [vmem:[%s246 + $0x10] sm:$0xf] %v3779
      %3852 = vst [vmem:[%s246 + $0x14] sm:$0xf] %v3780
      %3853 = vst [vmem:[%s246 + $0x18] sm:$0xf] %v3781
      %3854 = vst [vmem:[%s246 + $0x1c] sm:$0xf] %v3782
      %3855 = vst [vmem:[%s246 + $0x20] sm:$0xf] %v3783
      %3856 = vst [vmem:[%s246 + $0x24] sm:$0xf] %v3784
      %3857 = vst [vmem:[%s246 + $0x28] sm:$0xf] %v3785
      %3858 = vst [vmem:[%s246 + $0x2c] sm:$0xf] %v3786
      %3859 = vst [vmem:[%s246 + $0x30] sm:$0xf] %v3787
      %3860 = vst [vmem:[%s246 + $0x34] sm:$0xf] %v3788
      %3861 = vst [vmem:[%s246 + $0x38] sm:$0xf] %v3789
      %3862 = vst [vmem:[%s246 + $0x3c] sm:$0xf] %v3790
      %3863 = vst [vmem:[%s246 + $0x40] sm:$0xf] %v3791
      %3864 = vst [vmem:[%s246 + $0x44] sm:$0xf] %v3792
      %3865 = vst [vmem:[%s246 + $0x48] sm:$0xf] %v3793
      %3866 = vst [vmem:[%s246 + $0x4c] sm:$0xf] %v3794
      %3867 = vst [vmem:[%s246 + $0x50] sm:$0xf] %v3795
      %3868 = vst [vmem:[%s246 + $0x54] sm:$0xf] %v3796
      %3869 = vst [vmem:[%s246 + $0x58] sm:$0xf] %v3797
      %3870 = vst [vmem:[%s246 + $0x5c] sm:$0xf] %v3798
      %3871 = vst [vmem:[%s246 + $0x60] sm:$0xf] %v3799
      %3872 = vst [vmem:[%s246 + $0x64] sm:$0xf] %v3800
      %3873 = vst [vmem:[%s246 + $0x68] sm:$0xf] %v3801
      %3874 = vst [vmem:[%s246 + $0x6c] sm:$0xf] %v3802
      %3875 = vst [vmem:[%s246 + $0x70] sm:$0xf] %v3803
      %3876 = vst [vmem:[%s246 + $0x74] sm:$0xf] %v3804
      %3877 = vst [vmem:[%s246 + $0x78] sm:$0xf] %v3805
      %3878 = vst [vmem:[%s246 + $0x7c] sm:$0xf] %v3806
      %3879 = vst [vmem:[%s246 + $0x80] sm:$0xf] %v3807
      %3880 = vst [vmem:[%s246 + $0x84] sm:$0xf] %v3808
      %3881 = vst [vmem:[%s246 + $0x88] sm:$0xf] %v3809
      %3882 = vst [vmem:[%s246 + $0x8c] sm:$0xf] %v3810
      %v3883 = vld [vmem:[%s2] sm:$0xff]
      %v3884 = vld [vmem:[%s2 + $0x8] sm:$0xff]
      %v3885 = vld [vmem:[%s2 + $0x10] sm:$0xff]
      %v3886 = vld [vmem:[%s2 + $0x18] sm:$0xff]
      %v3887 = vld [vmem:[%s2 + $0x20] sm:$0xff]
      %v3888 = vld [vmem:[%s2 + $0x28] sm:$0xff]
      %v3889 = vld [vmem:[%s2 + $0x30] sm:$0xff]
      %v3890 = vld [vmem:[%s2 + $0x38] sm:$0xff]
      %v3891 = vld [vmem:[%s2 + $0x40] sm:$0xff]
      %v3892 = vld [vmem:[%s2 + $0x48] sm:$0xff]
      %v3893 = vld [vmem:[%s2 + $0x50] sm:$0xff]
      %v3894 = vld [vmem:[%s2 + $0x58] sm:$0xff]
      %v3895 = vld [vmem:[%s2 + $0x60] sm:$0xff]
      %v3896 = vld [vmem:[%s2 + $0x68] sm:$0xff]
      %v3897 = vld [vmem:[%s2 + $0x70] sm:$0xff]
      %v3898 = vld [vmem:[%s2 + $0x78] sm:$0xff]
      %v3899 = vld [vmem:[%s2 + $0x80] sm:$0xff]
      %v3900 = vld [vmem:[%s2 + $0x88] sm:$0xff]
      %v3901 = vld [vmem:[%s2 + $0x90] sm:$0xff]
      %v3902 = vld [vmem:[%s2 + $0x98] sm:$0xff]
      %v3903 = vld [vmem:[%s2 + $0xa0] sm:$0xff]
      %v3904 = vld [vmem:[%s2 + $0xa8] sm:$0xff]
      %v3905 = vld [vmem:[%s2 + $0xb0] sm:$0xff]
      %v3906 = vld [vmem:[%s2 + $0xb8] sm:$0xff]
      %v3907 = vld [vmem:[%s2 + $0xc0] sm:$0xff]
      %v3908 = vld [vmem:[%s2 + $0xc8] sm:$0xff]
      %v3909 = vld [vmem:[%s2 + $0xd0] sm:$0xff]
      %v3910 = vld [vmem:[%s2 + $0xd8] sm:$0xff]
      %v3911 = vld [vmem:[%s2 + $0xe0] sm:$0xff]
      %v3912 = vld [vmem:[%s2 + $0xe8] sm:$0xff]
      %v3913 = vld [vmem:[%s2 + $0xf0] sm:$0xff]
      %v3914 = vld [vmem:[%s2 + $0xf8] sm:$0xff]
      %v3915 = vld [vmem:[%s2 + $0x100] sm:$0xff]
      %v3916 = vld [vmem:[%s2 + $0x108] sm:$0xff]
      %v3917 = vld [vmem:[%s2 + $0x110] sm:$0xff]
      %v3918 = vld [vmem:[%s2 + $0x118] sm:$0xff]
      %3920 = vset.pattern.permute.xlu0 0
      %3921 = vperm.xlu0 %3920, %v3883
      %v3922 = vpop.permute.xlu0 %3921
      %3925 = vset.pattern.permute.xlu0 0
      %3926 = vperm.xlu0 %3925, %v3884
      %v3927 = vpop.permute.xlu0 %3926
      %3930 = vset.pattern.permute.xlu0 0
      %3931 = vperm.xlu0 %3930, %v3885
      %v3932 = vpop.permute.xlu0 %3931
      %3935 = vset.pattern.permute.xlu0 0
      %3936 = vperm.xlu0 %3935, %v3886
      %v3937 = vpop.permute.xlu0 %3936
      %3940 = vset.pattern.permute.xlu0 0
      %3941 = vperm.xlu0 %3940, %v3887
      %v3942 = vpop.permute.xlu0 %3941
      %3945 = vset.pattern.permute.xlu0 0
      %3946 = vperm.xlu0 %3945, %v3888
      %v3947 = vpop.permute.xlu0 %3946
      %3950 = vset.pattern.permute.xlu0 0
      %3951 = vperm.xlu0 %3950, %v3889
      %v3952 = vpop.permute.xlu0 %3951
      %3955 = vset.pattern.permute.xlu0 0
      %3956 = vperm.xlu0 %3955, %v3890
      %v3957 = vpop.permute.xlu0 %3956
      %3960 = vset.pattern.permute.xlu0 0
      %3961 = vperm.xlu0 %3960, %v3891
      %v3962 = vpop.permute.xlu0 %3961
      %3965 = vset.pattern.permute.xlu0 0
      %3966 = vperm.xlu0 %3965, %v3892
      %v3967 = vpop.permute.xlu0 %3966
      %3970 = vset.pattern.permute.xlu0 0
      %3971 = vperm.xlu0 %3970, %v3893
      %v3972 = vpop.permute.xlu0 %3971
      %3975 = vset.pattern.permute.xlu0 0
      %3976 = vperm.xlu0 %3975, %v3894
      %v3977 = vpop.permute.xlu0 %3976
      %3980 = vset.pattern.permute.xlu0 0
      %3981 = vperm.xlu0 %3980, %v3895
      %v3982 = vpop.permute.xlu0 %3981
      %3985 = vset.pattern.permute.xlu0 0
      %3986 = vperm.xlu0 %3985, %v3896
      %v3987 = vpop.permute.xlu0 %3986
      %3990 = vset.pattern.permute.xlu0 0
      %3991 = vperm.xlu0 %3990, %v3897
      %v3992 = vpop.permute.xlu0 %3991
      %3995 = vset.pattern.permute.xlu0 0
      %3996 = vperm.xlu0 %3995, %v3898
      %v3997 = vpop.permute.xlu0 %3996
      %4000 = vset.pattern.permute.xlu0 0
      %4001 = vperm.xlu0 %4000, %v3899
      %v4002 = vpop.permute.xlu0 %4001
      %4005 = vset.pattern.permute.xlu0 0
      %4006 = vperm.xlu0 %4005, %v3900
      %v4007 = vpop.permute.xlu0 %4006
      %4010 = vset.pattern.permute.xlu0 0
      %4011 = vperm.xlu0 %4010, %v3901
      %v4012 = vpop.permute.xlu0 %4011
      %4015 = vset.pattern.permute.xlu0 0
      %4016 = vperm.xlu0 %4015, %v3902
      %v4017 = vpop.permute.xlu0 %4016
      %4020 = vset.pattern.permute.xlu0 0
      %4021 = vperm.xlu0 %4020, %v3903
      %v4022 = vpop.permute.xlu0 %4021
      %4025 = vset.pattern.permute.xlu0 0
      %4026 = vperm.xlu0 %4025, %v3904
      %v4027 = vpop.permute.xlu0 %4026
      %4030 = vset.pattern.permute.xlu0 0
      %4031 = vperm.xlu0 %4030, %v3905
      %v4032 = vpop.permute.xlu0 %4031
      %4035 = vset.pattern.permute.xlu0 0
      %4036 = vperm.xlu0 %4035, %v3906
      %v4037 = vpop.permute.xlu0 %4036
      %4040 = vset.pattern.permute.xlu0 0
      %4041 = vperm.xlu0 %4040, %v3907
      %v4042 = vpop.permute.xlu0 %4041
      %4045 = vset.pattern.permute.xlu0 0
      %4046 = vperm.xlu0 %4045, %v3908
      %v4047 = vpop.permute.xlu0 %4046
      %4050 = vset.pattern.permute.xlu0 0
      %4051 = vperm.xlu0 %4050, %v3909
      %v4052 = vpop.permute.xlu0 %4051
      %4055 = vset.pattern.permute.xlu0 0
      %4056 = vperm.xlu0 %4055, %v3910
      %v4057 = vpop.permute.xlu0 %4056
      %4060 = vset.pattern.permute.xlu0 0
      %4061 = vperm.xlu0 %4060, %v3911
      %v4062 = vpop.permute.xlu0 %4061
      %4065 = vset.pattern.permute.xlu0 0
      %4066 = vperm.xlu0 %4065, %v3912
      %v4067 = vpop.permute.xlu0 %4066
      %4070 = vset.pattern.permute.xlu0 0
      %4071 = vperm.xlu0 %4070, %v3913
      %v4072 = vpop.permute.xlu0 %4071
      %4075 = vset.pattern.permute.xlu0 0
      %4076 = vperm.xlu0 %4075, %v3914
      %v4077 = vpop.permute.xlu0 %4076
      %4080 = vset.pattern.permute.xlu0 0
      %4081 = vperm.xlu0 %4080, %v3915
      %v4082 = vpop.permute.xlu0 %4081
      %4085 = vset.pattern.permute.xlu0 0
      %4086 = vperm.xlu0 %4085, %v3916
      %v4087 = vpop.permute.xlu0 %4086
      %4090 = vset.pattern.permute.xlu0 0
      %4091 = vperm.xlu0 %4090, %v3917
      %v4092 = vpop.permute.xlu0 %4091
      %4095 = vset.pattern.permute.xlu0 0
      %4096 = vperm.xlu0 %4095, %v3918
      %v4097 = vpop.permute.xlu0 %4096
      %v4099 = vmul.f32 %v3667, %v3922
      %v4100 = vmul.f32 %v3668, %v3927
      %v4101 = vmul.f32 %v3669, %v3932
      %v4102 = vmul.f32 %v3670, %v3937
      %v4103 = vmul.f32 %v3671, %v3942
      %v4104 = vmul.f32 %v3672, %v3947
      %v4105 = vmul.f32 %v3673, %v3952
      %v4106 = vmul.f32 %v3674, %v3957
      %v4107 = vmul.f32 %v3675, %v3962
      %v4108 = vmul.f32 %v3676, %v3967
      %v4109 = vmul.f32 %v3677, %v3972
      %v4110 = vmul.f32 %v3678, %v3977
      %v4111 = vmul.f32 %v3679, %v3982
      %v4112 = vmul.f32 %v3680, %v3987
      %v4113 = vmul.f32 %v3681, %v3992
      %v4114 = vmul.f32 %v3682, %v3997
      %v4115 = vmul.f32 %v3683, %v4002
      %v4116 = vmul.f32 %v3684, %v4007
      %v4117 = vmul.f32 %v3685, %v4012
      %v4118 = vmul.f32 %v3686, %v4017
      %v4119 = vmul.f32 %v3687, %v4022
      %v4120 = vmul.f32 %v3688, %v4027
      %v4121 = vmul.f32 %v3689, %v4032
      %v4122 = vmul.f32 %v3690, %v4037
      %v4123 = vmul.f32 %v3691, %v4042
      %v4124 = vmul.f32 %v3692, %v4047
      %v4125 = vmul.f32 %v3693, %v4052
      %v4126 = vmul.f32 %v3694, %v4057
      %v4127 = vmul.f32 %v3695, %v4062
      %v4128 = vmul.f32 %v3696, %v4067
      %v4129 = vmul.f32 %v3697, %v4072
      %v4130 = vmul.f32 %v3698, %v4077
      %v4131 = vmul.f32 %v3699, %v4082
      %v4132 = vmul.f32 %v3700, %v4087
      %v4133 = vmul.f32 %v3701, %v4092
      %v4134 = vmul.f32 %v3702, %v4097
      %v4135 = vadd.f32 %v4099, %v4100
      %v4136 = vadd.f32 %v4135, %v4101
      %v4137 = vadd.f32 %v4136, %v4102
      %v4138 = vadd.f32 %v4137, %v4103
      %v4139 = vadd.f32 %v4138, %v4104
      %v4140 = vadd.f32 %v4139, %v4105
      %v4141 = vadd.f32 %v4140, %v4106
      %v4142 = vadd.f32 %v4141, %v4107
      %v4143 = vadd.f32 %v4142, %v4108
      %v4144 = vadd.f32 %v4143, %v4109
      %v4145 = vadd.f32 %v4144, %v4110
      %v4146 = vadd.f32 %v4145, %v4111
      %v4147 = vadd.f32 %v4146, %v4112
      %v4148 = vadd.f32 %v4147, %v4113
      %v4149 = vadd.f32 %v4148, %v4114
      %v4150 = vadd.f32 %v4149, %v4115
      %v4151 = vadd.f32 %v4150, %v4116
      %v4152 = vadd.f32 %v4151, %v4117
      %v4153 = vadd.f32 %v4152, %v4118
      %v4154 = vadd.f32 %v4153, %v4119
      %v4155 = vadd.f32 %v4154, %v4120
      %v4156 = vadd.f32 %v4155, %v4121
      %v4157 = vadd.f32 %v4156, %v4122
      %v4158 = vadd.f32 %v4157, %v4123
      %v4159 = vadd.f32 %v4158, %v4124
      %v4160 = vadd.f32 %v4159, %v4125
      %v4161 = vadd.f32 %v4160, %v4126
      %v4162 = vadd.f32 %v4161, %v4127
      %v4163 = vadd.f32 %v4162, %v4128
      %v4164 = vadd.f32 %v4163, %v4129
      %v4165 = vadd.f32 %v4164, %v4130
      %v4166 = vadd.f32 %v4165, %v4131
      %v4167 = vadd.f32 %v4166, %v4132
      %v4168 = vadd.f32 %v4167, %v4133
      %v4169 = vadd.f32 %v4168, %v4134
      %v4170 = vrot.slane %v4169, 4
      %v4171 = vadd.f32 %v4169, %v4170
      %v4172 = vrot.slane %v4171, 2
      %v4173 = vadd.f32 %v4171, %v4172
      %v4174 = vrot.slane %v4173, 1
      %v4175 = vadd.f32 %v4173, %v4174
      %4176 = vst [vmem:[%s253] sm:$0x1] %v4175
      %v4177 = vmul.f32 %v4099, %v4099
      %v4178 = vmul.f32 %v4100, %v4100
      %v4179 = vmul.f32 %v4101, %v4101
      %v4180 = vmul.f32 %v4102, %v4102
      %v4181 = vmul.f32 %v4103, %v4103
      %v4182 = vmul.f32 %v4104, %v4104
      %v4183 = vmul.f32 %v4105, %v4105
      %v4184 = vmul.f32 %v4106, %v4106
      %v4185 = vmul.f32 %v4107, %v4107
      %v4186 = vmul.f32 %v4108, %v4108
      %v4187 = vmul.f32 %v4109, %v4109
      %v4188 = vmul.f32 %v4110, %v4110
      %v4189 = vmul.f32 %v4111, %v4111
      %v4190 = vmul.f32 %v4112, %v4112
      %v4191 = vmul.f32 %v4113, %v4113
      %v4192 = vmul.f32 %v4114, %v4114
      %v4193 = vmul.f32 %v4115, %v4115
      %v4194 = vmul.f32 %v4116, %v4116
      %v4195 = vmul.f32 %v4117, %v4117
      %v4196 = vmul.f32 %v4118, %v4118
      %v4197 = vmul.f32 %v4119, %v4119
      %v4198 = vmul.f32 %v4120, %v4120
      %v4199 = vmul.f32 %v4121, %v4121
      %v4200 = vmul.f32 %v4122, %v4122
      %v4201 = vmul.f32 %v4123, %v4123
      %v4202 = vmul.f32 %v4124, %v4124
      %v4203 = vmul.f32 %v4125, %v4125
      %v4204 = vmul.f32 %v4126, %v4126
      %v4205 = vmul.f32 %v4127, %v4127
      %v4206 = vmul.f32 %v4128, %v4128
      %v4207 = vmul.f32 %v4129, %v4129
      %v4208 = vmul.f32 %v4130, %v4130
      %v4209 = vmul.f32 %v4131, %v4131
      %v4210 = vmul.f32 %v4132, %v4132
      %v4211 = vmul.f32 %v4133, %v4133
      %v4212 = vmul.f32 %v4134, %v4134
      %v4213 = vadd.f32 %v4177, %v4178
      %v4214 = vadd.f32 %v4213, %v4179
      %v4215 = vadd.f32 %v4214, %v4180
      %v4216 = vadd.f32 %v4215, %v4181
      %v4217 = vadd.f32 %v4216, %v4182
      %v4218 = vadd.f32 %v4217, %v4183
      %v4219 = vadd.f32 %v4218, %v4184
      %v4220 = vadd.f32 %v4219, %v4185
      %v4221 = vadd.f32 %v4220, %v4186
      %v4222 = vadd.f32 %v4221, %v4187
      %v4223 = vadd.f32 %v4222, %v4188
      %v4224 = vadd.f32 %v4223, %v4189
      %v4225 = vadd.f32 %v4224, %v4190
      %v4226 = vadd.f32 %v4225, %v4191
      %v4227 = vadd.f32 %v4226, %v4192
      %v4228 = vadd.f32 %v4227, %v4193
      %v4229 = vadd.f32 %v4228, %v4194
      %v4230 = vadd.f32 %v4229, %v4195
      %v4231 = vadd.f32 %v4230, %v4196
      %v4232 = vadd.f32 %v4231, %v4197
      %v4233 = vadd.f32 %v4232, %v4198
      %v4234 = vadd.f32 %v4233, %v4199
      %v4235 = vadd.f32 %v4234, %v4200
      %v4236 = vadd.f32 %v4235, %v4201
      %v4237 = vadd.f32 %v4236, %v4202
      %v4238 = vadd.f32 %v4237, %v4203
      %v4239 = vadd.f32 %v4238, %v4204
      %v4240 = vadd.f32 %v4239, %v4205
      %v4241 = vadd.f32 %v4240, %v4206
      %v4242 = vadd.f32 %v4241, %v4207
      %v4243 = vadd.f32 %v4242, %v4208
      %v4244 = vadd.f32 %v4243, %v4209
      %v4245 = vadd.f32 %v4244, %v4210
      %v4246 = vadd.f32 %v4245, %v4211
      %v4247 = vadd.f32 %v4246, %v4212
      %v4248 = vrot.slane %v4247, 4
      %v4249 = vadd.f32 %v4247, %v4248
      %v4250 = vrot.slane %v4249, 2
      %v4251 = vadd.f32 %v4249, %v4250
      %v4252 = vrot.slane %v4251, 1
      %v4253 = vadd.f32 %v4251, %v4252
      %4254 = vst [vmem:[%s253 + $0x1] sm:$0x1] %v4253
      %4255 = vst [vmem:[%s253 + $0x2] sm:$0x3f] 0.0
      %p4256 = scmp.lt.s32.totalorder %s20, 1
      %s4257 = scalar_select %p4256, %s20, 1
      %p4258 = scmp.lt.s32.totalorder %s21, 0
      %s4259 = scalar_select %p4258, %s21, 0
      %s4260 = smul.addr %s4257, 36
      %s4261 = sadd.s32 %s4259, %s4260
      %s4262 = smul.addr %s4261, 4
      %s4263 = scalar_lea.vmem %s3, %s4262
      %p4264 = scmp.lt.s32.totalorder %s20, 1
      %s4265 = scalar_select %p4264, %s20, 1
      %p4266 = scmp.lt.s32.totalorder %s21, 0
      %s4267 = scalar_select %p4266, %s21, 0
      %s4268 = sadd.s32 %s4267, %s4265
      %s4269 = smul.addr %s4268, 8
      %s4270 = scalar_lea.vmem %s4, %s4269
      // Predicated region
      $region33: #{conv2d_bn.1} parent=31 // pred_check
        %p4271 = pneg %p121
      $region34: #{conv2d_bn.1} parent=31 // pred_check_branch
        %4273 = sbr.rel (%p4271) target = $region36
      $region35: #{conv2d_bn.1} parent=31 // pred_region
        _
      $region36: #{conv2d_bn.1} parent=31 // pred_fallthru
        _
      // Predicated region
      $region37: #{conv2d_bn.1} parent=31 // pred_check
        %p4274 = pneg %p149
      $region38: #{conv2d_bn.1} parent=31 // pred_check_branch
        %4276 = sbr.rel (%p4274) target = $region40
      $region39: #{conv2d_bn.1} parent=31 // pred_region
        _
      $region40: #{conv2d_bn.1} parent=31 // pred_fallthru
        _
    $region32: #{conv2d_bn.1} parent=5 // pred_fallthru
      _
    %p4277 = scmp.le.s32.totalorder 2, %s11
    // Predicated region
    $region41: #{conv2d_bn.1} parent=5 // pred_check
      %p4278 = pneg %p4277
    $region42: #{conv2d_bn.1} parent=5 // pred_check_branch
      %4280 = sbr.rel (%p4278) target = $region44
    $region43: #{conv2d_bn.1} parent=5 // pred_region
      %s4281 = ssub.s32 %s11, 2
      // Predicated region
      $region45: #{conv2d_bn.1} parent=43 // pred_check
        %p4282 = pneg %p127
      $region46: #{conv2d_bn.1} parent=43 // pred_check_branch
        %4284 = sbr.rel (%p4282) target = $region48
      $region47: #{conv2d_bn.1} parent=43 // pred_region
        %p4285 = scmp.lt.s32.totalorder %s22, 1
        %s4286 = scalar_select %p4285, %s22, 1
        %p4287 = scmp.lt.s32.totalorder %s23, 0
        %s4288 = scalar_select %p4287, %s23, 0
        %s4289 = smul.addr %s4286, 36
        %s4290 = sadd.s32 %s4288, %s4289
        %s4291 = smul.addr %s4290, 4
        %s4292 = scalar_lea.vmem %s3, %s4291
      $region48: #{conv2d_bn.1} parent=43 // pred_fallthru
        _
      // Predicated region
      $region49: #{conv2d_bn.1} parent=43 // pred_check
        %p4293 = pneg %p155
      $region50: #{conv2d_bn.1} parent=43 // pred_check_branch
        %4295 = sbr.rel (%p4293) target = $region52
      $region51: #{conv2d_bn.1} parent=43 // pred_region
        %p4296 = scmp.lt.s32.totalorder %s22, 1
        %s4297 = scalar_select %p4296, %s22, 1
        %p4298 = scmp.lt.s32.totalorder %s23, 0
        %s4299 = scalar_select %p4298, %s23, 0
        %s4300 = sadd.s32 %s4299, %s4297
        %s4301 = smul.addr %s4300, 8
        %s4302 = scalar_lea.vmem %s4, %s4301
      $region52: #{conv2d_bn.1} parent=43 // pred_fallthru
        _
    $region44: #{conv2d_bn.1} parent=5 // pred_fallthru
      _
  $region6: #{conv2d_bn.1} parent=0 // loop_footer
    %s15 = sadd.s32 1, %s11
  $region7: #{conv2d_bn.1} parent=0 // loop_footer_branch
    %10 = sbr.rel target = $region3
  $region8: #{conv2d_bn.1} parent=0 // loop_exit
    _

</llo_original>
